<compile_context>
chip_gen: v7x
topology: tpu7x:2x2x1
jax: 0.10.0
libtpu: 0.0.40
codegen_flags: <defaults>
</compile_context>

<pallas_src>
import functools

import jax
import jax.numpy as jnp
from jax import lax
from jax.experimental import pallas as pl
from jax.experimental.pallas import tpu as pltpu


def _fused_double_conv_kernel(x2_ref, x1u_ref, w1_ref, s1_ref, b1_ref,
                              w2_ref, s2_ref, b2_ref, o_ref,
                              xpad_ref, mpad_ref, lhs1_ref, lhs2_ref,
                              *, d1, d2):
    # x2_ref:   (1, H, W, C2)        skip connection (NHWC)
    # x1u_ref:  (1, H, W, C1)        upsampled x1 (NHWC)
    # w1_ref:   (9*Cin, Cout)        conv1 weights, tap-major (ky, kx, cin)
    # s1_ref, b1_ref: (1, Cout)      folded BN scale / (conv-bias + BN shift)
    # w2_ref:   (9*Cout, Cout)       conv2 weights
    # o_ref:    (1, Cout, H*W)       lane-dense output == NCHW flattened
    # xpad_ref: (H+2*d1, W+2*d1, Cin)   VMEM: padded concat input for conv1
    # mpad_ref: (H+2*d2, W+2*d2, Cout)  VMEM: padded conv1 output for conv2
    # lhs1_ref: (H*W, 9*Cin)         VMEM: im2col LHS for conv1
    # lhs2_ref: (H*W, 9*Cout)        VMEM: im2col LHS for conv2
    H, W = x2_ref.shape[1], x2_ref.shape[2]
    C2 = x2_ref.shape[3]
    C1 = x1u_ref.shape[3]
    Cin = C1 + C2
    Cout = o_ref.shape[1]

    # ---- stage 0: channel concat + zero halo (dilation d1) in VMEM ----
    xpad_ref[...] = jnp.zeros(xpad_ref.shape, xpad_ref.dtype)
    xpad_ref[d1:d1 + H, d1:d1 + W, 0:C2] = x2_ref[0]       # torch.cat: x2 first
    xpad_ref[d1:d1 + H, d1:d1 + W, C2:Cin] = x1u_ref[0]    # then upsampled x1

    # ---- stage 1: conv(3x3, dil=d1) + BN + ReLU as one im2col matmul ----
    t = 0
    for ky in range(3):
        for kx in range(3):
            win = xpad_ref[ky * d1:ky * d1 + H, kx * d1:kx * d1 + W, :]
            lhs1_ref[:, t * Cin:(t + 1) * Cin] = win.reshape(H * W, Cin)
            t += 1
    acc1 = jnp.dot(lhs1_ref[...], w1_ref[...],
                   preferred_element_type=jnp.float32)      # (H*W, Cout)
    y1 = jnp.maximum(acc1 * s1_ref[...] + b1_ref[...], 0.0)

    # ---- stage 2: conv(3x3, dil=d2) + BN + ReLU, input kept in VMEM ----
    mpad_ref[...] = jnp.zeros(mpad_ref.shape, mpad_ref.dtype)
    mpad_ref[d2:d2 + H, d2:d2 + W, :] = y1.reshape(H, W, Cout)
    t = 0
    for ky in range(3):
        for kx in range(3):
            win = mpad_ref[ky * d2:ky * d2 + H, kx * d2:kx * d2 + W, :]
            lhs2_ref[:, t * Cout:(t + 1) * Cout] = win.reshape(H * W, Cout)
            t += 1
    acc2 = jnp.dot(lhs2_ref[...], w2_ref[...],
                   preferred_element_type=jnp.float32)      # (H*W, Cout)
    y2 = jnp.maximum(acc2 * s2_ref[...] + b2_ref[...], 0.0)

    # ---- lane-dense store: (Cout, H*W) == NCHW-flattened output ----
    o_ref[0] = jnp.transpose(y2).astype(o_ref.dtype)


def fused_double_conv(x2_nhwc, x1u_nhwc, w1, s1, b1, w2, s2, b2):
    """Fused: concat(x2, x1u) -> conv(d=2)+BN+ReLU -> conv(d=3)+BN+ReLU.

    Returns the result NCHW-flattened as (B, Cout, H*W)."""
    B, H, W, C2 = x2_nhwc.shape
    C1 = x1u_nhwc.shape[3]
    Cin = C1 + C2
    Cout = w1.shape[-1]
    d1, d2 = 2, 3

    w1f = w1.reshape(9 * Cin, Cout)      # (3,3,Cin,Cout) -> tap-major rows
    w2f = w2.reshape(9 * Cout, Cout)

    kernel = functools.partial(_fused_double_conv_kernel, d1=d1, d2=d2)
    return pl.pallas_call(
        kernel,
        out_shape=jax.ShapeDtypeStruct((B, Cout, H * W), x2_nhwc.dtype),
        grid_spec=pltpu.PrefetchScalarGridSpec(
            num_scalar_prefetch=0,
            grid=(B,),
            in_specs=[
                pl.BlockSpec((1, H, W, C2), lambda b: (b, 0, 0, 0)),
                pl.BlockSpec((1, H, W, C1), lambda b: (b, 0, 0, 0)),
                pl.BlockSpec((9 * Cin, Cout), lambda b: (0, 0)),
                pl.BlockSpec((1, Cout), lambda b: (0, 0)),
                pl.BlockSpec((1, Cout), lambda b: (0, 0)),
                pl.BlockSpec((9 * Cout, Cout), lambda b: (0, 0)),
                pl.BlockSpec((1, Cout), lambda b: (0, 0)),
                pl.BlockSpec((1, Cout), lambda b: (0, 0)),
            ],
            out_specs=pl.BlockSpec((1, Cout, H * W), lambda b: (b, 0, 0)),
            scratch_shapes=[
                pltpu.VMEM((H + 2 * d1, W + 2 * d1, Cin), jnp.float32),
                pltpu.VMEM((H + 2 * d2, W + 2 * d2, Cout), jnp.float32),
                pltpu.VMEM((H * W, 9 * Cin), jnp.float32),
                pltpu.VMEM((H * W, 9 * Cout), jnp.float32),
            ],
        ),
        compiler_params=pltpu.CompilerParams(
            dimension_semantics=("parallel",)),
    )(x2_nhwc, x1u_nhwc, w1f,
      s1.reshape(1, Cout), b1.reshape(1, Cout),
      w2f, s2.reshape(1, Cout), b2.reshape(1, Cout))


# -------------------------- parameter construction --------------------------

def _fold_bn(conv_bias, gamma, beta, mean, var, eps=1e-5):
    scale = gamma / jnp.sqrt(var + eps)
    bias = scale * (conv_bias - mean) + beta
    return scale.astype(jnp.float32), bias.astype(jnp.float32)


def init_up_params(key, in_ch, out_ch):
    ks = jax.random.split(key, 12)

    def conv_w(k, cin, cout):
        bound = 1.0 / jnp.sqrt(cin * 9.0)
        return jax.random.uniform(k, (3, 3, cin, cout), jnp.float32, -bound, bound)

    def conv_b(k, cin, cout):
        bound = 1.0 / jnp.sqrt(cin * 9.0)
        return jax.random.uniform(k, (cout,), jnp.float32, -bound, bound)

    # conv1: in_ch -> out_ch, dilation 2 ; conv2: out_ch -> out_ch, dilation 3
    w1 = conv_w(ks[0], in_ch, out_ch)
    b1 = conv_b(ks[1], in_ch, out_ch)
    g1 = jax.random.uniform(ks[2], (out_ch,), jnp.float32, 0.5, 1.5)
    be1 = jax.random.uniform(ks[3], (out_ch,), jnp.float32, -0.1, 0.1)
    m1 = 0.1 * jax.random.normal(ks[4], (out_ch,), jnp.float32)
    v1 = jax.random.uniform(ks[5], (out_ch,), jnp.float32, 0.5, 1.5)

    w2 = conv_w(ks[6], out_ch, out_ch)
    b2 = conv_b(ks[7], out_ch, out_ch)
    g2 = jax.random.uniform(ks[8], (out_ch,), jnp.float32, 0.5, 1.5)
    be2 = jax.random.uniform(ks[9], (out_ch,), jnp.float32, -0.1, 0.1)
    m2 = 0.1 * jax.random.normal(ks[10], (out_ch,), jnp.float32)
    v2 = jax.random.uniform(ks[11], (out_ch,), jnp.float32, 0.5, 1.5)

    s1, bb1 = _fold_bn(b1, g1, be1, m1, v1)
    s2, bb2 = _fold_bn(b2, g2, be2, m2, v2)
    return {"w1": w1, "scale1": s1, "bias1": bb1,
            "w2": w2, "scale2": s2, "bias2": bb2}


# ------------------------------- forward pass --------------------------------

def up_forward(params, x1_nchw, x2_nchw):
    """Mirrors `up.forward(x1, x2)` (inputs/outputs NCHW, BN in eval mode)."""
    B, C2, H2, W2 = x2_nchw.shape
    Cout = params["w1"].shape[-1]

    # nn.Upsample(scale_factor=2, mode='nearest'); XLA fuses this with the
    # boundary NCHW->NHWC transpose below (remaining wrapper glue).
    x1u = jnp.repeat(jnp.repeat(x1_nchw, 2, axis=2), 2, axis=3)

    diffX = x1u.shape[2] - x2_nchw.shape[2]
    diffY = x2_nchw.shape[3] - x1u.shape[3]
    if diffX != 0 or diffY != 0:
        # TODO(synk): negative diffX/diffY (F.pad cropping) not handled.
        x1u = jnp.pad(x1u, ((0, 0), (0, 0),
                            (diffX // 2, diffX - diffX // 2),
                            (diffY // 2, diffY - diffY // 2)))

    # NCHW -> NHWC once at the boundary; concat / halo-pad / both convs run
    # inside a single fused Pallas kernel.
    x1u_nhwc = jnp.transpose(x1u, (0, 2, 3, 1))
    x2_nhwc = jnp.transpose(x2_nchw, (0, 2, 3, 1))

    out_flat = fused_double_conv(
        x2_nhwc, x1u_nhwc,
        params["w1"], params["scale1"], params["bias1"],
        params["w2"], params["scale2"], params["bias2"])

    # Kernel output is already channel-major: (B, Cout, H*W) -> NCHW for free.
    return out_flat.reshape(B, Cout, H2, W2)


# Pure-JAX reference (lax conv) used only to sanity-check kernel semantics.
def _ref_up_forward(params, x1_nchw, x2_nchw):
    x1u = jnp.repeat(jnp.repeat(x1_nchw, 2, axis=2), 2, axis=3)
    x = jnp.concatenate([x2_nchw, x1u], axis=1)
    x = jnp.transpose(x, (0, 2, 3, 1))
    for (w, s, b, d) in ((params["w1"], params["scale1"], params["bias1"], 2),
                         (params["w2"], params["scale2"], params["bias2"], 3)):
        x = lax.conv_general_dilated(
            x, w, window_strides=(1, 1), padding=[(d, d), (d, d)],
            rhs_dilation=(d, d), dimension_numbers=("NHWC", "HWIO", "NHWC"))
        x = jnp.maximum(x * s + b, 0.0)
    return jnp.transpose(x, (0, 3, 1, 2))


if __name__ == "__main__":
    key = jax.random.PRNGKey(0)
    k_p, k_x1, k_x2 = jax.random.split(key, 3)

    B = 2
    C1, C2 = 4, 4            # channels of x1 and x2; in_ch = C1 + C2
    in_ch, out_ch = C1 + C2, 8
    H1, W1 = 8, 8            # x1 spatial; x2 spatial = 2x => sizes match after upsample

    params = init_up_params(k_p, in_ch, out_ch)
    x1 = jax.random.normal(k_x1, (B, C1, H1, W1), jnp.float32)          # NCHW
    x2 = jax.random.normal(k_x2, (B, C2, 2 * H1, 2 * W1), jnp.float32)  # NCHW

    fwd = jax.jit(up_forward)
    out = jax.block_until_ready(fwd(params, x1, x2))
    assert out.shape == (B, out_ch, 2 * H1, 2 * W1), out.shape

    ref = _ref_up_forward(params, x1, x2)
    max_err = float(jnp.max(jnp.abs(out - ref)))
    assert jnp.allclose(out, ref, atol=1e-4, rtol=1e-4), max_err

    print("KERNEL_OK")
</pallas_src>

<mosaic_0001>
module attributes {stable_mosaic.version = 11 : i64} {
  func.func @_fused_double_conv_kernel(%arg0: i32, %arg1: memref<1x16x16x4xf32, #tpu.memory_space<vmem>>, %arg2: memref<1x16x16x4xf32, #tpu.memory_space<vmem>>, %arg3: memref<72x8xf32, #tpu.memory_space<vmem>>, %arg4: memref<1x8xf32, #tpu.memory_space<vmem>>, %arg5: memref<1x8xf32, #tpu.memory_space<vmem>>, %arg6: memref<72x8xf32, #tpu.memory_space<vmem>>, %arg7: memref<1x8xf32, #tpu.memory_space<vmem>>, %arg8: memref<1x8xf32, #tpu.memory_space<vmem>>, %arg9: memref<1x8x256xf32, #tpu.memory_space<vmem>>, %arg10: memref<20x20x8xf32, #tpu.memory_space<vmem>>, %arg11: memref<22x22x8xf32, #tpu.memory_space<vmem>>, %arg12: memref<256x72xf32, #tpu.memory_space<vmem>>, %arg13: memref<256x72xf32, #tpu.memory_space<vmem>>) attributes {dimension_semantics = [#tpu.dimension_semantics<parallel>], iteration_bounds = array<i64: 2>, scalar_prefetch = 0 : i64, scratch_operands = 4 : i64, tpu.core_type = #tpu.core_type<tc>, window_params = [{transform_indices = @transform_0, window_bounds = array<i64: 1, 16, 16, 4>}, {transform_indices = @transform_1, window_bounds = array<i64: 1, 16, 16, 4>}, {pipeline_mode = #tpu.pipeline_mode<synchronous>, transform_indices = @transform_2, window_bounds = array<i64: 72, 8>}, {pipeline_mode = #tpu.pipeline_mode<synchronous>, transform_indices = @transform_3, window_bounds = array<i64: 1, 8>}, {pipeline_mode = #tpu.pipeline_mode<synchronous>, transform_indices = @transform_4, window_bounds = array<i64: 1, 8>}, {pipeline_mode = #tpu.pipeline_mode<synchronous>, transform_indices = @transform_5, window_bounds = array<i64: 72, 8>}, {pipeline_mode = #tpu.pipeline_mode<synchronous>, transform_indices = @transform_6, window_bounds = array<i64: 1, 8>}, {pipeline_mode = #tpu.pipeline_mode<synchronous>, transform_indices = @transform_7, window_bounds = array<i64: 1, 8>}, {transform_indices = @transform_8, window_bounds = array<i64: 1, 8, 256>}]} {
    %cst = arith.constant 0.000000e+00 : f32
    %0 = vector.broadcast %cst : f32 to vector<20x20x8xf32>
    %c0 = arith.constant 0 : index
    %c0_0 = arith.constant 0 : index
    %c0_1 = arith.constant 0 : index
    %1 = vector.load %arg10[%c0, %c0_0, %c0_1] : memref<20x20x8xf32, #tpu.memory_space<vmem>>, vector<20x20x8xf32>
    tpu.vector_store %arg10[%c0, %c0_0, %c0_1], %0 {strides = array<i32>} : memref<20x20x8xf32, #tpu.memory_space<vmem>>, vector<20x20x8xf32>,
    %c0_2 = arith.constant 0 : index
    %c0_3 = arith.constant 0 : index
    %c0_4 = arith.constant 0 : index
    %c0_5 = arith.constant 0 : index
    %2 = vector.load %arg1[%c0_2, %c0_3, %c0_4, %c0_5] : memref<1x16x16x4xf32, #tpu.memory_space<vmem>>, vector<1x16x16x4xf32>
    %3 = vector.shape_cast %2 : vector<1x16x16x4xf32> to vector<16x16x4xf32>
    %c2 = arith.constant 2 : index
    %c2_6 = arith.constant 2 : index
    %c0_7 = arith.constant 0 : index
    %4 = vector.load %arg10[%c2, %c2_6, %c0_7] : memref<20x20x8xf32, #tpu.memory_space<vmem>>, vector<16x16x4xf32>
    tpu.vector_store %arg10[%c2, %c2_6, %c0_7], %3 {strides = array<i32>} : memref<20x20x8xf32, #tpu.memory_space<vmem>>, vector<16x16x4xf32>,
    %c0_8 = arith.constant 0 : index
    %c0_9 = arith.constant 0 : index
    %c0_10 = arith.constant 0 : index
    %c0_11 = arith.constant 0 : index
    %5 = vector.load %arg2[%c0_8, %c0_9, %c0_10, %c0_11] : memref<1x16x16x4xf32, #tpu.memory_space<vmem>>, vector<1x16x16x4xf32>
    %6 = vector.shape_cast %5 : vector<1x16x16x4xf32> to vector<16x16x4xf32>
    %c2_12 = arith.constant 2 : index
    %c2_13 = arith.constant 2 : index
    %c4 = arith.constant 4 : index
    %7 = vector.load %arg10[%c2_12, %c2_13, %c4] : memref<20x20x8xf32, #tpu.memory_space<vmem>>, vector<16x16x4xf32>
    tpu.vector_store %arg10[%c2_12, %c2_13, %c4], %6 {strides = array<i32>} : memref<20x20x8xf32, #tpu.memory_space<vmem>>, vector<16x16x4xf32>,
    %c0_14 = arith.constant 0 : index
    %c0_15 = arith.constant 0 : index
    %c0_16 = arith.constant 0 : index
    %8 = vector.load %arg10[%c0_14, %c0_15, %c0_16] : memref<20x20x8xf32, #tpu.memory_space<vmem>>, vector<16x16x8xf32>
    %9 = vector.shape_cast %8 : vector<16x16x8xf32> to vector<256x8xf32>
    %c0_17 = arith.constant 0 : index
    %c0_18 = arith.constant 0 : index
    %10 = vector.load %arg12[%c0_17, %c0_18] : memref<256x72xf32, #tpu.memory_space<vmem>>, vector<256x8xf32>
    tpu.vector_store %arg12[%c0_17, %c0_18], %9 {strides = array<i32>} : memref<256x72xf32, #tpu.memory_space<vmem>>, vector<256x8xf32>,
    %c0_19 = arith.constant 0 : index
    %c2_20 = arith.constant 2 : index
    %c0_21 = arith.constant 0 : index
    %11 = vector.load %arg10[%c0_19, %c2_20, %c0_21] : memref<20x20x8xf32, #tpu.memory_space<vmem>>, vector<16x16x8xf32>
    %12 = vector.shape_cast %11 : vector<16x16x8xf32> to vector<256x8xf32>
    %c0_22 = arith.constant 0 : index
    %c8 = arith.constant 8 : index
    %13 = vector.load %arg12[%c0_22, %c8] : memref<256x72xf32, #tpu.memory_space<vmem>>, vector<256x8xf32>
    tpu.vector_store %arg12[%c0_22, %c8], %12 {strides = array<i32>} : memref<256x72xf32, #tpu.memory_space<vmem>>, vector<256x8xf32>,
    %c0_23 = arith.constant 0 : index
    %c4_24 = arith.constant 4 : index
    %c0_25 = arith.constant 0 : index
    %14 = vector.load %arg10[%c0_23, %c4_24, %c0_25] : memref<20x20x8xf32, #tpu.memory_space<vmem>>, vector<16x16x8xf32>
    %15 = vector.shape_cast %14 : vector<16x16x8xf32> to vector<256x8xf32>
    %c0_26 = arith.constant 0 : index
    %c16 = arith.constant 16 : index
    %16 = vector.load %arg12[%c0_26, %c16] : memref<256x72xf32, #tpu.memory_space<vmem>>, vector<256x8xf32>
    tpu.vector_store %arg12[%c0_26, %c16], %15 {strides = array<i32>} : memref<256x72xf32, #tpu.memory_space<vmem>>, vector<256x8xf32>,
    %c2_27 = arith.constant 2 : index
    %c0_28 = arith.constant 0 : index
    %c0_29 = arith.constant 0 : index
    %17 = vector.load %arg10[%c2_27, %c0_28, %c0_29] : memref<20x20x8xf32, #tpu.memory_space<vmem>>, vector<16x16x8xf32>
    %18 = vector.shape_cast %17 : vector<16x16x8xf32> to vector<256x8xf32>
    %c0_30 = arith.constant 0 : index
    %c24 = arith.constant 24 : index
    %19 = vector.load %arg12[%c0_30, %c24] : memref<256x72xf32, #tpu.memory_space<vmem>>, vector<256x8xf32>
    tpu.vector_store %arg12[%c0_30, %c24], %18 {strides = array<i32>} : memref<256x72xf32, #tpu.memory_space<vmem>>, vector<256x8xf32>,
    %c2_31 = arith.constant 2 : index
    %c2_32 = arith.constant 2 : index
    %c0_33 = arith.constant 0 : index
    %20 = vector.load %arg10[%c2_31, %c2_32, %c0_33] : memref<20x20x8xf32, #tpu.memory_space<vmem>>, vector<16x16x8xf32>
    %21 = vector.shape_cast %20 : vector<16x16x8xf32> to vector<256x8xf32>
    %c0_34 = arith.constant 0 : index
    %c32 = arith.constant 32 : index
    %22 = vector.load %arg12[%c0_34, %c32] : memref<256x72xf32, #tpu.memory_space<vmem>>, vector<256x8xf32>
    tpu.vector_store %arg12[%c0_34, %c32], %21 {strides = array<i32>} : memref<256x72xf32, #tpu.memory_space<vmem>>, vector<256x8xf32>,
    %c2_35 = arith.constant 2 : index
    %c4_36 = arith.constant 4 : index
    %c0_37 = arith.constant 0 : index
    %23 = vector.load %arg10[%c2_35, %c4_36, %c0_37] : memref<20x20x8xf32, #tpu.memory_space<vmem>>, vector<16x16x8xf32>
    %24 = vector.shape_cast %23 : vector<16x16x8xf32> to vector<256x8xf32>
    %c0_38 = arith.constant 0 : index
    %c40 = arith.constant 40 : index
    %25 = vector.load %arg12[%c0_38, %c40] : memref<256x72xf32, #tpu.memory_space<vmem>>, vector<256x8xf32>
    tpu.vector_store %arg12[%c0_38, %c40], %24 {strides = array<i32>} : memref<256x72xf32, #tpu.memory_space<vmem>>, vector<256x8xf32>,
    %c4_39 = arith.constant 4 : index
    %c0_40 = arith.constant 0 : index
    %c0_41 = arith.constant 0 : index
    %26 = vector.load %arg10[%c4_39, %c0_40, %c0_41] : memref<20x20x8xf32, #tpu.memory_space<vmem>>, vector<16x16x8xf32>
    %27 = vector.shape_cast %26 : vector<16x16x8xf32> to vector<256x8xf32>
    %c0_42 = arith.constant 0 : index
    %c48 = arith.constant 48 : index
    %28 = vector.load %arg12[%c0_42, %c48] : memref<256x72xf32, #tpu.memory_space<vmem>>, vector<256x8xf32>
    tpu.vector_store %arg12[%c0_42, %c48], %27 {strides = array<i32>} : memref<256x72xf32, #tpu.memory_space<vmem>>, vector<256x8xf32>,
    %c4_43 = arith.constant 4 : index
    %c2_44 = arith.constant 2 : index
    %c0_45 = arith.constant 0 : index
    %29 = vector.load %arg10[%c4_43, %c2_44, %c0_45] : memref<20x20x8xf32, #tpu.memory_space<vmem>>, vector<16x16x8xf32>
    %30 = vector.shape_cast %29 : vector<16x16x8xf32> to vector<256x8xf32>
    %c0_46 = arith.constant 0 : index
    %c56 = arith.constant 56 : index
    %31 = vector.load %arg12[%c0_46, %c56] : memref<256x72xf32, #tpu.memory_space<vmem>>, vector<256x8xf32>
    tpu.vector_store %arg12[%c0_46, %c56], %30 {strides = array<i32>} : memref<256x72xf32, #tpu.memory_space<vmem>>, vector<256x8xf32>,
    %c4_47 = arith.constant 4 : index
    %c4_48 = arith.constant 4 : index
    %c0_49 = arith.constant 0 : index
    %32 = vector.load %arg10[%c4_47, %c4_48, %c0_49] : memref<20x20x8xf32, #tpu.memory_space<vmem>>, vector<16x16x8xf32>
    %33 = vector.shape_cast %32 : vector<16x16x8xf32> to vector<256x8xf32>
    %c0_50 = arith.constant 0 : index
    %c64 = arith.constant 64 : index
    %34 = vector.load %arg12[%c0_50, %c64] : memref<256x72xf32, #tpu.memory_space<vmem>>, vector<256x8xf32>
    tpu.vector_store %arg12[%c0_50, %c64], %33 {strides = array<i32>} : memref<256x72xf32, #tpu.memory_space<vmem>>, vector<256x8xf32>,
    %c0_51 = arith.constant 0 : index
    %c0_52 = arith.constant 0 : index
    %35 = vector.load %arg12[%c0_51, %c0_52] : memref<256x72xf32, #tpu.memory_space<vmem>>, vector<256x72xf32>
    %c0_53 = arith.constant 0 : index
    %c0_54 = arith.constant 0 : index
    %36 = vector.load %arg3[%c0_53, %c0_54] : memref<72x8xf32, #tpu.memory_space<vmem>>, vector<72x8xf32>
    %cst_55 = arith.constant dense<0.000000e+00> : vector<256x8xf32>
    %37 = tpu.matmul %35, %36, %cst_55 {dimension_numbers = #tpu.dot_dimension_numbers<[1], [0], [0], [1], [0, 0, 1, 1], [], []>} : vector<256x72xf32>, vector<72x8xf32>, vector<256x8xf32> -> vector<256x8xf32>
    %c0_56 = arith.constant 0 : index
    %c0_57 = arith.constant 0 : index
    %38 = vector.load %arg4[%c0_56, %c0_57] : memref<1x8xf32, #tpu.memory_space<vmem>>, vector<1x8xf32>
    %39 = vector.broadcast %38 : vector<1x8xf32> to vector<256x8xf32>
    %40 = arith.mulf %37, %39 : vector<256x8xf32>
    %c0_58 = arith.constant 0 : index
    %c0_59 = arith.constant 0 : index
    %41 = vector.load %arg5[%c0_58, %c0_59] : memref<1x8xf32, #tpu.memory_space<vmem>>, vector<1x8xf32>
    %42 = vector.broadcast %41 : vector<1x8xf32> to vector<256x8xf32>
    %43 = arith.addf %40, %42 : vector<256x8xf32>
    %cst_60 = arith.constant 0.000000e+00 : f32
    %44 = vector.broadcast %cst_60 : f32 to vector<256x8xf32>
    %45 = arith.maximumf %43, %44 : vector<256x8xf32>
    %cst_61 = arith.constant 0.000000e+00 : f32
    %46 = vector.broadcast %cst_61 : f32 to vector<22x22x8xf32>
    %c0_62 = arith.constant 0 : index
    %c0_63 = arith.constant 0 : index
    %c0_64 = arith.constant 0 : index
    %47 = vector.load %arg11[%c0_62, %c0_63, %c0_64] : memref<22x22x8xf32, #tpu.memory_space<vmem>>, vector<22x22x8xf32>
    tpu.vector_store %arg11[%c0_62, %c0_63, %c0_64], %46 {strides = array<i32>} : memref<22x22x8xf32, #tpu.memory_space<vmem>>, vector<22x22x8xf32>,
    %48 = vector.shape_cast %45 : vector<256x8xf32> to vector<16x16x8xf32>
    %c3 = arith.constant 3 : index
    %c3_65 = arith.constant 3 : index
    %c0_66 = arith.constant 0 : index
    %49 = vector.load %arg11[%c3, %c3_65, %c0_66] : memref<22x22x8xf32, #tpu.memory_space<vmem>>, vector<16x16x8xf32>
    tpu.vector_store %arg11[%c3, %c3_65, %c0_66], %48 {strides = array<i32>} : memref<22x22x8xf32, #tpu.memory_space<vmem>>, vector<16x16x8xf32>,
    %c0_67 = arith.constant 0 : index
    %c0_68 = arith.constant 0 : index
    %c0_69 = arith.constant 0 : index
    %50 = vector.load %arg11[%c0_67, %c0_68, %c0_69] : memref<22x22x8xf32, #tpu.memory_space<vmem>>, vector<16x16x8xf32>
    %51 = vector.shape_cast %50 : vector<16x16x8xf32> to vector<256x8xf32>
    %c0_70 = arith.constant 0 : index
    %c0_71 = arith.constant 0 : index
    %52 = vector.load %arg13[%c0_70, %c0_71] : memref<256x72xf32, #tpu.memory_space<vmem>>, vector<256x8xf32>
    tpu.vector_store %arg13[%c0_70, %c0_71], %51 {strides = array<i32>} : memref<256x72xf32, #tpu.memory_space<vmem>>, vector<256x8xf32>,
    %c0_72 = arith.constant 0 : index
    %c3_73 = arith.constant 3 : index
    %c0_74 = arith.constant 0 : index
    %53 = vector.load %arg11[%c0_72, %c3_73, %c0_74] : memref<22x22x8xf32, #tpu.memory_space<vmem>>, vector<16x16x8xf32>
    %54 = vector.shape_cast %53 : vector<16x16x8xf32> to vector<256x8xf32>
    %c0_75 = arith.constant 0 : index
    %c8_76 = arith.constant 8 : index
    %55 = vector.load %arg13[%c0_75, %c8_76] : memref<256x72xf32, #tpu.memory_space<vmem>>, vector<256x8xf32>
    tpu.vector_store %arg13[%c0_75, %c8_76], %54 {strides = array<i32>} : memref<256x72xf32, #tpu.memory_space<vmem>>, vector<256x8xf32>,
    %c0_77 = arith.constant 0 : index
    %c6 = arith.constant 6 : index
    %c0_78 = arith.constant 0 : index
    %56 = vector.load %arg11[%c0_77, %c6, %c0_78] : memref<22x22x8xf32, #tpu.memory_space<vmem>>, vector<16x16x8xf32>
    %57 = vector.shape_cast %56 : vector<16x16x8xf32> to vector<256x8xf32>
    %c0_79 = arith.constant 0 : index
    %c16_80 = arith.constant 16 : index
    %58 = vector.load %arg13[%c0_79, %c16_80] : memref<256x72xf32, #tpu.memory_space<vmem>>, vector<256x8xf32>
    tpu.vector_store %arg13[%c0_79, %c16_80], %57 {strides = array<i32>} : memref<256x72xf32, #tpu.memory_space<vmem>>, vector<256x8xf32>,
    %c3_81 = arith.constant 3 : index
    %c0_82 = arith.constant 0 : index
    %c0_83 = arith.constant 0 : index
    %59 = vector.load %arg11[%c3_81, %c0_82, %c0_83] : memref<22x22x8xf32, #tpu.memory_space<vmem>>, vector<16x16x8xf32>
    %60 = vector.shape_cast %59 : vector<16x16x8xf32> to vector<256x8xf32>
    %c0_84 = arith.constant 0 : index
    %c24_85 = arith.constant 24 : index
    %61 = vector.load %arg13[%c0_84, %c24_85] : memref<256x72xf32, #tpu.memory_space<vmem>>, vector<256x8xf32>
    tpu.vector_store %arg13[%c0_84, %c24_85], %60 {strides = array<i32>} : memref<256x72xf32, #tpu.memory_space<vmem>>, vector<256x8xf32>,
    %c3_86 = arith.constant 3 : index
    %c3_87 = arith.constant 3 : index
    %c0_88 = arith.constant 0 : index
    %62 = vector.load %arg11[%c3_86, %c3_87, %c0_88] : memref<22x22x8xf32, #tpu.memory_space<vmem>>, vector<16x16x8xf32>
    %63 = vector.shape_cast %62 : vector<16x16x8xf32> to vector<256x8xf32>
    %c0_89 = arith.constant 0 : index
    %c32_90 = arith.constant 32 : index
    %64 = vector.load %arg13[%c0_89, %c32_90] : memref<256x72xf32, #tpu.memory_space<vmem>>, vector<256x8xf32>
    tpu.vector_store %arg13[%c0_89, %c32_90], %63 {strides = array<i32>} : memref<256x72xf32, #tpu.memory_space<vmem>>, vector<256x8xf32>,
    %c3_91 = arith.constant 3 : index
    %c6_92 = arith.constant 6 : index
    %c0_93 = arith.constant 0 : index
    %65 = vector.load %arg11[%c3_91, %c6_92, %c0_93] : memref<22x22x8xf32, #tpu.memory_space<vmem>>, vector<16x16x8xf32>
    %66 = vector.shape_cast %65 : vector<16x16x8xf32> to vector<256x8xf32>
    %c0_94 = arith.constant 0 : index
    %c40_95 = arith.constant 40 : index
    %67 = vector.load %arg13[%c0_94, %c40_95] : memref<256x72xf32, #tpu.memory_space<vmem>>, vector<256x8xf32>
    tpu.vector_store %arg13[%c0_94, %c40_95], %66 {strides = array<i32>} : memref<256x72xf32, #tpu.memory_space<vmem>>, vector<256x8xf32>,
    %c6_96 = arith.constant 6 : index
    %c0_97 = arith.constant 0 : index
    %c0_98 = arith.constant 0 : index
    %68 = vector.load %arg11[%c6_96, %c0_97, %c0_98] : memref<22x22x8xf32, #tpu.memory_space<vmem>>, vector<16x16x8xf32>
    %69 = vector.shape_cast %68 : vector<16x16x8xf32> to vector<256x8xf32>
    %c0_99 = arith.constant 0 : index
    %c48_100 = arith.constant 48 : index
    %70 = vector.load %arg13[%c0_99, %c48_100] : memref<256x72xf32, #tpu.memory_space<vmem>>, vector<256x8xf32>
    tpu.vector_store %arg13[%c0_99, %c48_100], %69 {strides = array<i32>} : memref<256x72xf32, #tpu.memory_space<vmem>>, vector<256x8xf32>,
    %c6_101 = arith.constant 6 : index
    %c3_102 = arith.constant 3 : index
    %c0_103 = arith.constant 0 : index
    %71 = vector.load %arg11[%c6_101, %c3_102, %c0_103] : memref<22x22x8xf32, #tpu.memory_space<vmem>>, vector<16x16x8xf32>
    %72 = vector.shape_cast %71 : vector<16x16x8xf32> to vector<256x8xf32>
    %c0_104 = arith.constant 0 : index
    %c56_105 = arith.constant 56 : index
    %73 = vector.load %arg13[%c0_104, %c56_105] : memref<256x72xf32, #tpu.memory_space<vmem>>, vector<256x8xf32>
    tpu.vector_store %arg13[%c0_104, %c56_105], %72 {strides = array<i32>} : memref<256x72xf32, #tpu.memory_space<vmem>>, vector<256x8xf32>,
    %c6_106 = arith.constant 6 : index
    %c6_107 = arith.constant 6 : index
    %c0_108 = arith.constant 0 : index
    %74 = vector.load %arg11[%c6_106, %c6_107, %c0_108] : memref<22x22x8xf32, #tpu.memory_space<vmem>>, vector<16x16x8xf32>
    %75 = vector.shape_cast %74 : vector<16x16x8xf32> to vector<256x8xf32>
    %c0_109 = arith.constant 0 : index
    %c64_110 = arith.constant 64 : index
    %76 = vector.load %arg13[%c0_109, %c64_110] : memref<256x72xf32, #tpu.memory_space<vmem>>, vector<256x8xf32>
    tpu.vector_store %arg13[%c0_109, %c64_110], %75 {strides = array<i32>} : memref<256x72xf32, #tpu.memory_space<vmem>>, vector<256x8xf32>,
    %c0_111 = arith.constant 0 : index
    %c0_112 = arith.constant 0 : index
    %77 = vector.load %arg13[%c0_111, %c0_112] : memref<256x72xf32, #tpu.memory_space<vmem>>, vector<256x72xf32>
    %c0_113 = arith.constant 0 : index
    %c0_114 = arith.constant 0 : index
    %78 = vector.load %arg6[%c0_113, %c0_114] : memref<72x8xf32, #tpu.memory_space<vmem>>, vector<72x8xf32>
    %cst_115 = arith.constant dense<0.000000e+00> : vector<256x8xf32>
    %79 = tpu.matmul %77, %78, %cst_115 {dimension_numbers = #tpu.dot_dimension_numbers<[1], [0], [0], [1], [0, 0, 1, 1], [], []>} : vector<256x72xf32>, vector<72x8xf32>, vector<256x8xf32> -> vector<256x8xf32>
    %c0_116 = arith.constant 0 : index
    %c0_117 = arith.constant 0 : index
    %80 = vector.load %arg7[%c0_116, %c0_117] : memref<1x8xf32, #tpu.memory_space<vmem>>, vector<1x8xf32>
    %81 = vector.broadcast %80 : vector<1x8xf32> to vector<256x8xf32>
    %82 = arith.mulf %79, %81 : vector<256x8xf32>
    %c0_118 = arith.constant 0 : index
    %c0_119 = arith.constant 0 : index
    %83 = vector.load %arg8[%c0_118, %c0_119] : memref<1x8xf32, #tpu.memory_space<vmem>>, vector<1x8xf32>
    %84 = vector.broadcast %83 : vector<1x8xf32> to vector<256x8xf32>
    %85 = arith.addf %82, %84 : vector<256x8xf32>
    %cst_120 = arith.constant 0.000000e+00 : f32
    %86 = vector.broadcast %cst_120 : f32 to vector<256x8xf32>
    %87 = arith.maximumf %85, %86 : vector<256x8xf32>
    %88 = tpu.transpose %87, [1, 0] : vector<256x8xf32> -> vector<8x256xf32>
    %c0_121 = arith.constant 0 : index
    %c0_122 = arith.constant 0 : index
    %c0_123 = arith.constant 0 : index
    %89 = vector.load %arg9[%c0_121, %c0_122, %c0_123] : memref<1x8x256xf32, #tpu.memory_space<vmem>>, vector<1x8x256xf32>
    %90 = vector.shape_cast %89 : vector<1x8x256xf32> to vector<8x256xf32>
    %91 = vector.shape_cast %88 : vector<8x256xf32> to vector<1x8x256xf32>
    tpu.vector_store %arg9[%c0_121, %c0_122, %c0_123], %91 {strides = array<i32>} : memref<1x8x256xf32, #tpu.memory_space<vmem>>, vector<1x8x256xf32>,
    return
  }
  func.func @transform_0(%arg0: i32) -> (i32, i32, i32, i32) {
    %c0_i32 = arith.constant 0 : i32
    %c0_i32_0 = arith.constant 0 : i32
    %c0_i32_1 = arith.constant 0 : i32
    %c0_i32_2 = arith.constant 0 : i32
    return %arg0, %c0_i32, %c0_i32_0, %c0_i32_1 : i32, i32, i32, i32
  }
  func.func @transform_1(%arg0: i32) -> (i32, i32, i32, i32) {
    %c0_i32 = arith.constant 0 : i32
    %c0_i32_0 = arith.constant 0 : i32
    %c0_i32_1 = arith.constant 0 : i32
    %c0_i32_2 = arith.constant 0 : i32
    return %arg0, %c0_i32, %c0_i32_0, %c0_i32_1 : i32, i32, i32, i32
  }
  func.func @transform_2(%arg0: i32) -> (i32, i32) {
    %c0_i32 = arith.constant 0 : i32
    %c0_i32_0 = arith.constant 0 : i32
    %c0_i32_1 = arith.constant 0 : i32
    return %c0_i32, %c0_i32_0 : i32, i32
  }
  func.func @transform_3(%arg0: i32) -> (i32, i32) {
    %c0_i32 = arith.constant 0 : i32
    %c0_i32_0 = arith.constant 0 : i32
    %c0_i32_1 = arith.constant 0 : i32
    return %c0_i32, %c0_i32_0 : i32, i32
  }
  func.func @transform_4(%arg0: i32) -> (i32, i32) {
    %c0_i32 = arith.constant 0 : i32
    %c0_i32_0 = arith.constant 0 : i32
    %c0_i32_1 = arith.constant 0 : i32
    return %c0_i32, %c0_i32_0 : i32, i32
  }
  func.func @transform_5(%arg0: i32) -> (i32, i32) {
    %c0_i32 = arith.constant 0 : i32
    %c0_i32_0 = arith.constant 0 : i32
    %c0_i32_1 = arith.constant 0 : i32
    return %c0_i32, %c0_i32_0 : i32, i32
  }
  func.func @transform_6(%arg0: i32) -> (i32, i32) {
    %c0_i32 = arith.constant 0 : i32
    %c0_i32_0 = arith.constant 0 : i32
    %c0_i32_1 = arith.constant 0 : i32
    return %c0_i32, %c0_i32_0 : i32, i32
  }
  func.func @transform_7(%arg0: i32) -> (i32, i32) {
    %c0_i32 = arith.constant 0 : i32
    %c0_i32_0 = arith.constant 0 : i32
    %c0_i32_1 = arith.constant 0 : i32
    return %c0_i32, %c0_i32_0 : i32, i32
  }
  func.func @transform_8(%arg0: i32) -> (i32, i32, i32) {
    %c0_i32 = arith.constant 0 : i32
    %c0_i32_0 = arith.constant 0 : i32
    %c0_i32_1 = arith.constant 0 : i32
    return %arg0, %c0_i32, %c0_i32_0 : i32, i32, i32
  }
}

</mosaic_0001>

<llo_original>
// kernel: up_forward.1
$region0: #{up_forward.1}
  #allocation0 [shape = 'u32[]', space=smem, size = 0x4, offset = 0x4, fixed_abs, tag = 'smem constant byte address 0x4 - core index']
  #allocation1 [shape = 'u32[144,128]{1,0:T(1,128)}', space=vmem, size = 0x12000, scoped, tag = 'internal scratch']
  #allocation2 [shape = 'f32[20,20,8]{2,1,0:T(8,128)}', space=vmem, size = 0x3c000, scoped, tag = 'scratch operand']
  #allocation3 [shape = 'f32[22,22,8]{2,1,0:T(8,128)}', space=vmem, size = 0x42000, scoped, tag = 'scratch operand']
  #allocation4 [shape = 'f32[256,72]{1,0:T(8,128)}', space=vmem, size = 0x20000, scoped, tag = 'scratch operand']
  #allocation5 [shape = 'f32[256,72]{1,0:T(8,128)}', space=vmem, size = 0x20000, scoped, tag = 'scratch operand']
  %s0 = inlined_call_operand.vmem [shape: f32[2,16,16,4], index: 0, kind: input, shape index: {}]
  %s1 = inlined_call_operand.vmem [shape: f32[2,16,16,4], index: 1, kind: input, shape index: {}]
  %s2 = inlined_call_operand.vmem [shape: f32[72,8], index: 2, kind: input, shape index: {}]
  %s3 = inlined_call_operand.vmem [shape: f32[1,8], index: 3, kind: input, shape index: {}]
  %s4 = inlined_call_operand.vmem [shape: f32[1,8], index: 4, kind: input, shape index: {}]
  %s5 = inlined_call_operand.vmem [shape: f32[72,8], index: 5, kind: input, shape index: {}]
  %s6 = inlined_call_operand.vmem [shape: f32[1,8], index: 6, kind: input, shape index: {}]
  %s7 = inlined_call_operand.vmem [shape: f32[1,8], index: 7, kind: input, shape index: {}]
  %s8 = inlined_call_operand.vmem [shape: f32[2,8,256], index: 8, kind: output, shape index: {}]
  %s9 = sld [smem:[#allocation0]]
  $region65: #{up_forward.1} parent=0
    _
  %s11 = ssub.s32 1, %s9
  %s12 = scalar_select 0, %s11, %s9
  loop: start=0, step=1, limit=4
  $region2: #{up_forward.1} parent=0 // loop_pre_header
    _
  $region3: #{up_forward.1} parent=0 // loop_header
    %s14 = sphi 0, %s18
    %p15 = scmp.ge.s32.totalorder %s14, 4
    %s24 = sphi 0, %s26
    %s27 = sphi 0, %s24
    %s28 = sphi 0, %s27
    %s44 = sphi 0, %s28
    %s50 = sphi 0, %s52
    %s53 = sphi 0, %s50
    %s54 = sphi 0, %s53
    %s70 = sphi 0, %s54
    %s74 = sphi 0, %s74
    %s76 = sphi 0, %s74
    %s77 = sphi 0, %s76
    %s91 = sphi 0, %s77
    %s95 = sphi 0, %s95
    %s97 = sphi 0, %s95
    %s98 = sphi 0, %s97
    %s112 = sphi 0, %s98
    %s116 = sphi 0, %s116
    %s118 = sphi 0, %s116
    %s119 = sphi 0, %s118
    %s133 = sphi 0, %s119
    %s137 = sphi 0, %s137
    %s139 = sphi 0, %s137
    %s140 = sphi 0, %s139
    %s154 = sphi 0, %s140
    %s158 = sphi 0, %s158
    %s160 = sphi 0, %s158
    %s161 = sphi 0, %s160
    %s175 = sphi 0, %s161
    %s179 = sphi 0, %s179
    %s181 = sphi 0, %s179
    %s182 = sphi 0, %s181
    %s196 = sphi 0, %s182
    %s202 = sphi 0, %s204
    %s205 = sphi 0, %s202
    %s206 = sphi 0, %s205
    %s222 = sphi 0, %s206
  $region4: #{up_forward.1} parent=0 // loop_header_branch
    %17 = sbr.rel (%p15) target = $region8
  $region5: #{up_forward.1} parent=0 // loop_body
    %s19 = ssub.s32 %s14, 1
    %s20 = ssub.s32 %s14, 2
    %s21 = sadd.s32 %s14, 1
    %s22 = ssub.s32 %s14, %s21
    %p23 = scmp.eq.s32.totalorder %s22, 0
    %s25 = sadd.s32 %s24, 1
    %s26 = scalar_select %p23, %s24, %s25
    %p29 = pneg %p23
    %p30 = scmp.eq.s32.totalorder %s14, 1
    %p31 = por %p29, %p30
    %p32 = scmp.ne.s32.totalorder %s24, %s27
    %p33 = scmp.eq.s32.totalorder %s14, 0
    %p34 = por %p32, %p33
    %p35 = scmp.ne.s32.totalorder %s24, %s27
    %p36 = scmp.eq.s32.totalorder %s19, 1
    %p37 = por %p35, %p36
    %p38 = scmp.ne.s32.totalorder %s27, %s28
    %p39 = scmp.eq.s32.totalorder %s19, 0
    %p40 = por %p38, %p39
    %p41 = scmp.ne.s32.totalorder %s27, %s28
    %p42 = scmp.eq.s32.totalorder %s20, 1
    %p43 = por %p41, %p42
    %p45 = scmp.ne.s32.totalorder %s28, %s44
    %p46 = scmp.eq.s32.totalorder %s20, 0
    %p47 = por %p45, %p46
    %s48 = ssub.s32 %s14, %s21
    %p49 = scmp.eq.s32.totalorder %s48, 0
    %s51 = sadd.s32 %s50, 1
    %s52 = scalar_select %p49, %s50, %s51
    %p55 = pneg %p49
    %p56 = scmp.eq.s32.totalorder %s14, 1
    %p57 = por %p55, %p56
    %p58 = scmp.ne.s32.totalorder %s50, %s53
    %p59 = scmp.eq.s32.totalorder %s14, 0
    %p60 = por %p58, %p59
    %p61 = scmp.ne.s32.totalorder %s50, %s53
    %p62 = scmp.eq.s32.totalorder %s19, 1
    %p63 = por %p61, %p62
    %p64 = scmp.ne.s32.totalorder %s53, %s54
    %p65 = scmp.eq.s32.totalorder %s19, 0
    %p66 = por %p64, %p65
    %p67 = scmp.ne.s32.totalorder %s53, %s54
    %p68 = scmp.eq.s32.totalorder %s20, 1
    %p69 = por %p67, %p68
    %p71 = scmp.ne.s32.totalorder %s54, %s70
    %p72 = scmp.eq.s32.totalorder %s20, 0
    %p73 = por %p71, %p72
    %s75 = sadd.s32 %s74, 1
    %p78 = scmp.eq.s32.totalorder %s14, 1
    %p79 = scmp.ne.s32.totalorder %s74, %s76
    %p80 = scmp.eq.s32.totalorder %s14, 0
    %p81 = por %p79, %p80
    %p82 = scmp.ne.s32.totalorder %s74, %s76
    %p83 = scmp.eq.s32.totalorder %s19, 1
    %p84 = por %p82, %p83
    %p85 = scmp.ne.s32.totalorder %s76, %s77
    %p86 = scmp.eq.s32.totalorder %s19, 0
    %p87 = por %p85, %p86
    %p88 = scmp.ne.s32.totalorder %s76, %s77
    %p89 = scmp.eq.s32.totalorder %s20, 1
    %p90 = por %p88, %p89
    %p92 = scmp.ne.s32.totalorder %s77, %s91
    %p93 = scmp.eq.s32.totalorder %s20, 0
    %p94 = por %p92, %p93
    %s96 = sadd.s32 %s95, 1
    %p99 = scmp.eq.s32.totalorder %s14, 1
    %p100 = scmp.ne.s32.totalorder %s95, %s97
    %p101 = scmp.eq.s32.totalorder %s14, 0
    %p102 = por %p100, %p101
    %p103 = scmp.ne.s32.totalorder %s95, %s97
    %p104 = scmp.eq.s32.totalorder %s19, 1
    %p105 = por %p103, %p104
    %p106 = scmp.ne.s32.totalorder %s97, %s98
    %p107 = scmp.eq.s32.totalorder %s19, 0
    %p108 = por %p106, %p107
    %p109 = scmp.ne.s32.totalorder %s97, %s98
    %p110 = scmp.eq.s32.totalorder %s20, 1
    %p111 = por %p109, %p110
    %p113 = scmp.ne.s32.totalorder %s98, %s112
    %p114 = scmp.eq.s32.totalorder %s20, 0
    %p115 = por %p113, %p114
    %s117 = sadd.s32 %s116, 1
    %p120 = scmp.eq.s32.totalorder %s14, 1
    %p121 = scmp.ne.s32.totalorder %s116, %s118
    %p122 = scmp.eq.s32.totalorder %s14, 0
    %p123 = por %p121, %p122
    %p124 = scmp.ne.s32.totalorder %s116, %s118
    %p125 = scmp.eq.s32.totalorder %s19, 1
    %p126 = por %p124, %p125
    %p127 = scmp.ne.s32.totalorder %s118, %s119
    %p128 = scmp.eq.s32.totalorder %s19, 0
    %p129 = por %p127, %p128
    %p130 = scmp.ne.s32.totalorder %s118, %s119
    %p131 = scmp.eq.s32.totalorder %s20, 1
    %p132 = por %p130, %p131
    %p134 = scmp.ne.s32.totalorder %s119, %s133
    %p135 = scmp.eq.s32.totalorder %s20, 0
    %p136 = por %p134, %p135
    %s138 = sadd.s32 %s137, 1
    %p141 = scmp.eq.s32.totalorder %s14, 1
    %p142 = scmp.ne.s32.totalorder %s137, %s139
    %p143 = scmp.eq.s32.totalorder %s14, 0
    %p144 = por %p142, %p143
    %p145 = scmp.ne.s32.totalorder %s137, %s139
    %p146 = scmp.eq.s32.totalorder %s19, 1
    %p147 = por %p145, %p146
    %p148 = scmp.ne.s32.totalorder %s139, %s140
    %p149 = scmp.eq.s32.totalorder %s19, 0
    %p150 = por %p148, %p149
    %p151 = scmp.ne.s32.totalorder %s139, %s140
    %p152 = scmp.eq.s32.totalorder %s20, 1
    %p153 = por %p151, %p152
    %p155 = scmp.ne.s32.totalorder %s140, %s154
    %p156 = scmp.eq.s32.totalorder %s20, 0
    %p157 = por %p155, %p156
    %s159 = sadd.s32 %s158, 1
    %p162 = scmp.eq.s32.totalorder %s14, 1
    %p163 = scmp.ne.s32.totalorder %s158, %s160
    %p164 = scmp.eq.s32.totalorder %s14, 0
    %p165 = por %p163, %p164
    %p166 = scmp.ne.s32.totalorder %s158, %s160
    %p167 = scmp.eq.s32.totalorder %s19, 1
    %p168 = por %p166, %p167
    %p169 = scmp.ne.s32.totalorder %s160, %s161
    %p170 = scmp.eq.s32.totalorder %s19, 0
    %p171 = por %p169, %p170
    %p172 = scmp.ne.s32.totalorder %s160, %s161
    %p173 = scmp.eq.s32.totalorder %s20, 1
    %p174 = por %p172, %p173
    %p176 = scmp.ne.s32.totalorder %s161, %s175
    %p177 = scmp.eq.s32.totalorder %s20, 0
    %p178 = por %p176, %p177
    %s180 = sadd.s32 %s179, 1
    %p183 = scmp.eq.s32.totalorder %s14, 1
    %p184 = scmp.ne.s32.totalorder %s179, %s181
    %p185 = scmp.eq.s32.totalorder %s14, 0
    %p186 = por %p184, %p185
    %p187 = scmp.ne.s32.totalorder %s179, %s181
    %p188 = scmp.eq.s32.totalorder %s19, 1
    %p189 = por %p187, %p188
    %p190 = scmp.ne.s32.totalorder %s181, %s182
    %p191 = scmp.eq.s32.totalorder %s19, 0
    %p192 = por %p190, %p191
    %p193 = scmp.ne.s32.totalorder %s181, %s182
    %p194 = scmp.eq.s32.totalorder %s20, 1
    %p195 = por %p193, %p194
    %p197 = scmp.ne.s32.totalorder %s182, %s196
    %p198 = scmp.eq.s32.totalorder %s20, 0
    %p199 = por %p197, %p198
    %s200 = ssub.s32 %s14, %s21
    %p201 = scmp.eq.s32.totalorder %s200, 0
    %s203 = sadd.s32 %s202, 1
    %s204 = scalar_select %p201, %s202, %s203
    %p207 = pneg %p201
    %p208 = scmp.eq.s32.totalorder %s14, 1
    %p209 = por %p207, %p208
    %p210 = scmp.ne.s32.totalorder %s202, %s205
    %p211 = scmp.eq.s32.totalorder %s14, 0
    %p212 = por %p210, %p211
    %p213 = scmp.ne.s32.totalorder %s202, %s205
    %p214 = scmp.eq.s32.totalorder %s19, 1
    %p215 = por %p213, %p214
    %p216 = scmp.ne.s32.totalorder %s205, %s206
    %p217 = scmp.eq.s32.totalorder %s19, 0
    %p218 = por %p216, %p217
    %p219 = scmp.ne.s32.totalorder %s205, %s206
    %p220 = scmp.eq.s32.totalorder %s20, 1
    %p221 = por %p219, %p220
    %p223 = scmp.ne.s32.totalorder %s206, %s222
    %p224 = scmp.eq.s32.totalorder %s20, 0
    %p225 = por %p223, %p224
    %p226 = scmp.le.s32.totalorder 1, %s14
    %p227 = scmp.lt.s32.totalorder %s14, 3
    %p228 = pnand %p226, %p227
    %p229 = pneg %p228
    // Predicated region
    $region9: #{up_forward.1} parent=5 // pred_check
      _
    $region10: #{up_forward.1} parent=5 // pred_check_branch
      %231 = sbr.rel (%p228) target = $region12
    $region11: #{up_forward.1} parent=5 // pred_region
      %s232 = ssub.s32 %s14, 1
      // Predicated region
      $region13: #{up_forward.1} parent=11 // pred_check
        %p233 = pneg %p87
      $region14: #{up_forward.1} parent=11 // pred_check_branch
        %235 = sbr.rel (%p233) target = $region16
      $region15: #{up_forward.1} parent=11 // pred_region
        _
      $region16: #{up_forward.1} parent=11 // pred_fallthru
        _
      // Predicated region
      $region17: #{up_forward.1} parent=11 // pred_check
        %p236 = pneg %p108
      $region18: #{up_forward.1} parent=11 // pred_check_branch
        %238 = sbr.rel (%p236) target = $region20
      $region19: #{up_forward.1} parent=11 // pred_region
        _
      $region20: #{up_forward.1} parent=11 // pred_fallthru
        _
      // Predicated region
      $region21: #{up_forward.1} parent=11 // pred_check
        %p239 = pneg %p129
      $region22: #{up_forward.1} parent=11 // pred_check_branch
        %241 = sbr.rel (%p239) target = $region24
      $region23: #{up_forward.1} parent=11 // pred_region
        _
      $region24: #{up_forward.1} parent=11 // pred_fallthru
        _
      // Predicated region
      $region25: #{up_forward.1} parent=11 // pred_check
        %p242 = pneg %p150
      $region26: #{up_forward.1} parent=11 // pred_check_branch
        %244 = sbr.rel (%p242) target = $region28
      $region27: #{up_forward.1} parent=11 // pred_region
        _
      $region28: #{up_forward.1} parent=11 // pred_fallthru
        _
      // Predicated region
      $region29: #{up_forward.1} parent=11 // pred_check
        %p245 = pneg %p171
      $region30: #{up_forward.1} parent=11 // pred_check_branch
        %247 = sbr.rel (%p245) target = $region32
      $region31: #{up_forward.1} parent=11 // pred_region
        _
      $region32: #{up_forward.1} parent=11 // pred_fallthru
        _
      // Predicated region
      $region33: #{up_forward.1} parent=11 // pred_check
        %p248 = pneg %p192
      $region34: #{up_forward.1} parent=11 // pred_check_branch
        %250 = sbr.rel (%p248) target = $region36
      $region35: #{up_forward.1} parent=11 // pred_region
        _
      $region36: #{up_forward.1} parent=11 // pred_fallthru
        _
    $region12: #{up_forward.1} parent=5 // pred_fallthru
      _
    %p251 = scmp.lt.s32.totalorder %s14, 2
    // Predicated region
    $region37: #{up_forward.1} parent=5 // pred_check
      %p252 = pneg %p251
    $region38: #{up_forward.1} parent=5 // pred_check_branch
      %254 = sbr.rel (%p252) target = $region40
    $region39: #{up_forward.1} parent=5 // pred_region
      // Predicated region
      $region41: #{up_forward.1} parent=39 // pred_check
        %p255 = pneg %p34
      $region42: #{up_forward.1} parent=39 // pred_check_branch
        %257 = sbr.rel (%p255) target = $region44
      $region43: #{up_forward.1} parent=39 // pred_region
        %p258 = scmp.lt.s32.totalorder %s14, 1
        %s259 = scalar_select %p258, %s14, 1
        %s260 = smul.addr %s259, 32
        %s261 = smul.addr %s260, 8
        %s262 = scalar_lea.vmem %s0, %s261
      $region44: #{up_forward.1} parent=39 // pred_fallthru
        _
      // Predicated region
      $region45: #{up_forward.1} parent=39 // pred_check
        %p263 = pneg %p60
      $region46: #{up_forward.1} parent=39 // pred_check_branch
        %265 = sbr.rel (%p263) target = $region48
      $region47: #{up_forward.1} parent=39 // pred_region
        %p266 = scmp.lt.s32.totalorder %s14, 1
        %s267 = scalar_select %p266, %s14, 1
        %s268 = smul.addr %s267, 32
        %s269 = smul.addr %s268, 8
        %s270 = scalar_lea.vmem %s1, %s269
      $region48: #{up_forward.1} parent=39 // pred_fallthru
        _
    $region40: #{up_forward.1} parent=5 // pred_fallthru
      _
    %p271 = scmp.le.s32.totalorder 1, %s14
    %p272 = scmp.lt.s32.totalorder %s14, 3
    %p273 = pnand %p271, %p272
    %p274 = pneg %p273
    // Predicated region
    $region49: #{up_forward.1} parent=5 // pred_check
      _
    $region50: #{up_forward.1} parent=5 // pred_check_branch
      %276 = sbr.rel (%p273) target = $region52
    $region51: #{up_forward.1} parent=5 // pred_region
      %s277 = ssub.s32 %s14, 1
      %p278 = scmp.lt.s32.totalorder %s19, 1
      %s279 = scalar_select %p278, %s19, 1
      %s280 = smul.addr %s279, 32
      %s281 = smul.addr %s280, 8
      %s282 = scalar_lea.vmem %s0, %s281
      %p283 = pneg %p40
      %p284 = pneg %p37
      %p285 = scmp.lt.s32.totalorder %s19, 1
      %s286 = scalar_select %p285, %s19, 1
      %s287 = smul.addr %s286, 32
      %s288 = smul.addr %s287, 8
      %s289 = scalar_lea.vmem %s1, %s288
      %p290 = pneg %p66
      %p291 = pneg %p63
      %p292 = pneg %p87
      %p293 = pneg %p84
      %p294 = pneg %p108
      %p295 = pneg %p105
      %p296 = pneg %p129
      %p297 = pneg %p126
      %p298 = pneg %p150
      %p299 = pneg %p147
      %p300 = pneg %p171
      %p301 = pneg %p168
      %p302 = pneg %p192
      %p303 = pneg %p189
      %p304 = pneg %p218
      %p305 = pneg %p215
      %p306 = scmp.lt.s32.totalorder %s19, 1
      %s307 = scalar_select %p306, %s19, 1
      %s308 = smul.addr %s307, 2
      %s309 = smul.addr %s308, 8
      %s310 = scalar_lea.vmem %s8, %s309
      %p311 = scmp.lt.s32.totalorder %s19, 1
      %s312 = scalar_select %p311, %s19, 1
      %s313 = smul.addr %s312, 32
      %s314 = smul.addr %s313, 8
      %s315 = scalar_lea.vmem %s0, %s314
      %p316 = scmp.lt.s32.totalorder %s19, 1
      %s317 = scalar_select %p316, %s19, 1
      %s318 = smul.addr %s317, 32
      %s319 = smul.addr %s318, 8
      %s320 = scalar_lea.vmem %s1, %s319
      %p321 = scmp.lt.s32.totalorder %s19, 1
      %s322 = scalar_select %p321, %s19, 1
      %s323 = smul.addr %s322, 2
      %s324 = smul.addr %s323, 8
      %s325 = scalar_lea.vmem %s8, %s324
      %vm326 = vcmask 64512
      %327 = vst.msk [vmem:[#allocation2] sm:$0xff] %vm326, 0.0
      %328 = vst.msk [vmem:[#allocation2 + $0x8] sm:$0xff] %vm326, 0.0
      %vm329 = vcmask 60416
      %330 = vst.msk [vmem:[#allocation2 + $0x10] sm:$0xf] %vm329, 0.0
      %331 = vst.msk [vmem:[#allocation2 + $0x18] sm:$0xff] %vm326, 0.0
      %332 = vst.msk [vmem:[#allocation2 + $0x20] sm:$0xff] %vm326, 0.0
      %333 = vst.msk [vmem:[#allocation2 + $0x28] sm:$0xf] %vm329, 0.0
      %334 = vst.msk [vmem:[#allocation2 + $0x30] sm:$0xff] %vm326, 0.0
      %335 = vst.msk [vmem:[#allocation2 + $0x38] sm:$0xff] %vm326, 0.0
      %336 = vst.msk [vmem:[#allocation2 + $0x40] sm:$0xf] %vm329, 0.0
      %337 = vst.msk [vmem:[#allocation2 + $0x48] sm:$0xff] %vm326, 0.0
      %338 = vst.msk [vmem:[#allocation2 + $0x50] sm:$0xff] %vm326, 0.0
      %339 = vst.msk [vmem:[#allocation2 + $0x58] sm:$0xf] %vm329, 0.0
      %340 = vst.msk [vmem:[#allocation2 + $0x60] sm:$0xff] %vm326, 0.0
      %341 = vst.msk [vmem:[#allocation2 + $0x68] sm:$0xff] %vm326, 0.0
      %342 = vst.msk [vmem:[#allocation2 + $0x70] sm:$0xf] %vm329, 0.0
      %343 = vst.msk [vmem:[#allocation2 + $0x78] sm:$0xff] %vm326, 0.0
      %344 = vst.msk [vmem:[#allocation2 + $0x80] sm:$0xff] %vm326, 0.0
      %345 = vst.msk [vmem:[#allocation2 + $0x88] sm:$0xf] %vm329, 0.0
      %346 = vst.msk [vmem:[#allocation2 + $0x90] sm:$0xff] %vm326, 0.0
      %347 = vst.msk [vmem:[#allocation2 + $0x98] sm:$0xff] %vm326, 0.0
      %348 = vst.msk [vmem:[#allocation2 + $0xa0] sm:$0xf] %vm329, 0.0
      %349 = vst.msk [vmem:[#allocation2 + $0xa8] sm:$0xff] %vm326, 0.0
      %350 = vst.msk [vmem:[#allocation2 + $0xb0] sm:$0xff] %vm326, 0.0
      %351 = vst.msk [vmem:[#allocation2 + $0xb8] sm:$0xf] %vm329, 0.0
      %352 = vst.msk [vmem:[#allocation2 + $0xc0] sm:$0xff] %vm326, 0.0
      %353 = vst.msk [vmem:[#allocation2 + $0xc8] sm:$0xff] %vm326, 0.0
      %354 = vst.msk [vmem:[#allocation2 + $0xd0] sm:$0xf] %vm329, 0.0
      %355 = vst.msk [vmem:[#allocation2 + $0xd8] sm:$0xff] %vm326, 0.0
      %356 = vst.msk [vmem:[#allocation2 + $0xe0] sm:$0xff] %vm326, 0.0
      %357 = vst.msk [vmem:[#allocation2 + $0xe8] sm:$0xf] %vm329, 0.0
      %358 = vst.msk [vmem:[#allocation2 + $0xf0] sm:$0xff] %vm326, 0.0
      %359 = vst.msk [vmem:[#allocation2 + $0xf8] sm:$0xff] %vm326, 0.0
      %360 = vst.msk [vmem:[#allocation2 + $0x100] sm:$0xf] %vm329, 0.0
      %361 = vst.msk [vmem:[#allocation2 + $0x108] sm:$0xff] %vm326, 0.0
      %362 = vst.msk [vmem:[#allocation2 + $0x110] sm:$0xff] %vm326, 0.0
      %363 = vst.msk [vmem:[#allocation2 + $0x118] sm:$0xf] %vm329, 0.0
      %364 = vst.msk [vmem:[#allocation2 + $0x120] sm:$0xff] %vm326, 0.0
      %365 = vst.msk [vmem:[#allocation2 + $0x128] sm:$0xff] %vm326, 0.0
      %366 = vst.msk [vmem:[#allocation2 + $0x130] sm:$0xf] %vm329, 0.0
      %367 = vst.msk [vmem:[#allocation2 + $0x138] sm:$0xff] %vm326, 0.0
      %368 = vst.msk [vmem:[#allocation2 + $0x140] sm:$0xff] %vm326, 0.0
      %369 = vst.msk [vmem:[#allocation2 + $0x148] sm:$0xf] %vm329, 0.0
      %370 = vst.msk [vmem:[#allocation2 + $0x150] sm:$0xff] %vm326, 0.0
      %371 = vst.msk [vmem:[#allocation2 + $0x158] sm:$0xff] %vm326, 0.0
      %372 = vst.msk [vmem:[#allocation2 + $0x160] sm:$0xf] %vm329, 0.0
      %373 = vst.msk [vmem:[#allocation2 + $0x168] sm:$0xff] %vm326, 0.0
      %374 = vst.msk [vmem:[#allocation2 + $0x170] sm:$0xff] %vm326, 0.0
      %375 = vst.msk [vmem:[#allocation2 + $0x178] sm:$0xf] %vm329, 0.0
      %376 = vst.msk [vmem:[#allocation2 + $0x180] sm:$0xff] %vm326, 0.0
      %377 = vst.msk [vmem:[#allocation2 + $0x188] sm:$0xff] %vm326, 0.0
      %378 = vst.msk [vmem:[#allocation2 + $0x190] sm:$0xf] %vm329, 0.0
      %379 = vst.msk [vmem:[#allocation2 + $0x198] sm:$0xff] %vm326, 0.0
      %380 = vst.msk [vmem:[#allocation2 + $0x1a0] sm:$0xff] %vm326, 0.0
      %381 = vst.msk [vmem:[#allocation2 + $0x1a8] sm:$0xf] %vm329, 0.0
      %382 = vst.msk [vmem:[#allocation2 + $0x1b0] sm:$0xff] %vm326, 0.0
      %383 = vst.msk [vmem:[#allocation2 + $0x1b8] sm:$0xff] %vm326, 0.0
      %384 = vst.msk [vmem:[#allocation2 + $0x1c0] sm:$0xf] %vm329, 0.0
      %385 = vst.msk [vmem:[#allocation2 + $0x1c8] sm:$0xff] %vm326, 0.0
      %386 = vst.msk [vmem:[#allocation2 + $0x1d0] sm:$0xff] %vm326, 0.0
      %387 = vst.msk [vmem:[#allocation2 + $0x1d8] sm:$0xf] %vm329, 0.0
      %v388 = vld [vmem:[%s315] sm:$0xff]
      %v389 = vld [vmem:[%s315 + $0x8] sm:$0xff]
      %v390 = vld [vmem:[%s315 + $0x10] sm:$0xff]
      %v391 = vld [vmem:[%s315 + $0x18] sm:$0xff]
      %v392 = vld [vmem:[%s315 + $0x20] sm:$0xff]
      %v393 = vld [vmem:[%s315 + $0x28] sm:$0xff]
      %v394 = vld [vmem:[%s315 + $0x30] sm:$0xff]
      %v395 = vld [vmem:[%s315 + $0x38] sm:$0xff]
      %v396 = vld [vmem:[%s315 + $0x40] sm:$0xff]
      %v397 = vld [vmem:[%s315 + $0x48] sm:$0xff]
      %v398 = vld [vmem:[%s315 + $0x50] sm:$0xff]
      %v399 = vld [vmem:[%s315 + $0x58] sm:$0xff]
      %v400 = vld [vmem:[%s315 + $0x60] sm:$0xff]
      %v401 = vld [vmem:[%s315 + $0x68] sm:$0xff]
      %v402 = vld [vmem:[%s315 + $0x70] sm:$0xff]
      %v403 = vld [vmem:[%s315 + $0x78] sm:$0xff]
      %v404 = vld [vmem:[%s315 + $0x80] sm:$0xff]
      %v405 = vld [vmem:[%s315 + $0x88] sm:$0xff]
      %v406 = vld [vmem:[%s315 + $0x90] sm:$0xff]
      %v407 = vld [vmem:[%s315 + $0x98] sm:$0xff]
      %v408 = vld [vmem:[%s315 + $0xa0] sm:$0xff]
      %v409 = vld [vmem:[%s315 + $0xa8] sm:$0xff]
      %v410 = vld [vmem:[%s315 + $0xb0] sm:$0xff]
      %v411 = vld [vmem:[%s315 + $0xb8] sm:$0xff]
      %v412 = vld [vmem:[%s315 + $0xc0] sm:$0xff]
      %v413 = vld [vmem:[%s315 + $0xc8] sm:$0xff]
      %v414 = vld [vmem:[%s315 + $0xd0] sm:$0xff]
      %v415 = vld [vmem:[%s315 + $0xd8] sm:$0xff]
      %v416 = vld [vmem:[%s315 + $0xe0] sm:$0xff]
      %v417 = vld [vmem:[%s315 + $0xe8] sm:$0xff]
      %v418 = vld [vmem:[%s315 + $0xf0] sm:$0xff]
      %v419 = vld [vmem:[%s315 + $0xf8] sm:$0xff]
      %s420 = scalar_lea.vmem [#allocation2], 48
      %vm421 = vcmask 31744
      %422 = vst.msk [vmem:[%s420 + $0x2] sm:$0xff] %vm421, %v388
      %423 = vst.msk [vmem:[%s420 + $0xa] sm:$0xff] %vm421, %v389
      %424 = vst.msk [vmem:[%s420 + $0x1a] sm:$0xff] %vm421, %v390
      %425 = vst.msk [vmem:[%s420 + $0x22] sm:$0xff] %vm421, %v391
      %426 = vst.msk [vmem:[%s420 + $0x32] sm:$0xff] %vm421, %v392
      %427 = vst.msk [vmem:[%s420 + $0x3a] sm:$0xff] %vm421, %v393
      %428 = vst.msk [vmem:[%s420 + $0x4a] sm:$0xff] %vm421, %v394
      %429 = vst.msk [vmem:[%s420 + $0x52] sm:$0xff] %vm421, %v395
      %430 = vst.msk [vmem:[%s420 + $0x62] sm:$0xff] %vm421, %v396
      %431 = vst.msk [vmem:[%s420 + $0x6a] sm:$0xff] %vm421, %v397
      %432 = vst.msk [vmem:[%s420 + $0x7a] sm:$0xff] %vm421, %v398
      %433 = vst.msk [vmem:[%s420 + $0x82] sm:$0xff] %vm421, %v399
      %434 = vst.msk [vmem:[%s420 + $0x92] sm:$0xff] %vm421, %v400
      %435 = vst.msk [vmem:[%s420 + $0x9a] sm:$0xff] %vm421, %v401
      %436 = vst.msk [vmem:[%s420 + $0xaa] sm:$0xff] %vm421, %v402
      %437 = vst.msk [vmem:[%s420 + $0xb2] sm:$0xff] %vm421, %v403
      %438 = vst.msk [vmem:[%s420 + $0xc2] sm:$0xff] %vm421, %v404
      %439 = vst.msk [vmem:[%s420 + $0xca] sm:$0xff] %vm421, %v405
      %440 = vst.msk [vmem:[%s420 + $0xda] sm:$0xff] %vm421, %v406
      %441 = vst.msk [vmem:[%s420 + $0xe2] sm:$0xff] %vm421, %v407
      %442 = vst.msk [vmem:[%s420 + $0xf2] sm:$0xff] %vm421, %v408
      %443 = vst.msk [vmem:[%s420 + $0xfa] sm:$0xff] %vm421, %v409
      %444 = vst.msk [vmem:[%s420 + $0x10a] sm:$0xff] %vm421, %v410
      %445 = vst.msk [vmem:[%s420 + $0x112] sm:$0xff] %vm421, %v411
      %446 = vst.msk [vmem:[%s420 + $0x122] sm:$0xff] %vm421, %v412
      %447 = vst.msk [vmem:[%s420 + $0x12a] sm:$0xff] %vm421, %v413
      %448 = vst.msk [vmem:[%s420 + $0x13a] sm:$0xff] %vm421, %v414
      %449 = vst.msk [vmem:[%s420 + $0x142] sm:$0xff] %vm421, %v415
      %450 = vst.msk [vmem:[%s420 + $0x152] sm:$0xff] %vm421, %v416
      %451 = vst.msk [vmem:[%s420 + $0x15a] sm:$0xff] %vm421, %v417
      %452 = vst.msk [vmem:[%s420 + $0x16a] sm:$0xff] %vm421, %v418
      %453 = vst.msk [vmem:[%s420 + $0x172] sm:$0xff] %vm421, %v419
      %v454 = vld [vmem:[%s320] sm:$0xff]
      %v455 = vld [vmem:[%s320 + $0x8] sm:$0xff]
      %v456 = vld [vmem:[%s320 + $0x10] sm:$0xff]
      %v457 = vld [vmem:[%s320 + $0x18] sm:$0xff]
      %v458 = vld [vmem:[%s320 + $0x20] sm:$0xff]
      %v459 = vld [vmem:[%s320 + $0x28] sm:$0xff]
      %v460 = vld [vmem:[%s320 + $0x30] sm:$0xff]
      %v461 = vld [vmem:[%s320 + $0x38] sm:$0xff]
      %v462 = vld [vmem:[%s320 + $0x40] sm:$0xff]
      %v463 = vld [vmem:[%s320 + $0x48] sm:$0xff]
      %v464 = vld [vmem:[%s320 + $0x50] sm:$0xff]
      %v465 = vld [vmem:[%s320 + $0x58] sm:$0xff]
      %v466 = vld [vmem:[%s320 + $0x60] sm:$0xff]
      %v467 = vld [vmem:[%s320 + $0x68] sm:$0xff]
      %v468 = vld [vmem:[%s320 + $0x70] sm:$0xff]
      %v469 = vld [vmem:[%s320 + $0x78] sm:$0xff]
      %v470 = vld [vmem:[%s320 + $0x80] sm:$0xff]
      %v471 = vld [vmem:[%s320 + $0x88] sm:$0xff]
      %v472 = vld [vmem:[%s320 + $0x90] sm:$0xff]
      %v473 = vld [vmem:[%s320 + $0x98] sm:$0xff]
      %v474 = vld [vmem:[%s320 + $0xa0] sm:$0xff]
      %v475 = vld [vmem:[%s320 + $0xa8] sm:$0xff]
      %v476 = vld [vmem:[%s320 + $0xb0] sm:$0xff]
      %v477 = vld [vmem:[%s320 + $0xb8] sm:$0xff]
      %v478 = vld [vmem:[%s320 + $0xc0] sm:$0xff]
      %v479 = vld [vmem:[%s320 + $0xc8] sm:$0xff]
      %v480 = vld [vmem:[%s320 + $0xd0] sm:$0xff]
      %v481 = vld [vmem:[%s320 + $0xd8] sm:$0xff]
      %v482 = vld [vmem:[%s320 + $0xe0] sm:$0xff]
      %v483 = vld [vmem:[%s320 + $0xe8] sm:$0xff]
      %v484 = vld [vmem:[%s320 + $0xf0] sm:$0xff]
      %v485 = vld [vmem:[%s320 + $0xf8] sm:$0xff]
      %518 = vrot.lane.b32.xlu0 %v454, 4
      %v519 = vpop.permute.xlu0 %518
      %520 = vrot.lane.b32.xlu0 %v455, 4
      %v521 = vpop.permute.xlu0 %520
      %522 = vrot.lane.b32.xlu0 %v456, 4
      %v523 = vpop.permute.xlu0 %522
      %524 = vrot.lane.b32.xlu0 %v457, 4
      %v525 = vpop.permute.xlu0 %524
      %526 = vrot.lane.b32.xlu0 %v458, 4
      %v527 = vpop.permute.xlu0 %526
      %528 = vrot.lane.b32.xlu0 %v459, 4
      %v529 = vpop.permute.xlu0 %528
      %530 = vrot.lane.b32.xlu0 %v460, 4
      %v531 = vpop.permute.xlu0 %530
      %532 = vrot.lane.b32.xlu0 %v461, 4
      %v533 = vpop.permute.xlu0 %532
      %534 = vrot.lane.b32.xlu0 %v462, 4
      %v535 = vpop.permute.xlu0 %534
      %536 = vrot.lane.b32.xlu0 %v463, 4
      %v537 = vpop.permute.xlu0 %536
      %538 = vrot.lane.b32.xlu0 %v464, 4
      %v539 = vpop.permute.xlu0 %538
      %540 = vrot.lane.b32.xlu0 %v465, 4
      %v541 = vpop.permute.xlu0 %540
      %542 = vrot.lane.b32.xlu0 %v466, 4
      %v543 = vpop.permute.xlu0 %542
      %544 = vrot.lane.b32.xlu0 %v467, 4
      %v545 = vpop.permute.xlu0 %544
      %546 = vrot.lane.b32.xlu0 %v468, 4
      %v547 = vpop.permute.xlu0 %546
      %548 = vrot.lane.b32.xlu0 %v469, 4
      %v549 = vpop.permute.xlu0 %548
      %550 = vrot.lane.b32.xlu0 %v470, 4
      %v551 = vpop.permute.xlu0 %550
      %552 = vrot.lane.b32.xlu0 %v471, 4
      %v553 = vpop.permute.xlu0 %552
      %554 = vrot.lane.b32.xlu0 %v472, 4
      %v555 = vpop.permute.xlu0 %554
      %556 = vrot.lane.b32.xlu0 %v473, 4
      %v557 = vpop.permute.xlu0 %556
      %558 = vrot.lane.b32.xlu0 %v474, 4
      %v559 = vpop.permute.xlu0 %558
      %560 = vrot.lane.b32.xlu0 %v475, 4
      %v561 = vpop.permute.xlu0 %560
      %562 = vrot.lane.b32.xlu0 %v476, 4
      %v563 = vpop.permute.xlu0 %562
      %564 = vrot.lane.b32.xlu0 %v477, 4
      %v565 = vpop.permute.xlu0 %564
      %566 = vrot.lane.b32.xlu0 %v478, 4
      %v567 = vpop.permute.xlu0 %566
      %568 = vrot.lane.b32.xlu0 %v479, 4
      %v569 = vpop.permute.xlu0 %568
      %570 = vrot.lane.b32.xlu0 %v480, 4
      %v571 = vpop.permute.xlu0 %570
      %572 = vrot.lane.b32.xlu0 %v481, 4
      %v573 = vpop.permute.xlu0 %572
      %574 = vrot.lane.b32.xlu0 %v482, 4
      %v575 = vpop.permute.xlu0 %574
      %576 = vrot.lane.b32.xlu0 %v483, 4
      %v577 = vpop.permute.xlu0 %576
      %578 = vrot.lane.b32.xlu0 %v484, 4
      %v579 = vpop.permute.xlu0 %578
      %580 = vrot.lane.b32.xlu0 %v485, 4
      %v581 = vpop.permute.xlu0 %580
      %vm614 = vcmask 64544
      %615 = vst.msk [vmem:[%s420 + $0x2] sm:$0xff] %vm614, %v519
      %616 = vst.msk [vmem:[%s420 + $0xa] sm:$0xff] %vm614, %v521
      %617 = vst.msk [vmem:[%s420 + $0x1a] sm:$0xff] %vm614, %v523
      %618 = vst.msk [vmem:[%s420 + $0x22] sm:$0xff] %vm614, %v525
      %619 = vst.msk [vmem:[%s420 + $0x32] sm:$0xff] %vm614, %v527
      %620 = vst.msk [vmem:[%s420 + $0x3a] sm:$0xff] %vm614, %v529
      %621 = vst.msk [vmem:[%s420 + $0x4a] sm:$0xff] %vm614, %v531
      %622 = vst.msk [vmem:[%s420 + $0x52] sm:$0xff] %vm614, %v533
      %623 = vst.msk [vmem:[%s420 + $0x62] sm:$0xff] %vm614, %v535
      %624 = vst.msk [vmem:[%s420 + $0x6a] sm:$0xff] %vm614, %v537
      %625 = vst.msk [vmem:[%s420 + $0x7a] sm:$0xff] %vm614, %v539
      %626 = vst.msk [vmem:[%s420 + $0x82] sm:$0xff] %vm614, %v541
      %627 = vst.msk [vmem:[%s420 + $0x92] sm:$0xff] %vm614, %v543
      %628 = vst.msk [vmem:[%s420 + $0x9a] sm:$0xff] %vm614, %v545
      %629 = vst.msk [vmem:[%s420 + $0xaa] sm:$0xff] %vm614, %v547
      %630 = vst.msk [vmem:[%s420 + $0xb2] sm:$0xff] %vm614, %v549
      %631 = vst.msk [vmem:[%s420 + $0xc2] sm:$0xff] %vm614, %v551
      %632 = vst.msk [vmem:[%s420 + $0xca] sm:$0xff] %vm614, %v553
      %633 = vst.msk [vmem:[%s420 + $0xda] sm:$0xff] %vm614, %v555
      %634 = vst.msk [vmem:[%s420 + $0xe2] sm:$0xff] %vm614, %v557
      %635 = vst.msk [vmem:[%s420 + $0xf2] sm:$0xff] %vm614, %v559
      %636 = vst.msk [vmem:[%s420 + $0xfa] sm:$0xff] %vm614, %v561
      %637 = vst.msk [vmem:[%s420 + $0x10a] sm:$0xff] %vm614, %v563
      %638 = vst.msk [vmem:[%s420 + $0x112] sm:$0xff] %vm614, %v565
      %639 = vst.msk [vmem:[%s420 + $0x122] sm:$0xff] %vm614, %v567
      %640 = vst.msk [vmem:[%s420 + $0x12a] sm:$0xff] %vm614, %v569
      %641 = vst.msk [vmem:[%s420 + $0x13a] sm:$0xff] %vm614, %v571
      %642 = vst.msk [vmem:[%s420 + $0x142] sm:$0xff] %vm614, %v573
      %643 = vst.msk [vmem:[%s420 + $0x152] sm:$0xff] %vm614, %v575
      %644 = vst.msk [vmem:[%s420 + $0x15a] sm:$0xff] %vm614, %v577
      %645 = vst.msk [vmem:[%s420 + $0x16a] sm:$0xff] %vm614, %v579
      %646 = vst.msk [vmem:[%s420 + $0x172] sm:$0xff] %vm614, %v581
      %v647 = vld [vmem:[#allocation2] sm:$0xff]
      %v648 = vld [vmem:[#allocation2 + $0x8] sm:$0xff]
      %v649 = vld [vmem:[#allocation2 + $0x18] sm:$0xff]
      %v650 = vld [vmem:[#allocation2 + $0x20] sm:$0xff]
      %v651 = vld [vmem:[#allocation2 + $0x30] sm:$0xff]
      %v652 = vld [vmem:[#allocation2 + $0x38] sm:$0xff]
      %v653 = vld [vmem:[#allocation2 + $0x48] sm:$0xff]
      %v654 = vld [vmem:[#allocation2 + $0x50] sm:$0xff]
      %v655 = vld [vmem:[#allocation2 + $0x60] sm:$0xff]
      %v656 = vld [vmem:[#allocation2 + $0x68] sm:$0xff]
      %v657 = vld [vmem:[#allocation2 + $0x78] sm:$0xff]
      %v658 = vld [vmem:[#allocation2 + $0x80] sm:$0xff]
      %v659 = vld [vmem:[#allocation2 + $0x90] sm:$0xff]
      %v660 = vld [vmem:[#allocation2 + $0x98] sm:$0xff]
      %v661 = vld [vmem:[#allocation2 + $0xa8] sm:$0xff]
      %v662 = vld [vmem:[#allocation2 + $0xb0] sm:$0xff]
      %v663 = vld [vmem:[#allocation2 + $0xc0] sm:$0xff]
      %v664 = vld [vmem:[#allocation2 + $0xc8] sm:$0xff]
      %v665 = vld [vmem:[#allocation2 + $0xd8] sm:$0xff]
      %v666 = vld [vmem:[#allocation2 + $0xe0] sm:$0xff]
      %v667 = vld [vmem:[#allocation2 + $0xf0] sm:$0xff]
      %v668 = vld [vmem:[#allocation2 + $0xf8] sm:$0xff]
      %v669 = vld [vmem:[#allocation2 + $0x108] sm:$0xff]
      %v670 = vld [vmem:[#allocation2 + $0x110] sm:$0xff]
      %v671 = vld [vmem:[#allocation2 + $0x120] sm:$0xff]
      %v672 = vld [vmem:[#allocation2 + $0x128] sm:$0xff]
      %v673 = vld [vmem:[#allocation2 + $0x138] sm:$0xff]
      %v674 = vld [vmem:[#allocation2 + $0x140] sm:$0xff]
      %v675 = vld [vmem:[#allocation2 + $0x150] sm:$0xff]
      %v676 = vld [vmem:[#allocation2 + $0x158] sm:$0xff]
      %v677 = vld [vmem:[#allocation2 + $0x168] sm:$0xff]
      %v678 = vld [vmem:[#allocation2 + $0x170] sm:$0xff]
      %679 = vst.msk [vmem:[#allocation4] sm:$0xff] %vm326, %v647
      %680 = vst.msk [vmem:[#allocation4 + $0x8] sm:$0xff] %vm326, %v648
      %681 = vst.msk [vmem:[#allocation4 + $0x10] sm:$0xff] %vm326, %v649
      %682 = vst.msk [vmem:[#allocation4 + $0x18] sm:$0xff] %vm326, %v650
      %683 = vst.msk [vmem:[#allocation4 + $0x20] sm:$0xff] %vm326, %v651
      %684 = vst.msk [vmem:[#allocation4 + $0x28] sm:$0xff] %vm326, %v652
      %685 = vst.msk [vmem:[#allocation4 + $0x30] sm:$0xff] %vm326, %v653
      %686 = vst.msk [vmem:[#allocation4 + $0x38] sm:$0xff] %vm326, %v654
      %687 = vst.msk [vmem:[#allocation4 + $0x40] sm:$0xff] %vm326, %v655
      %688 = vst.msk [vmem:[#allocation4 + $0x48] sm:$0xff] %vm326, %v656
      %689 = vst.msk [vmem:[#allocation4 + $0x50] sm:$0xff] %vm326, %v657
      %690 = vst.msk [vmem:[#allocation4 + $0x58] sm:$0xff] %vm326, %v658
      %691 = vst.msk [vmem:[#allocation4 + $0x60] sm:$0xff] %vm326, %v659
      %692 = vst.msk [vmem:[#allocation4 + $0x68] sm:$0xff] %vm326, %v660
      %693 = vst.msk [vmem:[#allocation4 + $0x70] sm:$0xff] %vm326, %v661
      %694 = vst.msk [vmem:[#allocation4 + $0x78] sm:$0xff] %vm326, %v662
      %695 = vst.msk [vmem:[#allocation4 + $0x80] sm:$0xff] %vm326, %v663
      %696 = vst.msk [vmem:[#allocation4 + $0x88] sm:$0xff] %vm326, %v664
      %697 = vst.msk [vmem:[#allocation4 + $0x90] sm:$0xff] %vm326, %v665
      %698 = vst.msk [vmem:[#allocation4 + $0x98] sm:$0xff] %vm326, %v666
      %699 = vst.msk [vmem:[#allocation4 + $0xa0] sm:$0xff] %vm326, %v667
      %700 = vst.msk [vmem:[#allocation4 + $0xa8] sm:$0xff] %vm326, %v668
      %701 = vst.msk [vmem:[#allocation4 + $0xb0] sm:$0xff] %vm326, %v669
      %702 = vst.msk [vmem:[#allocation4 + $0xb8] sm:$0xff] %vm326, %v670
      %703 = vst.msk [vmem:[#allocation4 + $0xc0] sm:$0xff] %vm326, %v671
      %704 = vst.msk [vmem:[#allocation4 + $0xc8] sm:$0xff] %vm326, %v672
      %705 = vst.msk [vmem:[#allocation4 + $0xd0] sm:$0xff] %vm326, %v673
      %706 = vst.msk [vmem:[#allocation4 + $0xd8] sm:$0xff] %vm326, %v674
      %707 = vst.msk [vmem:[#allocation4 + $0xe0] sm:$0xff] %vm326, %v675
      %708 = vst.msk [vmem:[#allocation4 + $0xe8] sm:$0xff] %vm326, %v676
      %709 = vst.msk [vmem:[#allocation4 + $0xf0] sm:$0xff] %vm326, %v677
      %710 = vst.msk [vmem:[#allocation4 + $0xf8] sm:$0xff] %vm326, %v678
      %v711 = vld [vmem:[#allocation2 + $0x2] sm:$0xff]
      %v712 = vld [vmem:[#allocation2 + $0xa] sm:$0xff]
      %v713 = vld [vmem:[#allocation2 + $0x1a] sm:$0xff]
      %v714 = vld [vmem:[#allocation2 + $0x22] sm:$0xff]
      %v715 = vld [vmem:[#allocation2 + $0x32] sm:$0xff]
      %v716 = vld [vmem:[#allocation2 + $0x3a] sm:$0xff]
      %v717 = vld [vmem:[#allocation2 + $0x4a] sm:$0xff]
      %v718 = vld [vmem:[#allocation2 + $0x52] sm:$0xff]
      %v719 = vld [vmem:[#allocation2 + $0x62] sm:$0xff]
      %v720 = vld [vmem:[#allocation2 + $0x6a] sm:$0xff]
      %v721 = vld [vmem:[#allocation2 + $0x7a] sm:$0xff]
      %v722 = vld [vmem:[#allocation2 + $0x82] sm:$0xff]
      %v723 = vld [vmem:[#allocation2 + $0x92] sm:$0xff]
      %v724 = vld [vmem:[#allocation2 + $0x9a] sm:$0xff]
      %v725 = vld [vmem:[#allocation2 + $0xaa] sm:$0xff]
      %v726 = vld [vmem:[#allocation2 + $0xb2] sm:$0xff]
      %v727 = vld [vmem:[#allocation2 + $0xc2] sm:$0xff]
      %v728 = vld [vmem:[#allocation2 + $0xca] sm:$0xff]
      %v729 = vld [vmem:[#allocation2 + $0xda] sm:$0xff]
      %v730 = vld [vmem:[#allocation2 + $0xe2] sm:$0xff]
      %v731 = vld [vmem:[#allocation2 + $0xf2] sm:$0xff]
      %v732 = vld [vmem:[#allocation2 + $0xfa] sm:$0xff]
      %v733 = vld [vmem:[#allocation2 + $0x10a] sm:$0xff]
      %v734 = vld [vmem:[#allocation2 + $0x112] sm:$0xff]
      %v735 = vld [vmem:[#allocation2 + $0x122] sm:$0xff]
      %v736 = vld [vmem:[#allocation2 + $0x12a] sm:$0xff]
      %v737 = vld [vmem:[#allocation2 + $0x13a] sm:$0xff]
      %v738 = vld [vmem:[#allocation2 + $0x142] sm:$0xff]
      %v739 = vld [vmem:[#allocation2 + $0x152] sm:$0xff]
      %v740 = vld [vmem:[#allocation2 + $0x15a] sm:$0xff]
      %v741 = vld [vmem:[#allocation2 + $0x16a] sm:$0xff]
      %v742 = vld [vmem:[#allocation2 + $0x172] sm:$0xff]
      %775 = vrot.lane.b32.xlu0 %v711, 8
      %v776 = vpop.permute.xlu0 %775
      %777 = vrot.lane.b32.xlu0 %v712, 8
      %v778 = vpop.permute.xlu0 %777
      %779 = vrot.lane.b32.xlu0 %v713, 8
      %v780 = vpop.permute.xlu0 %779
      %781 = vrot.lane.b32.xlu0 %v714, 8
      %v782 = vpop.permute.xlu0 %781
      %783 = vrot.lane.b32.xlu0 %v715, 8
      %v784 = vpop.permute.xlu0 %783
      %785 = vrot.lane.b32.xlu0 %v716, 8
      %v786 = vpop.permute.xlu0 %785
      %787 = vrot.lane.b32.xlu0 %v717, 8
      %v788 = vpop.permute.xlu0 %787
      %789 = vrot.lane.b32.xlu0 %v718, 8
      %v790 = vpop.permute.xlu0 %789
      %791 = vrot.lane.b32.xlu0 %v719, 8
      %v792 = vpop.permute.xlu0 %791
      %793 = vrot.lane.b32.xlu0 %v720, 8
      %v794 = vpop.permute.xlu0 %793
      %795 = vrot.lane.b32.xlu0 %v721, 8
      %v796 = vpop.permute.xlu0 %795
      %797 = vrot.lane.b32.xlu0 %v722, 8
      %v798 = vpop.permute.xlu0 %797
      %799 = vrot.lane.b32.xlu0 %v723, 8
      %v800 = vpop.permute.xlu0 %799
      %801 = vrot.lane.b32.xlu0 %v724, 8
      %v802 = vpop.permute.xlu0 %801
      %803 = vrot.lane.b32.xlu0 %v725, 8
      %v804 = vpop.permute.xlu0 %803
      %805 = vrot.lane.b32.xlu0 %v726, 8
      %v806 = vpop.permute.xlu0 %805
      %807 = vrot.lane.b32.xlu0 %v727, 8
      %v808 = vpop.permute.xlu0 %807
      %809 = vrot.lane.b32.xlu0 %v728, 8
      %v810 = vpop.permute.xlu0 %809
      %811 = vrot.lane.b32.xlu0 %v729, 8
      %v812 = vpop.permute.xlu0 %811
      %813 = vrot.lane.b32.xlu0 %v730, 8
      %v814 = vpop.permute.xlu0 %813
      %815 = vrot.lane.b32.xlu0 %v731, 8
      %v816 = vpop.permute.xlu0 %815
      %817 = vrot.lane.b32.xlu0 %v732, 8
      %v818 = vpop.permute.xlu0 %817
      %819 = vrot.lane.b32.xlu0 %v733, 8
      %v820 = vpop.permute.xlu0 %819
      %821 = vrot.lane.b32.xlu0 %v734, 8
      %v822 = vpop.permute.xlu0 %821
      %823 = vrot.lane.b32.xlu0 %v735, 8
      %v824 = vpop.permute.xlu0 %823
      %825 = vrot.lane.b32.xlu0 %v736, 8
      %v826 = vpop.permute.xlu0 %825
      %827 = vrot.lane.b32.xlu0 %v737, 8
      %v828 = vpop.permute.xlu0 %827
      %829 = vrot.lane.b32.xlu0 %v738, 8
      %v830 = vpop.permute.xlu0 %829
      %831 = vrot.lane.b32.xlu0 %v739, 8
      %v832 = vpop.permute.xlu0 %831
      %833 = vrot.lane.b32.xlu0 %v740, 8
      %v834 = vpop.permute.xlu0 %833
      %835 = vrot.lane.b32.xlu0 %v741, 8
      %v836 = vpop.permute.xlu0 %835
      %837 = vrot.lane.b32.xlu0 %v742, 8
      %v838 = vpop.permute.xlu0 %837
      %vm871 = vcmask 130112
      %872 = vst.msk [vmem:[#allocation4] sm:$0xff] %vm871, %v776
      %873 = vst.msk [vmem:[#allocation4 + $0x8] sm:$0xff] %vm871, %v778
      %874 = vst.msk [vmem:[#allocation4 + $0x10] sm:$0xff] %vm871, %v780
      %875 = vst.msk [vmem:[#allocation4 + $0x18] sm:$0xff] %vm871, %v782
      %876 = vst.msk [vmem:[#allocation4 + $0x20] sm:$0xff] %vm871, %v784
      %877 = vst.msk [vmem:[#allocation4 + $0x28] sm:$0xff] %vm871, %v786
      %878 = vst.msk [vmem:[#allocation4 + $0x30] sm:$0xff] %vm871, %v788
      %879 = vst.msk [vmem:[#allocation4 + $0x38] sm:$0xff] %vm871, %v790
      %880 = vst.msk [vmem:[#allocation4 + $0x40] sm:$0xff] %vm871, %v792
      %881 = vst.msk [vmem:[#allocation4 + $0x48] sm:$0xff] %vm871, %v794
      %882 = vst.msk [vmem:[#allocation4 + $0x50] sm:$0xff] %vm871, %v796
      %883 = vst.msk [vmem:[#allocation4 + $0x58] sm:$0xff] %vm871, %v798
      %884 = vst.msk [vmem:[#allocation4 + $0x60] sm:$0xff] %vm871, %v800
      %885 = vst.msk [vmem:[#allocation4 + $0x68] sm:$0xff] %vm871, %v802
      %886 = vst.msk [vmem:[#allocation4 + $0x70] sm:$0xff] %vm871, %v804
      %887 = vst.msk [vmem:[#allocation4 + $0x78] sm:$0xff] %vm871, %v806
      %888 = vst.msk [vmem:[#allocation4 + $0x80] sm:$0xff] %vm871, %v808
      %889 = vst.msk [vmem:[#allocation4 + $0x88] sm:$0xff] %vm871, %v810
      %890 = vst.msk [vmem:[#allocation4 + $0x90] sm:$0xff] %vm871, %v812
      %891 = vst.msk [vmem:[#allocation4 + $0x98] sm:$0xff] %vm871, %v814
      %892 = vst.msk [vmem:[#allocation4 + $0xa0] sm:$0xff] %vm871, %v816
      %893 = vst.msk [vmem:[#allocation4 + $0xa8] sm:$0xff] %vm871, %v818
      %894 = vst.msk [vmem:[#allocation4 + $0xb0] sm:$0xff] %vm871, %v820
      %895 = vst.msk [vmem:[#allocation4 + $0xb8] sm:$0xff] %vm871, %v822
      %896 = vst.msk [vmem:[#allocation4 + $0xc0] sm:$0xff] %vm871, %v824
      %897 = vst.msk [vmem:[#allocation4 + $0xc8] sm:$0xff] %vm871, %v826
      %898 = vst.msk [vmem:[#allocation4 + $0xd0] sm:$0xff] %vm871, %v828
      %899 = vst.msk [vmem:[#allocation4 + $0xd8] sm:$0xff] %vm871, %v830
      %900 = vst.msk [vmem:[#allocation4 + $0xe0] sm:$0xff] %vm871, %v832
      %901 = vst.msk [vmem:[#allocation4 + $0xe8] sm:$0xff] %vm871, %v834
      %902 = vst.msk [vmem:[#allocation4 + $0xf0] sm:$0xff] %vm871, %v836
      %903 = vst.msk [vmem:[#allocation4 + $0xf8] sm:$0xff] %vm871, %v838
      %v904 = vld [vmem:[#allocation2 + $0x4] sm:$0xff]
      %v905 = vld [vmem:[#allocation2 + $0xc] sm:$0xff]
      %v906 = vld [vmem:[#allocation2 + $0x1c] sm:$0xff]
      %v907 = vld [vmem:[#allocation2 + $0x24] sm:$0xff]
      %v908 = vld [vmem:[#allocation2 + $0x34] sm:$0xff]
      %v909 = vld [vmem:[#allocation2 + $0x3c] sm:$0xff]
      %v910 = vld [vmem:[#allocation2 + $0x4c] sm:$0xff]
      %v911 = vld [vmem:[#allocation2 + $0x54] sm:$0xff]
      %v912 = vld [vmem:[#allocation2 + $0x64] sm:$0xff]
      %v913 = vld [vmem:[#allocation2 + $0x6c] sm:$0xff]
      %v914 = vld [vmem:[#allocation2 + $0x7c] sm:$0xff]
      %v915 = vld [vmem:[#allocation2 + $0x84] sm:$0xff]
      %v916 = vld [vmem:[#allocation2 + $0x94] sm:$0xff]
      %v917 = vld [vmem:[#allocation2 + $0x9c] sm:$0xff]
      %v918 = vld [vmem:[#allocation2 + $0xac] sm:$0xff]
      %v919 = vld [vmem:[#allocation2 + $0xb4] sm:$0xff]
      %v920 = vld [vmem:[#allocation2 + $0xc4] sm:$0xff]
      %v921 = vld [vmem:[#allocation2 + $0xcc] sm:$0xff]
      %v922 = vld [vmem:[#allocation2 + $0xdc] sm:$0xff]
      %v923 = vld [vmem:[#allocation2 + $0xe4] sm:$0xff]
      %v924 = vld [vmem:[#allocation2 + $0xf4] sm:$0xff]
      %v925 = vld [vmem:[#allocation2 + $0xfc] sm:$0xff]
      %v926 = vld [vmem:[#allocation2 + $0x10c] sm:$0xff]
      %v927 = vld [vmem:[#allocation2 + $0x114] sm:$0xff]
      %v928 = vld [vmem:[#allocation2 + $0x124] sm:$0xff]
      %v929 = vld [vmem:[#allocation2 + $0x12c] sm:$0xff]
      %v930 = vld [vmem:[#allocation2 + $0x13c] sm:$0xff]
      %v931 = vld [vmem:[#allocation2 + $0x144] sm:$0xff]
      %v932 = vld [vmem:[#allocation2 + $0x154] sm:$0xff]
      %v933 = vld [vmem:[#allocation2 + $0x15c] sm:$0xff]
      %v934 = vld [vmem:[#allocation2 + $0x16c] sm:$0xff]
      %v935 = vld [vmem:[#allocation2 + $0x174] sm:$0xff]
      %968 = vrot.lane.b32.xlu0 %v904, 16
      %v969 = vpop.permute.xlu0 %968
      %970 = vrot.lane.b32.xlu0 %v905, 16
      %v971 = vpop.permute.xlu0 %970
      %972 = vrot.lane.b32.xlu0 %v906, 16
      %v973 = vpop.permute.xlu0 %972
      %974 = vrot.lane.b32.xlu0 %v907, 16
      %v975 = vpop.permute.xlu0 %974
      %976 = vrot.lane.b32.xlu0 %v908, 16
      %v977 = vpop.permute.xlu0 %976
      %978 = vrot.lane.b32.xlu0 %v909, 16
      %v979 = vpop.permute.xlu0 %978
      %980 = vrot.lane.b32.xlu0 %v910, 16
      %v981 = vpop.permute.xlu0 %980
      %982 = vrot.lane.b32.xlu0 %v911, 16
      %v983 = vpop.permute.xlu0 %982
      %984 = vrot.lane.b32.xlu0 %v912, 16
      %v985 = vpop.permute.xlu0 %984
      %986 = vrot.lane.b32.xlu0 %v913, 16
      %v987 = vpop.permute.xlu0 %986
      %988 = vrot.lane.b32.xlu0 %v914, 16
      %v989 = vpop.permute.xlu0 %988
      %990 = vrot.lane.b32.xlu0 %v915, 16
      %v991 = vpop.permute.xlu0 %990
      %992 = vrot.lane.b32.xlu0 %v916, 16
      %v993 = vpop.permute.xlu0 %992
      %994 = vrot.lane.b32.xlu0 %v917, 16
      %v995 = vpop.permute.xlu0 %994
      %996 = vrot.lane.b32.xlu0 %v918, 16
      %v997 = vpop.permute.xlu0 %996
      %998 = vrot.lane.b32.xlu0 %v919, 16
      %v999 = vpop.permute.xlu0 %998
      %1000 = vrot.lane.b32.xlu0 %v920, 16
      %v1001 = vpop.permute.xlu0 %1000
      %1002 = vrot.lane.b32.xlu0 %v921, 16
      %v1003 = vpop.permute.xlu0 %1002
      %1004 = vrot.lane.b32.xlu0 %v922, 16
      %v1005 = vpop.permute.xlu0 %1004
      %1006 = vrot.lane.b32.xlu0 %v923, 16
      %v1007 = vpop.permute.xlu0 %1006
      %1008 = vrot.lane.b32.xlu0 %v924, 16
      %v1009 = vpop.permute.xlu0 %1008
      %1010 = vrot.lane.b32.xlu0 %v925, 16
      %v1011 = vpop.permute.xlu0 %1010
      %1012 = vrot.lane.b32.xlu0 %v926, 16
      %v1013 = vpop.permute.xlu0 %1012
      %1014 = vrot.lane.b32.xlu0 %v927, 16
      %v1015 = vpop.permute.xlu0 %1014
      %1016 = vrot.lane.b32.xlu0 %v928, 16
      %v1017 = vpop.permute.xlu0 %1016
      %1018 = vrot.lane.b32.xlu0 %v929, 16
      %v1019 = vpop.permute.xlu0 %1018
      %1020 = vrot.lane.b32.xlu0 %v930, 16
      %v1021 = vpop.permute.xlu0 %1020
      %1022 = vrot.lane.b32.xlu0 %v931, 16
      %v1023 = vpop.permute.xlu0 %1022
      %1024 = vrot.lane.b32.xlu0 %v932, 16
      %v1025 = vpop.permute.xlu0 %1024
      %1026 = vrot.lane.b32.xlu0 %v933, 16
      %v1027 = vpop.permute.xlu0 %1026
      %1028 = vrot.lane.b32.xlu0 %v934, 16
      %v1029 = vpop.permute.xlu0 %1028
      %1030 = vrot.lane.b32.xlu0 %v935, 16
      %v1031 = vpop.permute.xlu0 %1030
      %vm1064 = vcmask 195712
      %1065 = vst.msk [vmem:[#allocation4] sm:$0xff] %vm1064, %v969
      %1066 = vst.msk [vmem:[#allocation4 + $0x8] sm:$0xff] %vm1064, %v971
      %1067 = vst.msk [vmem:[#allocation4 + $0x10] sm:$0xff] %vm1064, %v973
      %1068 = vst.msk [vmem:[#allocation4 + $0x18] sm:$0xff] %vm1064, %v975
      %1069 = vst.msk [vmem:[#allocation4 + $0x20] sm:$0xff] %vm1064, %v977
      %1070 = vst.msk [vmem:[#allocation4 + $0x28] sm:$0xff] %vm1064, %v979
      %1071 = vst.msk [vmem:[#allocation4 + $0x30] sm:$0xff] %vm1064, %v981
      %1072 = vst.msk [vmem:[#allocation4 + $0x38] sm:$0xff] %vm1064, %v983
      %1073 = vst.msk [vmem:[#allocation4 + $0x40] sm:$0xff] %vm1064, %v985
      %1074 = vst.msk [vmem:[#allocation4 + $0x48] sm:$0xff] %vm1064, %v987
      %1075 = vst.msk [vmem:[#allocation4 + $0x50] sm:$0xff] %vm1064, %v989
      %1076 = vst.msk [vmem:[#allocation4 + $0x58] sm:$0xff] %vm1064, %v991
      %1077 = vst.msk [vmem:[#allocation4 + $0x60] sm:$0xff] %vm1064, %v993
      %1078 = vst.msk [vmem:[#allocation4 + $0x68] sm:$0xff] %vm1064, %v995
      %1079 = vst.msk [vmem:[#allocation4 + $0x70] sm:$0xff] %vm1064, %v997
      %1080 = vst.msk [vmem:[#allocation4 + $0x78] sm:$0xff] %vm1064, %v999
      %1081 = vst.msk [vmem:[#allocation4 + $0x80] sm:$0xff] %vm1064, %v1001
      %1082 = vst.msk [vmem:[#allocation4 + $0x88] sm:$0xff] %vm1064, %v1003
      %1083 = vst.msk [vmem:[#allocation4 + $0x90] sm:$0xff] %vm1064, %v1005
      %1084 = vst.msk [vmem:[#allocation4 + $0x98] sm:$0xff] %vm1064, %v1007
      %1085 = vst.msk [vmem:[#allocation4 + $0xa0] sm:$0xff] %vm1064, %v1009
      %1086 = vst.msk [vmem:[#allocation4 + $0xa8] sm:$0xff] %vm1064, %v1011
      %1087 = vst.msk [vmem:[#allocation4 + $0xb0] sm:$0xff] %vm1064, %v1013
      %1088 = vst.msk [vmem:[#allocation4 + $0xb8] sm:$0xff] %vm1064, %v1015
      %1089 = vst.msk [vmem:[#allocation4 + $0xc0] sm:$0xff] %vm1064, %v1017
      %1090 = vst.msk [vmem:[#allocation4 + $0xc8] sm:$0xff] %vm1064, %v1019
      %1091 = vst.msk [vmem:[#allocation4 + $0xd0] sm:$0xff] %vm1064, %v1021
      %1092 = vst.msk [vmem:[#allocation4 + $0xd8] sm:$0xff] %vm1064, %v1023
      %1093 = vst.msk [vmem:[#allocation4 + $0xe0] sm:$0xff] %vm1064, %v1025
      %1094 = vst.msk [vmem:[#allocation4 + $0xe8] sm:$0xff] %vm1064, %v1027
      %1095 = vst.msk [vmem:[#allocation4 + $0xf0] sm:$0xff] %vm1064, %v1029
      %1096 = vst.msk [vmem:[#allocation4 + $0xf8] sm:$0xff] %vm1064, %v1031
      %v1097 = vld [vmem:[%s420] sm:$0xff]
      %v1098 = vld [vmem:[%s420 + $0x8] sm:$0xff]
      %v1099 = vld [vmem:[%s420 + $0x18] sm:$0xff]
      %v1100 = vld [vmem:[%s420 + $0x20] sm:$0xff]
      %v1101 = vld [vmem:[%s420 + $0x30] sm:$0xff]
      %v1102 = vld [vmem:[%s420 + $0x38] sm:$0xff]
      %v1103 = vld [vmem:[%s420 + $0x48] sm:$0xff]
      %v1104 = vld [vmem:[%s420 + $0x50] sm:$0xff]
      %v1105 = vld [vmem:[%s420 + $0x60] sm:$0xff]
      %v1106 = vld [vmem:[%s420 + $0x68] sm:$0xff]
      %v1107 = vld [vmem:[%s420 + $0x78] sm:$0xff]
      %v1108 = vld [vmem:[%s420 + $0x80] sm:$0xff]
      %v1109 = vld [vmem:[%s420 + $0x90] sm:$0xff]
      %v1110 = vld [vmem:[%s420 + $0x98] sm:$0xff]
      %v1111 = vld [vmem:[%s420 + $0xa8] sm:$0xff]
      %v1112 = vld [vmem:[%s420 + $0xb0] sm:$0xff]
      %v1113 = vld [vmem:[%s420 + $0xc0] sm:$0xff]
      %v1114 = vld [vmem:[%s420 + $0xc8] sm:$0xff]
      %v1115 = vld [vmem:[%s420 + $0xd8] sm:$0xff]
      %v1116 = vld [vmem:[%s420 + $0xe0] sm:$0xff]
      %v1117 = vld [vmem:[%s420 + $0xf0] sm:$0xff]
      %v1118 = vld [vmem:[%s420 + $0xf8] sm:$0xff]
      %v1119 = vld [vmem:[%s420 + $0x108] sm:$0xff]
      %v1120 = vld [vmem:[%s420 + $0x110] sm:$0xff]
      %v1121 = vld [vmem:[%s420 + $0x120] sm:$0xff]
      %v1122 = vld [vmem:[%s420 + $0x128] sm:$0xff]
      %v1123 = vld [vmem:[%s420 + $0x138] sm:$0xff]
      %v1124 = vld [vmem:[%s420 + $0x140] sm:$0xff]
      %v1125 = vld [vmem:[%s420 + $0x150] sm:$0xff]
      %v1126 = vld [vmem:[%s420 + $0x158] sm:$0xff]
      %v1127 = vld [vmem:[%s420 + $0x168] sm:$0xff]
      %v1128 = vld [vmem:[%s420 + $0x170] sm:$0xff]
      %1161 = vrot.lane.b32.xlu0 %v1097, 24
      %v1162 = vpop.permute.xlu0 %1161
      %1163 = vrot.lane.b32.xlu0 %v1098, 24
      %v1164 = vpop.permute.xlu0 %1163
      %1165 = vrot.lane.b32.xlu0 %v1099, 24
      %v1166 = vpop.permute.xlu0 %1165
      %1167 = vrot.lane.b32.xlu0 %v1100, 24
      %v1168 = vpop.permute.xlu0 %1167
      %1169 = vrot.lane.b32.xlu0 %v1101, 24
      %v1170 = vpop.permute.xlu0 %1169
      %1171 = vrot.lane.b32.xlu0 %v1102, 24
      %v1172 = vpop.permute.xlu0 %1171
      %1173 = vrot.lane.b32.xlu0 %v1103, 24
      %v1174 = vpop.permute.xlu0 %1173
      %1175 = vrot.lane.b32.xlu0 %v1104, 24
      %v1176 = vpop.permute.xlu0 %1175
      %1177 = vrot.lane.b32.xlu0 %v1105, 24
      %v1178 = vpop.permute.xlu0 %1177
      %1179 = vrot.lane.b32.xlu0 %v1106, 24
      %v1180 = vpop.permute.xlu0 %1179
      %1181 = vrot.lane.b32.xlu0 %v1107, 24
      %v1182 = vpop.permute.xlu0 %1181
      %1183 = vrot.lane.b32.xlu0 %v1108, 24
      %v1184 = vpop.permute.xlu0 %1183
      %1185 = vrot.lane.b32.xlu0 %v1109, 24
      %v1186 = vpop.permute.xlu0 %1185
      %1187 = vrot.lane.b32.xlu0 %v1110, 24
      %v1188 = vpop.permute.xlu0 %1187
      %1189 = vrot.lane.b32.xlu0 %v1111, 24
      %v1190 = vpop.permute.xlu0 %1189
      %1191 = vrot.lane.b32.xlu0 %v1112, 24
      %v1192 = vpop.permute.xlu0 %1191
      %1193 = vrot.lane.b32.xlu0 %v1113, 24
      %v1194 = vpop.permute.xlu0 %1193
      %1195 = vrot.lane.b32.xlu0 %v1114, 24
      %v1196 = vpop.permute.xlu0 %1195
      %1197 = vrot.lane.b32.xlu0 %v1115, 24
      %v1198 = vpop.permute.xlu0 %1197
      %1199 = vrot.lane.b32.xlu0 %v1116, 24
      %v1200 = vpop.permute.xlu0 %1199
      %1201 = vrot.lane.b32.xlu0 %v1117, 24
      %v1202 = vpop.permute.xlu0 %1201
      %1203 = vrot.lane.b32.xlu0 %v1118, 24
      %v1204 = vpop.permute.xlu0 %1203
      %1205 = vrot.lane.b32.xlu0 %v1119, 24
      %v1206 = vpop.permute.xlu0 %1205
      %1207 = vrot.lane.b32.xlu0 %v1120, 24
      %v1208 = vpop.permute.xlu0 %1207
      %1209 = vrot.lane.b32.xlu0 %v1121, 24
      %v1210 = vpop.permute.xlu0 %1209
      %1211 = vrot.lane.b32.xlu0 %v1122, 24
      %v1212 = vpop.permute.xlu0 %1211
      %1213 = vrot.lane.b32.xlu0 %v1123, 24
      %v1214 = vpop.permute.xlu0 %1213
      %1215 = vrot.lane.b32.xlu0 %v1124, 24
      %v1216 = vpop.permute.xlu0 %1215
      %1217 = vrot.lane.b32.xlu0 %v1125, 24
      %v1218 = vpop.permute.xlu0 %1217
      %1219 = vrot.lane.b32.xlu0 %v1126, 24
      %v1220 = vpop.permute.xlu0 %1219
      %1221 = vrot.lane.b32.xlu0 %v1127, 24
      %v1222 = vpop.permute.xlu0 %1221
      %1223 = vrot.lane.b32.xlu0 %v1128, 24
      %v1224 = vpop.permute.xlu0 %1223
      %vm1257 = vcmask 261312
      %1258 = vst.msk [vmem:[#allocation4] sm:$0xff] %vm1257, %v1162
      %1259 = vst.msk [vmem:[#allocation4 + $0x8] sm:$0xff] %vm1257, %v1164
      %1260 = vst.msk [vmem:[#allocation4 + $0x10] sm:$0xff] %vm1257, %v1166
      %1261 = vst.msk [vmem:[#allocation4 + $0x18] sm:$0xff] %vm1257, %v1168
      %1262 = vst.msk [vmem:[#allocation4 + $0x20] sm:$0xff] %vm1257, %v1170
      %1263 = vst.msk [vmem:[#allocation4 + $0x28] sm:$0xff] %vm1257, %v1172
      %1264 = vst.msk [vmem:[#allocation4 + $0x30] sm:$0xff] %vm1257, %v1174
      %1265 = vst.msk [vmem:[#allocation4 + $0x38] sm:$0xff] %vm1257, %v1176
      %1266 = vst.msk [vmem:[#allocation4 + $0x40] sm:$0xff] %vm1257, %v1178
      %1267 = vst.msk [vmem:[#allocation4 + $0x48] sm:$0xff] %vm1257, %v1180
      %1268 = vst.msk [vmem:[#allocation4 + $0x50] sm:$0xff] %vm1257, %v1182
      %1269 = vst.msk [vmem:[#allocation4 + $0x58] sm:$0xff] %vm1257, %v1184
      %1270 = vst.msk [vmem:[#allocation4 + $0x60] sm:$0xff] %vm1257, %v1186
      %1271 = vst.msk [vmem:[#allocation4 + $0x68] sm:$0xff] %vm1257, %v1188
      %1272 = vst.msk [vmem:[#allocation4 + $0x70] sm:$0xff] %vm1257, %v1190
      %1273 = vst.msk [vmem:[#allocation4 + $0x78] sm:$0xff] %vm1257, %v1192
      %1274 = vst.msk [vmem:[#allocation4 + $0x80] sm:$0xff] %vm1257, %v1194
      %1275 = vst.msk [vmem:[#allocation4 + $0x88] sm:$0xff] %vm1257, %v1196
      %1276 = vst.msk [vmem:[#allocation4 + $0x90] sm:$0xff] %vm1257, %v1198
      %1277 = vst.msk [vmem:[#allocation4 + $0x98] sm:$0xff] %vm1257, %v1200
      %1278 = vst.msk [vmem:[#allocation4 + $0xa0] sm:$0xff] %vm1257, %v1202
      %1279 = vst.msk [vmem:[#allocation4 + $0xa8] sm:$0xff] %vm1257, %v1204
      %1280 = vst.msk [vmem:[#allocation4 + $0xb0] sm:$0xff] %vm1257, %v1206
      %1281 = vst.msk [vmem:[#allocation4 + $0xb8] sm:$0xff] %vm1257, %v1208
      %1282 = vst.msk [vmem:[#allocation4 + $0xc0] sm:$0xff] %vm1257, %v1210
      %1283 = vst.msk [vmem:[#allocation4 + $0xc8] sm:$0xff] %vm1257, %v1212
      %1284 = vst.msk [vmem:[#allocation4 + $0xd0] sm:$0xff] %vm1257, %v1214
      %1285 = vst.msk [vmem:[#allocation4 + $0xd8] sm:$0xff] %vm1257, %v1216
      %1286 = vst.msk [vmem:[#allocation4 + $0xe0] sm:$0xff] %vm1257, %v1218
      %1287 = vst.msk [vmem:[#allocation4 + $0xe8] sm:$0xff] %vm1257, %v1220
      %1288 = vst.msk [vmem:[#allocation4 + $0xf0] sm:$0xff] %vm1257, %v1222
      %1289 = vst.msk [vmem:[#allocation4 + $0xf8] sm:$0xff] %vm1257, %v1224
      %v1290 = vld [vmem:[%s420 + $0x2] sm:$0xff]
      %v1291 = vld [vmem:[%s420 + $0xa] sm:$0xff]
      %v1292 = vld [vmem:[%s420 + $0x1a] sm:$0xff]
      %v1293 = vld [vmem:[%s420 + $0x22] sm:$0xff]
      %v1294 = vld [vmem:[%s420 + $0x32] sm:$0xff]
      %v1295 = vld [vmem:[%s420 + $0x3a] sm:$0xff]
      %v1296 = vld [vmem:[%s420 + $0x4a] sm:$0xff]
      %v1297 = vld [vmem:[%s420 + $0x52] sm:$0xff]
      %v1298 = vld [vmem:[%s420 + $0x62] sm:$0xff]
      %v1299 = vld [vmem:[%s420 + $0x6a] sm:$0xff]
      %v1300 = vld [vmem:[%s420 + $0x7a] sm:$0xff]
      %v1301 = vld [vmem:[%s420 + $0x82] sm:$0xff]
      %v1302 = vld [vmem:[%s420 + $0x92] sm:$0xff]
      %v1303 = vld [vmem:[%s420 + $0x9a] sm:$0xff]
      %v1304 = vld [vmem:[%s420 + $0xaa] sm:$0xff]
      %v1305 = vld [vmem:[%s420 + $0xb2] sm:$0xff]
      %v1306 = vld [vmem:[%s420 + $0xc2] sm:$0xff]
      %v1307 = vld [vmem:[%s420 + $0xca] sm:$0xff]
      %v1308 = vld [vmem:[%s420 + $0xda] sm:$0xff]
      %v1309 = vld [vmem:[%s420 + $0xe2] sm:$0xff]
      %v1310 = vld [vmem:[%s420 + $0xf2] sm:$0xff]
      %v1311 = vld [vmem:[%s420 + $0xfa] sm:$0xff]
      %v1312 = vld [vmem:[%s420 + $0x10a] sm:$0xff]
      %v1313 = vld [vmem:[%s420 + $0x112] sm:$0xff]
      %v1314 = vld [vmem:[%s420 + $0x122] sm:$0xff]
      %v1315 = vld [vmem:[%s420 + $0x12a] sm:$0xff]
      %v1316 = vld [vmem:[%s420 + $0x13a] sm:$0xff]
      %v1317 = vld [vmem:[%s420 + $0x142] sm:$0xff]
      %v1318 = vld [vmem:[%s420 + $0x152] sm:$0xff]
      %v1319 = vld [vmem:[%s420 + $0x15a] sm:$0xff]
      %v1320 = vld [vmem:[%s420 + $0x16a] sm:$0xff]
      %v1321 = vld [vmem:[%s420 + $0x172] sm:$0xff]
      %1354 = vrot.lane.b32.xlu0 %v1290, 32
      %v1355 = vpop.permute.xlu0 %1354
      %1356 = vrot.lane.b32.xlu0 %v1291, 32
      %v1357 = vpop.permute.xlu0 %1356
      %1358 = vrot.lane.b32.xlu0 %v1292, 32
      %v1359 = vpop.permute.xlu0 %1358
      %1360 = vrot.lane.b32.xlu0 %v1293, 32
      %v1361 = vpop.permute.xlu0 %1360
      %1362 = vrot.lane.b32.xlu0 %v1294, 32
      %v1363 = vpop.permute.xlu0 %1362
      %1364 = vrot.lane.b32.xlu0 %v1295, 32
      %v1365 = vpop.permute.xlu0 %1364
      %1366 = vrot.lane.b32.xlu0 %v1296, 32
      %v1367 = vpop.permute.xlu0 %1366
      %1368 = vrot.lane.b32.xlu0 %v1297, 32
      %v1369 = vpop.permute.xlu0 %1368
      %1370 = vrot.lane.b32.xlu0 %v1298, 32
      %v1371 = vpop.permute.xlu0 %1370
      %1372 = vrot.lane.b32.xlu0 %v1299, 32
      %v1373 = vpop.permute.xlu0 %1372
      %1374 = vrot.lane.b32.xlu0 %v1300, 32
      %v1375 = vpop.permute.xlu0 %1374
      %1376 = vrot.lane.b32.xlu0 %v1301, 32
      %v1377 = vpop.permute.xlu0 %1376
      %1378 = vrot.lane.b32.xlu0 %v1302, 32
      %v1379 = vpop.permute.xlu0 %1378
      %1380 = vrot.lane.b32.xlu0 %v1303, 32
      %v1381 = vpop.permute.xlu0 %1380
      %1382 = vrot.lane.b32.xlu0 %v1304, 32
      %v1383 = vpop.permute.xlu0 %1382
      %1384 = vrot.lane.b32.xlu0 %v1305, 32
      %v1385 = vpop.permute.xlu0 %1384
      %1386 = vrot.lane.b32.xlu0 %v1306, 32
      %v1387 = vpop.permute.xlu0 %1386
      %1388 = vrot.lane.b32.xlu0 %v1307, 32
      %v1389 = vpop.permute.xlu0 %1388
      %1390 = vrot.lane.b32.xlu0 %v1308, 32
      %v1391 = vpop.permute.xlu0 %1390
      %1392 = vrot.lane.b32.xlu0 %v1309, 32
      %v1393 = vpop.permute.xlu0 %1392
      %1394 = vrot.lane.b32.xlu0 %v1310, 32
      %v1395 = vpop.permute.xlu0 %1394
      %1396 = vrot.lane.b32.xlu0 %v1311, 32
      %v1397 = vpop.permute.xlu0 %1396
      %1398 = vrot.lane.b32.xlu0 %v1312, 32
      %v1399 = vpop.permute.xlu0 %1398
      %1400 = vrot.lane.b32.xlu0 %v1313, 32
      %v1401 = vpop.permute.xlu0 %1400
      %1402 = vrot.lane.b32.xlu0 %v1314, 32
      %v1403 = vpop.permute.xlu0 %1402
      %1404 = vrot.lane.b32.xlu0 %v1315, 32
      %v1405 = vpop.permute.xlu0 %1404
      %1406 = vrot.lane.b32.xlu0 %v1316, 32
      %v1407 = vpop.permute.xlu0 %1406
      %1408 = vrot.lane.b32.xlu0 %v1317, 32
      %v1409 = vpop.permute.xlu0 %1408
      %1410 = vrot.lane.b32.xlu0 %v1318, 32
      %v1411 = vpop.permute.xlu0 %1410
      %1412 = vrot.lane.b32.xlu0 %v1319, 32
      %v1413 = vpop.permute.xlu0 %1412
      %1414 = vrot.lane.b32.xlu0 %v1320, 32
      %v1415 = vpop.permute.xlu0 %1414
      %1416 = vrot.lane.b32.xlu0 %v1321, 32
      %v1417 = vpop.permute.xlu0 %1416
      %vm1450 = vcmask 326912
      %1451 = vst.msk [vmem:[#allocation4] sm:$0xff] %vm1450, %v1355
      %1452 = vst.msk [vmem:[#allocation4 + $0x8] sm:$0xff] %vm1450, %v1357
      %1453 = vst.msk [vmem:[#allocation4 + $0x10] sm:$0xff] %vm1450, %v1359
      %1454 = vst.msk [vmem:[#allocation4 + $0x18] sm:$0xff] %vm1450, %v1361
      %1455 = vst.msk [vmem:[#allocation4 + $0x20] sm:$0xff] %vm1450, %v1363
      %1456 = vst.msk [vmem:[#allocation4 + $0x28] sm:$0xff] %vm1450, %v1365
      %1457 = vst.msk [vmem:[#allocation4 + $0x30] sm:$0xff] %vm1450, %v1367
      %1458 = vst.msk [vmem:[#allocation4 + $0x38] sm:$0xff] %vm1450, %v1369
      %1459 = vst.msk [vmem:[#allocation4 + $0x40] sm:$0xff] %vm1450, %v1371
      %1460 = vst.msk [vmem:[#allocation4 + $0x48] sm:$0xff] %vm1450, %v1373
      %1461 = vst.msk [vmem:[#allocation4 + $0x50] sm:$0xff] %vm1450, %v1375
      %1462 = vst.msk [vmem:[#allocation4 + $0x58] sm:$0xff] %vm1450, %v1377
      %1463 = vst.msk [vmem:[#allocation4 + $0x60] sm:$0xff] %vm1450, %v1379
      %1464 = vst.msk [vmem:[#allocation4 + $0x68] sm:$0xff] %vm1450, %v1381
      %1465 = vst.msk [vmem:[#allocation4 + $0x70] sm:$0xff] %vm1450, %v1383
      %1466 = vst.msk [vmem:[#allocation4 + $0x78] sm:$0xff] %vm1450, %v1385
      %1467 = vst.msk [vmem:[#allocation4 + $0x80] sm:$0xff] %vm1450, %v1387
      %1468 = vst.msk [vmem:[#allocation4 + $0x88] sm:$0xff] %vm1450, %v1389
      %1469 = vst.msk [vmem:[#allocation4 + $0x90] sm:$0xff] %vm1450, %v1391
      %1470 = vst.msk [vmem:[#allocation4 + $0x98] sm:$0xff] %vm1450, %v1393
      %1471 = vst.msk [vmem:[#allocation4 + $0xa0] sm:$0xff] %vm1450, %v1395
      %1472 = vst.msk [vmem:[#allocation4 + $0xa8] sm:$0xff] %vm1450, %v1397
      %1473 = vst.msk [vmem:[#allocation4 + $0xb0] sm:$0xff] %vm1450, %v1399
      %1474 = vst.msk [vmem:[#allocation4 + $0xb8] sm:$0xff] %vm1450, %v1401
      %1475 = vst.msk [vmem:[#allocation4 + $0xc0] sm:$0xff] %vm1450, %v1403
      %1476 = vst.msk [vmem:[#allocation4 + $0xc8] sm:$0xff] %vm1450, %v1405
      %1477 = vst.msk [vmem:[#allocation4 + $0xd0] sm:$0xff] %vm1450, %v1407
      %1478 = vst.msk [vmem:[#allocation4 + $0xd8] sm:$0xff] %vm1450, %v1409
      %1479 = vst.msk [vmem:[#allocation4 + $0xe0] sm:$0xff] %vm1450, %v1411
      %1480 = vst.msk [vmem:[#allocation4 + $0xe8] sm:$0xff] %vm1450, %v1413
      %1481 = vst.msk [vmem:[#allocation4 + $0xf0] sm:$0xff] %vm1450, %v1415
      %1482 = vst.msk [vmem:[#allocation4 + $0xf8] sm:$0xff] %vm1450, %v1417
      %v1483 = vld [vmem:[%s420 + $0x4] sm:$0xff]
      %v1484 = vld [vmem:[%s420 + $0xc] sm:$0xff]
      %v1485 = vld [vmem:[%s420 + $0x1c] sm:$0xff]
      %v1486 = vld [vmem:[%s420 + $0x24] sm:$0xff]
      %v1487 = vld [vmem:[%s420 + $0x34] sm:$0xff]
      %v1488 = vld [vmem:[%s420 + $0x3c] sm:$0xff]
      %v1489 = vld [vmem:[%s420 + $0x4c] sm:$0xff]
      %v1490 = vld [vmem:[%s420 + $0x54] sm:$0xff]
      %v1491 = vld [vmem:[%s420 + $0x64] sm:$0xff]
      %v1492 = vld [vmem:[%s420 + $0x6c] sm:$0xff]
      %v1493 = vld [vmem:[%s420 + $0x7c] sm:$0xff]
      %v1494 = vld [vmem:[%s420 + $0x84] sm:$0xff]
      %v1495 = vld [vmem:[%s420 + $0x94] sm:$0xff]
      %v1496 = vld [vmem:[%s420 + $0x9c] sm:$0xff]
      %v1497 = vld [vmem:[%s420 + $0xac] sm:$0xff]
      %v1498 = vld [vmem:[%s420 + $0xb4] sm:$0xff]
      %v1499 = vld [vmem:[%s420 + $0xc4] sm:$0xff]
      %v1500 = vld [vmem:[%s420 + $0xcc] sm:$0xff]
      %v1501 = vld [vmem:[%s420 + $0xdc] sm:$0xff]
      %v1502 = vld [vmem:[%s420 + $0xe4] sm:$0xff]
      %v1503 = vld [vmem:[%s420 + $0xf4] sm:$0xff]
      %v1504 = vld [vmem:[%s420 + $0xfc] sm:$0xff]
      %v1505 = vld [vmem:[%s420 + $0x10c] sm:$0xff]
      %v1506 = vld [vmem:[%s420 + $0x114] sm:$0xff]
      %v1507 = vld [vmem:[%s420 + $0x124] sm:$0xff]
      %v1508 = vld [vmem:[%s420 + $0x12c] sm:$0xff]
      %v1509 = vld [vmem:[%s420 + $0x13c] sm:$0xff]
      %v1510 = vld [vmem:[%s420 + $0x144] sm:$0xff]
      %v1511 = vld [vmem:[%s420 + $0x154] sm:$0xff]
      %v1512 = vld [vmem:[%s420 + $0x15c] sm:$0xff]
      %v1513 = vld [vmem:[%s420 + $0x16c] sm:$0xff]
      %v1514 = vld [vmem:[%s420 + $0x174] sm:$0xff]
      %1547 = vrot.lane.b32.xlu0 %v1483, 40
      %v1548 = vpop.permute.xlu0 %1547
      %1549 = vrot.lane.b32.xlu0 %v1484, 40
      %v1550 = vpop.permute.xlu0 %1549
      %1551 = vrot.lane.b32.xlu0 %v1485, 40
      %v1552 = vpop.permute.xlu0 %1551
      %1553 = vrot.lane.b32.xlu0 %v1486, 40
      %v1554 = vpop.permute.xlu0 %1553
      %1555 = vrot.lane.b32.xlu0 %v1487, 40
      %v1556 = vpop.permute.xlu0 %1555
      %1557 = vrot.lane.b32.xlu0 %v1488, 40
      %v1558 = vpop.permute.xlu0 %1557
      %1559 = vrot.lane.b32.xlu0 %v1489, 40
      %v1560 = vpop.permute.xlu0 %1559
      %1561 = vrot.lane.b32.xlu0 %v1490, 40
      %v1562 = vpop.permute.xlu0 %1561
      %1563 = vrot.lane.b32.xlu0 %v1491, 40
      %v1564 = vpop.permute.xlu0 %1563
      %1565 = vrot.lane.b32.xlu0 %v1492, 40
      %v1566 = vpop.permute.xlu0 %1565
      %1567 = vrot.lane.b32.xlu0 %v1493, 40
      %v1568 = vpop.permute.xlu0 %1567
      %1569 = vrot.lane.b32.xlu0 %v1494, 40
      %v1570 = vpop.permute.xlu0 %1569
      %1571 = vrot.lane.b32.xlu0 %v1495, 40
      %v1572 = vpop.permute.xlu0 %1571
      %1573 = vrot.lane.b32.xlu0 %v1496, 40
      %v1574 = vpop.permute.xlu0 %1573
      %1575 = vrot.lane.b32.xlu0 %v1497, 40
      %v1576 = vpop.permute.xlu0 %1575
      %1577 = vrot.lane.b32.xlu0 %v1498, 40
      %v1578 = vpop.permute.xlu0 %1577
      %1579 = vrot.lane.b32.xlu0 %v1499, 40
      %v1580 = vpop.permute.xlu0 %1579
      %1581 = vrot.lane.b32.xlu0 %v1500, 40
      %v1582 = vpop.permute.xlu0 %1581
      %1583 = vrot.lane.b32.xlu0 %v1501, 40
      %v1584 = vpop.permute.xlu0 %1583
      %1585 = vrot.lane.b32.xlu0 %v1502, 40
      %v1586 = vpop.permute.xlu0 %1585
      %1587 = vrot.lane.b32.xlu0 %v1503, 40
      %v1588 = vpop.permute.xlu0 %1587
      %1589 = vrot.lane.b32.xlu0 %v1504, 40
      %v1590 = vpop.permute.xlu0 %1589
      %1591 = vrot.lane.b32.xlu0 %v1505, 40
      %v1592 = vpop.permute.xlu0 %1591
      %1593 = vrot.lane.b32.xlu0 %v1506, 40
      %v1594 = vpop.permute.xlu0 %1593
      %1595 = vrot.lane.b32.xlu0 %v1507, 40
      %v1596 = vpop.permute.xlu0 %1595
      %1597 = vrot.lane.b32.xlu0 %v1508, 40
      %v1598 = vpop.permute.xlu0 %1597
      %1599 = vrot.lane.b32.xlu0 %v1509, 40
      %v1600 = vpop.permute.xlu0 %1599
      %1601 = vrot.lane.b32.xlu0 %v1510, 40
      %v1602 = vpop.permute.xlu0 %1601
      %1603 = vrot.lane.b32.xlu0 %v1511, 40
      %v1604 = vpop.permute.xlu0 %1603
      %1605 = vrot.lane.b32.xlu0 %v1512, 40
      %v1606 = vpop.permute.xlu0 %1605
      %1607 = vrot.lane.b32.xlu0 %v1513, 40
      %v1608 = vpop.permute.xlu0 %1607
      %1609 = vrot.lane.b32.xlu0 %v1514, 40
      %v1610 = vpop.permute.xlu0 %1609
      %vm1643 = vcmask 392512
      %1644 = vst.msk [vmem:[#allocation4] sm:$0xff] %vm1643, %v1548
      %1645 = vst.msk [vmem:[#allocation4 + $0x8] sm:$0xff] %vm1643, %v1550
      %1646 = vst.msk [vmem:[#allocation4 + $0x10] sm:$0xff] %vm1643, %v1552
      %1647 = vst.msk [vmem:[#allocation4 + $0x18] sm:$0xff] %vm1643, %v1554
      %1648 = vst.msk [vmem:[#allocation4 + $0x20] sm:$0xff] %vm1643, %v1556
      %1649 = vst.msk [vmem:[#allocation4 + $0x28] sm:$0xff] %vm1643, %v1558
      %1650 = vst.msk [vmem:[#allocation4 + $0x30] sm:$0xff] %vm1643, %v1560
      %1651 = vst.msk [vmem:[#allocation4 + $0x38] sm:$0xff] %vm1643, %v1562
      %1652 = vst.msk [vmem:[#allocation4 + $0x40] sm:$0xff] %vm1643, %v1564
      %1653 = vst.msk [vmem:[#allocation4 + $0x48] sm:$0xff] %vm1643, %v1566
      %1654 = vst.msk [vmem:[#allocation4 + $0x50] sm:$0xff] %vm1643, %v1568
      %1655 = vst.msk [vmem:[#allocation4 + $0x58] sm:$0xff] %vm1643, %v1570
      %1656 = vst.msk [vmem:[#allocation4 + $0x60] sm:$0xff] %vm1643, %v1572
      %1657 = vst.msk [vmem:[#allocation4 + $0x68] sm:$0xff] %vm1643, %v1574
      %1658 = vst.msk [vmem:[#allocation4 + $0x70] sm:$0xff] %vm1643, %v1576
      %1659 = vst.msk [vmem:[#allocation4 + $0x78] sm:$0xff] %vm1643, %v1578
      %1660 = vst.msk [vmem:[#allocation4 + $0x80] sm:$0xff] %vm1643, %v1580
      %1661 = vst.msk [vmem:[#allocation4 + $0x88] sm:$0xff] %vm1643, %v1582
      %1662 = vst.msk [vmem:[#allocation4 + $0x90] sm:$0xff] %vm1643, %v1584
      %1663 = vst.msk [vmem:[#allocation4 + $0x98] sm:$0xff] %vm1643, %v1586
      %1664 = vst.msk [vmem:[#allocation4 + $0xa0] sm:$0xff] %vm1643, %v1588
      %1665 = vst.msk [vmem:[#allocation4 + $0xa8] sm:$0xff] %vm1643, %v1590
      %1666 = vst.msk [vmem:[#allocation4 + $0xb0] sm:$0xff] %vm1643, %v1592
      %1667 = vst.msk [vmem:[#allocation4 + $0xb8] sm:$0xff] %vm1643, %v1594
      %1668 = vst.msk [vmem:[#allocation4 + $0xc0] sm:$0xff] %vm1643, %v1596
      %1669 = vst.msk [vmem:[#allocation4 + $0xc8] sm:$0xff] %vm1643, %v1598
      %1670 = vst.msk [vmem:[#allocation4 + $0xd0] sm:$0xff] %vm1643, %v1600
      %1671 = vst.msk [vmem:[#allocation4 + $0xd8] sm:$0xff] %vm1643, %v1602
      %1672 = vst.msk [vmem:[#allocation4 + $0xe0] sm:$0xff] %vm1643, %v1604
      %1673 = vst.msk [vmem:[#allocation4 + $0xe8] sm:$0xff] %vm1643, %v1606
      %1674 = vst.msk [vmem:[#allocation4 + $0xf0] sm:$0xff] %vm1643, %v1608
      %1675 = vst.msk [vmem:[#allocation4 + $0xf8] sm:$0xff] %vm1643, %v1610
      %s1676 = scalar_lea.vmem [#allocation2], 96
      %v1677 = vld [vmem:[%s1676] sm:$0xff]
      %v1678 = vld [vmem:[%s1676 + $0x8] sm:$0xff]
      %v1679 = vld [vmem:[%s1676 + $0x18] sm:$0xff]
      %v1680 = vld [vmem:[%s1676 + $0x20] sm:$0xff]
      %v1681 = vld [vmem:[%s1676 + $0x30] sm:$0xff]
      %v1682 = vld [vmem:[%s1676 + $0x38] sm:$0xff]
      %v1683 = vld [vmem:[%s1676 + $0x48] sm:$0xff]
      %v1684 = vld [vmem:[%s1676 + $0x50] sm:$0xff]
      %v1685 = vld [vmem:[%s1676 + $0x60] sm:$0xff]
      %v1686 = vld [vmem:[%s1676 + $0x68] sm:$0xff]
      %v1687 = vld [vmem:[%s1676 + $0x78] sm:$0xff]
      %v1688 = vld [vmem:[%s1676 + $0x80] sm:$0xff]
      %v1689 = vld [vmem:[%s1676 + $0x90] sm:$0xff]
      %v1690 = vld [vmem:[%s1676 + $0x98] sm:$0xff]
      %v1691 = vld [vmem:[%s1676 + $0xa8] sm:$0xff]
      %v1692 = vld [vmem:[%s1676 + $0xb0] sm:$0xff]
      %v1693 = vld [vmem:[%s1676 + $0xc0] sm:$0xff]
      %v1694 = vld [vmem:[%s1676 + $0xc8] sm:$0xff]
      %v1695 = vld [vmem:[%s1676 + $0xd8] sm:$0xff]
      %v1696 = vld [vmem:[%s1676 + $0xe0] sm:$0xff]
      %v1697 = vld [vmem:[%s1676 + $0xf0] sm:$0xff]
      %v1698 = vld [vmem:[%s1676 + $0xf8] sm:$0xff]
      %v1699 = vld [vmem:[%s1676 + $0x108] sm:$0xff]
      %v1700 = vld [vmem:[%s1676 + $0x110] sm:$0xff]
      %v1701 = vld [vmem:[%s1676 + $0x120] sm:$0xff]
      %v1702 = vld [vmem:[%s1676 + $0x128] sm:$0xff]
      %v1703 = vld [vmem:[%s1676 + $0x138] sm:$0xff]
      %v1704 = vld [vmem:[%s1676 + $0x140] sm:$0xff]
      %v1705 = vld [vmem:[%s1676 + $0x150] sm:$0xff]
      %v1706 = vld [vmem:[%s1676 + $0x158] sm:$0xff]
      %v1707 = vld [vmem:[%s1676 + $0x168] sm:$0xff]
      %v1708 = vld [vmem:[%s1676 + $0x170] sm:$0xff]
      %1741 = vrot.lane.b32.xlu0 %v1677, 48
      %v1742 = vpop.permute.xlu0 %1741
      %1743 = vrot.lane.b32.xlu0 %v1678, 48
      %v1744 = vpop.permute.xlu0 %1743
      %1745 = vrot.lane.b32.xlu0 %v1679, 48
      %v1746 = vpop.permute.xlu0 %1745
      %1747 = vrot.lane.b32.xlu0 %v1680, 48
      %v1748 = vpop.permute.xlu0 %1747
      %1749 = vrot.lane.b32.xlu0 %v1681, 48
      %v1750 = vpop.permute.xlu0 %1749
      %1751 = vrot.lane.b32.xlu0 %v1682, 48
      %v1752 = vpop.permute.xlu0 %1751
      %1753 = vrot.lane.b32.xlu0 %v1683, 48
      %v1754 = vpop.permute.xlu0 %1753
      %1755 = vrot.lane.b32.xlu0 %v1684, 48
      %v1756 = vpop.permute.xlu0 %1755
      %1757 = vrot.lane.b32.xlu0 %v1685, 48
      %v1758 = vpop.permute.xlu0 %1757
      %1759 = vrot.lane.b32.xlu0 %v1686, 48
      %v1760 = vpop.permute.xlu0 %1759
      %1761 = vrot.lane.b32.xlu0 %v1687, 48
      %v1762 = vpop.permute.xlu0 %1761
      %1763 = vrot.lane.b32.xlu0 %v1688, 48
      %v1764 = vpop.permute.xlu0 %1763
      %1765 = vrot.lane.b32.xlu0 %v1689, 48
      %v1766 = vpop.permute.xlu0 %1765
      %1767 = vrot.lane.b32.xlu0 %v1690, 48
      %v1768 = vpop.permute.xlu0 %1767
      %1769 = vrot.lane.b32.xlu0 %v1691, 48
      %v1770 = vpop.permute.xlu0 %1769
      %1771 = vrot.lane.b32.xlu0 %v1692, 48
      %v1772 = vpop.permute.xlu0 %1771
      %1773 = vrot.lane.b32.xlu0 %v1693, 48
      %v1774 = vpop.permute.xlu0 %1773
      %1775 = vrot.lane.b32.xlu0 %v1694, 48
      %v1776 = vpop.permute.xlu0 %1775
      %1777 = vrot.lane.b32.xlu0 %v1695, 48
      %v1778 = vpop.permute.xlu0 %1777
      %1779 = vrot.lane.b32.xlu0 %v1696, 48
      %v1780 = vpop.permute.xlu0 %1779
      %1781 = vrot.lane.b32.xlu0 %v1697, 48
      %v1782 = vpop.permute.xlu0 %1781
      %1783 = vrot.lane.b32.xlu0 %v1698, 48
      %v1784 = vpop.permute.xlu0 %1783
      %1785 = vrot.lane.b32.xlu0 %v1699, 48
      %v1786 = vpop.permute.xlu0 %1785
      %1787 = vrot.lane.b32.xlu0 %v1700, 48
      %v1788 = vpop.permute.xlu0 %1787
      %1789 = vrot.lane.b32.xlu0 %v1701, 48
      %v1790 = vpop.permute.xlu0 %1789
      %1791 = vrot.lane.b32.xlu0 %v1702, 48
      %v1792 = vpop.permute.xlu0 %1791
      %1793 = vrot.lane.b32.xlu0 %v1703, 48
      %v1794 = vpop.permute.xlu0 %1793
      %1795 = vrot.lane.b32.xlu0 %v1704, 48
      %v1796 = vpop.permute.xlu0 %1795
      %1797 = vrot.lane.b32.xlu0 %v1705, 48
      %v1798 = vpop.permute.xlu0 %1797
      %1799 = vrot.lane.b32.xlu0 %v1706, 48
      %v1800 = vpop.permute.xlu0 %1799
      %1801 = vrot.lane.b32.xlu0 %v1707, 48
      %v1802 = vpop.permute.xlu0 %1801
      %1803 = vrot.lane.b32.xlu0 %v1708, 48
      %v1804 = vpop.permute.xlu0 %1803
      %vm1837 = vcmask 458112
      %1838 = vst.msk [vmem:[#allocation4] sm:$0xff] %vm1837, %v1742
      %1839 = vst.msk [vmem:[#allocation4 + $0x8] sm:$0xff] %vm1837, %v1744
      %1840 = vst.msk [vmem:[#allocation4 + $0x10] sm:$0xff] %vm1837, %v1746
      %1841 = vst.msk [vmem:[#allocation4 + $0x18] sm:$0xff] %vm1837, %v1748
      %1842 = vst.msk [vmem:[#allocation4 + $0x20] sm:$0xff] %vm1837, %v1750
      %1843 = vst.msk [vmem:[#allocation4 + $0x28] sm:$0xff] %vm1837, %v1752
      %1844 = vst.msk [vmem:[#allocation4 + $0x30] sm:$0xff] %vm1837, %v1754
      %1845 = vst.msk [vmem:[#allocation4 + $0x38] sm:$0xff] %vm1837, %v1756
      %1846 = vst.msk [vmem:[#allocation4 + $0x40] sm:$0xff] %vm1837, %v1758
      %1847 = vst.msk [vmem:[#allocation4 + $0x48] sm:$0xff] %vm1837, %v1760
      %1848 = vst.msk [vmem:[#allocation4 + $0x50] sm:$0xff] %vm1837, %v1762
      %1849 = vst.msk [vmem:[#allocation4 + $0x58] sm:$0xff] %vm1837, %v1764
      %1850 = vst.msk [vmem:[#allocation4 + $0x60] sm:$0xff] %vm1837, %v1766
      %1851 = vst.msk [vmem:[#allocation4 + $0x68] sm:$0xff] %vm1837, %v1768
      %1852 = vst.msk [vmem:[#allocation4 + $0x70] sm:$0xff] %vm1837, %v1770
      %1853 = vst.msk [vmem:[#allocation4 + $0x78] sm:$0xff] %vm1837, %v1772
      %1854 = vst.msk [vmem:[#allocation4 + $0x80] sm:$0xff] %vm1837, %v1774
      %1855 = vst.msk [vmem:[#allocation4 + $0x88] sm:$0xff] %vm1837, %v1776
      %1856 = vst.msk [vmem:[#allocation4 + $0x90] sm:$0xff] %vm1837, %v1778
      %1857 = vst.msk [vmem:[#allocation4 + $0x98] sm:$0xff] %vm1837, %v1780
      %1858 = vst.msk [vmem:[#allocation4 + $0xa0] sm:$0xff] %vm1837, %v1782
      %1859 = vst.msk [vmem:[#allocation4 + $0xa8] sm:$0xff] %vm1837, %v1784
      %1860 = vst.msk [vmem:[#allocation4 + $0xb0] sm:$0xff] %vm1837, %v1786
      %1861 = vst.msk [vmem:[#allocation4 + $0xb8] sm:$0xff] %vm1837, %v1788
      %1862 = vst.msk [vmem:[#allocation4 + $0xc0] sm:$0xff] %vm1837, %v1790
      %1863 = vst.msk [vmem:[#allocation4 + $0xc8] sm:$0xff] %vm1837, %v1792
      %1864 = vst.msk [vmem:[#allocation4 + $0xd0] sm:$0xff] %vm1837, %v1794
      %1865 = vst.msk [vmem:[#allocation4 + $0xd8] sm:$0xff] %vm1837, %v1796
      %1866 = vst.msk [vmem:[#allocation4 + $0xe0] sm:$0xff] %vm1837, %v1798
      %1867 = vst.msk [vmem:[#allocation4 + $0xe8] sm:$0xff] %vm1837, %v1800
      %1868 = vst.msk [vmem:[#allocation4 + $0xf0] sm:$0xff] %vm1837, %v1802
      %1869 = vst.msk [vmem:[#allocation4 + $0xf8] sm:$0xff] %vm1837, %v1804
      %v1870 = vld [vmem:[%s1676 + $0x2] sm:$0xff]
      %v1871 = vld [vmem:[%s1676 + $0xa] sm:$0xff]
      %v1872 = vld [vmem:[%s1676 + $0x1a] sm:$0xff]
      %v1873 = vld [vmem:[%s1676 + $0x22] sm:$0xff]
      %v1874 = vld [vmem:[%s1676 + $0x32] sm:$0xff]
      %v1875 = vld [vmem:[%s1676 + $0x3a] sm:$0xff]
      %v1876 = vld [vmem:[%s1676 + $0x4a] sm:$0xff]
      %v1877 = vld [vmem:[%s1676 + $0x52] sm:$0xff]
      %v1878 = vld [vmem:[%s1676 + $0x62] sm:$0xff]
      %v1879 = vld [vmem:[%s1676 + $0x6a] sm:$0xff]
      %v1880 = vld [vmem:[%s1676 + $0x7a] sm:$0xff]
      %v1881 = vld [vmem:[%s1676 + $0x82] sm:$0xff]
      %v1882 = vld [vmem:[%s1676 + $0x92] sm:$0xff]
      %v1883 = vld [vmem:[%s1676 + $0x9a] sm:$0xff]
      %v1884 = vld [vmem:[%s1676 + $0xaa] sm:$0xff]
      %v1885 = vld [vmem:[%s1676 + $0xb2] sm:$0xff]
      %v1886 = vld [vmem:[%s1676 + $0xc2] sm:$0xff]
      %v1887 = vld [vmem:[%s1676 + $0xca] sm:$0xff]
      %v1888 = vld [vmem:[%s1676 + $0xda] sm:$0xff]
      %v1889 = vld [vmem:[%s1676 + $0xe2] sm:$0xff]
      %v1890 = vld [vmem:[%s1676 + $0xf2] sm:$0xff]
      %v1891 = vld [vmem:[%s1676 + $0xfa] sm:$0xff]
      %v1892 = vld [vmem:[%s1676 + $0x10a] sm:$0xff]
      %v1893 = vld [vmem:[%s1676 + $0x112] sm:$0xff]
      %v1894 = vld [vmem:[%s1676 + $0x122] sm:$0xff]
      %v1895 = vld [vmem:[%s1676 + $0x12a] sm:$0xff]
      %v1896 = vld [vmem:[%s1676 + $0x13a] sm:$0xff]
      %v1897 = vld [vmem:[%s1676 + $0x142] sm:$0xff]
      %v1898 = vld [vmem:[%s1676 + $0x152] sm:$0xff]
      %v1899 = vld [vmem:[%s1676 + $0x15a] sm:$0xff]
      %v1900 = vld [vmem:[%s1676 + $0x16a] sm:$0xff]
      %v1901 = vld [vmem:[%s1676 + $0x172] sm:$0xff]
      %1934 = vrot.lane.b32.xlu0 %v1870, 56
      %v1935 = vpop.permute.xlu0 %1934
      %1936 = vrot.lane.b32.xlu0 %v1871, 56
      %v1937 = vpop.permute.xlu0 %1936
      %1938 = vrot.lane.b32.xlu0 %v1872, 56
      %v1939 = vpop.permute.xlu0 %1938
      %1940 = vrot.lane.b32.xlu0 %v1873, 56
      %v1941 = vpop.permute.xlu0 %1940
      %1942 = vrot.lane.b32.xlu0 %v1874, 56
      %v1943 = vpop.permute.xlu0 %1942
      %1944 = vrot.lane.b32.xlu0 %v1875, 56
      %v1945 = vpop.permute.xlu0 %1944
      %1946 = vrot.lane.b32.xlu0 %v1876, 56
      %v1947 = vpop.permute.xlu0 %1946
      %1948 = vrot.lane.b32.xlu0 %v1877, 56
      %v1949 = vpop.permute.xlu0 %1948
      %1950 = vrot.lane.b32.xlu0 %v1878, 56
      %v1951 = vpop.permute.xlu0 %1950
      %1952 = vrot.lane.b32.xlu0 %v1879, 56
      %v1953 = vpop.permute.xlu0 %1952
      %1954 = vrot.lane.b32.xlu0 %v1880, 56
      %v1955 = vpop.permute.xlu0 %1954
      %1956 = vrot.lane.b32.xlu0 %v1881, 56
      %v1957 = vpop.permute.xlu0 %1956
      %1958 = vrot.lane.b32.xlu0 %v1882, 56
      %v1959 = vpop.permute.xlu0 %1958
      %1960 = vrot.lane.b32.xlu0 %v1883, 56
      %v1961 = vpop.permute.xlu0 %1960
      %1962 = vrot.lane.b32.xlu0 %v1884, 56
      %v1963 = vpop.permute.xlu0 %1962
      %1964 = vrot.lane.b32.xlu0 %v1885, 56
      %v1965 = vpop.permute.xlu0 %1964
      %1966 = vrot.lane.b32.xlu0 %v1886, 56
      %v1967 = vpop.permute.xlu0 %1966
      %1968 = vrot.lane.b32.xlu0 %v1887, 56
      %v1969 = vpop.permute.xlu0 %1968
      %1970 = vrot.lane.b32.xlu0 %v1888, 56
      %v1971 = vpop.permute.xlu0 %1970
      %1972 = vrot.lane.b32.xlu0 %v1889, 56
      %v1973 = vpop.permute.xlu0 %1972
      %1974 = vrot.lane.b32.xlu0 %v1890, 56
      %v1975 = vpop.permute.xlu0 %1974
      %1976 = vrot.lane.b32.xlu0 %v1891, 56
      %v1977 = vpop.permute.xlu0 %1976
      %1978 = vrot.lane.b32.xlu0 %v1892, 56
      %v1979 = vpop.permute.xlu0 %1978
      %1980 = vrot.lane.b32.xlu0 %v1893, 56
      %v1981 = vpop.permute.xlu0 %1980
      %1982 = vrot.lane.b32.xlu0 %v1894, 56
      %v1983 = vpop.permute.xlu0 %1982
      %1984 = vrot.lane.b32.xlu0 %v1895, 56
      %v1985 = vpop.permute.xlu0 %1984
      %1986 = vrot.lane.b32.xlu0 %v1896, 56
      %v1987 = vpop.permute.xlu0 %1986
      %1988 = vrot.lane.b32.xlu0 %v1897, 56
      %v1989 = vpop.permute.xlu0 %1988
      %1990 = vrot.lane.b32.xlu0 %v1898, 56
      %v1991 = vpop.permute.xlu0 %1990
      %1992 = vrot.lane.b32.xlu0 %v1899, 56
      %v1993 = vpop.permute.xlu0 %1992
      %1994 = vrot.lane.b32.xlu0 %v1900, 56
      %v1995 = vpop.permute.xlu0 %1994
      %1996 = vrot.lane.b32.xlu0 %v1901, 56
      %v1997 = vpop.permute.xlu0 %1996
      %vm2030 = vcmask 523712
      %2031 = vst.msk [vmem:[#allocation4] sm:$0xff] %vm2030, %v1935
      %2032 = vst.msk [vmem:[#allocation4 + $0x8] sm:$0xff] %vm2030, %v1937
      %2033 = vst.msk [vmem:[#allocation4 + $0x10] sm:$0xff] %vm2030, %v1939
      %2034 = vst.msk [vmem:[#allocation4 + $0x18] sm:$0xff] %vm2030, %v1941
      %2035 = vst.msk [vmem:[#allocation4 + $0x20] sm:$0xff] %vm2030, %v1943
      %2036 = vst.msk [vmem:[#allocation4 + $0x28] sm:$0xff] %vm2030, %v1945
      %2037 = vst.msk [vmem:[#allocation4 + $0x30] sm:$0xff] %vm2030, %v1947
      %2038 = vst.msk [vmem:[#allocation4 + $0x38] sm:$0xff] %vm2030, %v1949
      %2039 = vst.msk [vmem:[#allocation4 + $0x40] sm:$0xff] %vm2030, %v1951
      %2040 = vst.msk [vmem:[#allocation4 + $0x48] sm:$0xff] %vm2030, %v1953
      %2041 = vst.msk [vmem:[#allocation4 + $0x50] sm:$0xff] %vm2030, %v1955
      %2042 = vst.msk [vmem:[#allocation4 + $0x58] sm:$0xff] %vm2030, %v1957
      %2043 = vst.msk [vmem:[#allocation4 + $0x60] sm:$0xff] %vm2030, %v1959
      %2044 = vst.msk [vmem:[#allocation4 + $0x68] sm:$0xff] %vm2030, %v1961
      %2045 = vst.msk [vmem:[#allocation4 + $0x70] sm:$0xff] %vm2030, %v1963
      %2046 = vst.msk [vmem:[#allocation4 + $0x78] sm:$0xff] %vm2030, %v1965
      %2047 = vst.msk [vmem:[#allocation4 + $0x80] sm:$0xff] %vm2030, %v1967
      %2048 = vst.msk [vmem:[#allocation4 + $0x88] sm:$0xff] %vm2030, %v1969
      %2049 = vst.msk [vmem:[#allocation4 + $0x90] sm:$0xff] %vm2030, %v1971
      %2050 = vst.msk [vmem:[#allocation4 + $0x98] sm:$0xff] %vm2030, %v1973
      %2051 = vst.msk [vmem:[#allocation4 + $0xa0] sm:$0xff] %vm2030, %v1975
      %2052 = vst.msk [vmem:[#allocation4 + $0xa8] sm:$0xff] %vm2030, %v1977
      %2053 = vst.msk [vmem:[#allocation4 + $0xb0] sm:$0xff] %vm2030, %v1979
      %2054 = vst.msk [vmem:[#allocation4 + $0xb8] sm:$0xff] %vm2030, %v1981
      %2055 = vst.msk [vmem:[#allocation4 + $0xc0] sm:$0xff] %vm2030, %v1983
      %2056 = vst.msk [vmem:[#allocation4 + $0xc8] sm:$0xff] %vm2030, %v1985
      %2057 = vst.msk [vmem:[#allocation4 + $0xd0] sm:$0xff] %vm2030, %v1987
      %2058 = vst.msk [vmem:[#allocation4 + $0xd8] sm:$0xff] %vm2030, %v1989
      %2059 = vst.msk [vmem:[#allocation4 + $0xe0] sm:$0xff] %vm2030, %v1991
      %2060 = vst.msk [vmem:[#allocation4 + $0xe8] sm:$0xff] %vm2030, %v1993
      %2061 = vst.msk [vmem:[#allocation4 + $0xf0] sm:$0xff] %vm2030, %v1995
      %2062 = vst.msk [vmem:[#allocation4 + $0xf8] sm:$0xff] %vm2030, %v1997
      %v2063 = vld [vmem:[%s1676 + $0x4] sm:$0xff]
      %v2064 = vld [vmem:[%s1676 + $0xc] sm:$0xff]
      %v2065 = vld [vmem:[%s1676 + $0x1c] sm:$0xff]
      %v2066 = vld [vmem:[%s1676 + $0x24] sm:$0xff]
      %v2067 = vld [vmem:[%s1676 + $0x34] sm:$0xff]
      %v2068 = vld [vmem:[%s1676 + $0x3c] sm:$0xff]
      %v2069 = vld [vmem:[%s1676 + $0x4c] sm:$0xff]
      %v2070 = vld [vmem:[%s1676 + $0x54] sm:$0xff]
      %v2071 = vld [vmem:[%s1676 + $0x64] sm:$0xff]
      %v2072 = vld [vmem:[%s1676 + $0x6c] sm:$0xff]
      %v2073 = vld [vmem:[%s1676 + $0x7c] sm:$0xff]
      %v2074 = vld [vmem:[%s1676 + $0x84] sm:$0xff]
      %v2075 = vld [vmem:[%s1676 + $0x94] sm:$0xff]
      %v2076 = vld [vmem:[%s1676 + $0x9c] sm:$0xff]
      %v2077 = vld [vmem:[%s1676 + $0xac] sm:$0xff]
      %v2078 = vld [vmem:[%s1676 + $0xb4] sm:$0xff]
      %v2079 = vld [vmem:[%s1676 + $0xc4] sm:$0xff]
      %v2080 = vld [vmem:[%s1676 + $0xcc] sm:$0xff]
      %v2081 = vld [vmem:[%s1676 + $0xdc] sm:$0xff]
      %v2082 = vld [vmem:[%s1676 + $0xe4] sm:$0xff]
      %v2083 = vld [vmem:[%s1676 + $0xf4] sm:$0xff]
      %v2084 = vld [vmem:[%s1676 + $0xfc] sm:$0xff]
      %v2085 = vld [vmem:[%s1676 + $0x10c] sm:$0xff]
      %v2086 = vld [vmem:[%s1676 + $0x114] sm:$0xff]
      %v2087 = vld [vmem:[%s1676 + $0x124] sm:$0xff]
      %v2088 = vld [vmem:[%s1676 + $0x12c] sm:$0xff]
      %v2089 = vld [vmem:[%s1676 + $0x13c] sm:$0xff]
      %v2090 = vld [vmem:[%s1676 + $0x144] sm:$0xff]
      %v2091 = vld [vmem:[%s1676 + $0x154] sm:$0xff]
      %v2092 = vld [vmem:[%s1676 + $0x15c] sm:$0xff]
      %v2093 = vld [vmem:[%s1676 + $0x16c] sm:$0xff]
      %v2094 = vld [vmem:[%s1676 + $0x174] sm:$0xff]
      %2127 = vrot.lane.b32.xlu0 %v2063, 64
      %v2128 = vpop.permute.xlu0 %2127
      %2129 = vrot.lane.b32.xlu0 %v2064, 64
      %v2130 = vpop.permute.xlu0 %2129
      %2131 = vrot.lane.b32.xlu0 %v2065, 64
      %v2132 = vpop.permute.xlu0 %2131
      %2133 = vrot.lane.b32.xlu0 %v2066, 64
      %v2134 = vpop.permute.xlu0 %2133
      %2135 = vrot.lane.b32.xlu0 %v2067, 64
      %v2136 = vpop.permute.xlu0 %2135
      %2137 = vrot.lane.b32.xlu0 %v2068, 64
      %v2138 = vpop.permute.xlu0 %2137
      %2139 = vrot.lane.b32.xlu0 %v2069, 64
      %v2140 = vpop.permute.xlu0 %2139
      %2141 = vrot.lane.b32.xlu0 %v2070, 64
      %v2142 = vpop.permute.xlu0 %2141
      %2143 = vrot.lane.b32.xlu0 %v2071, 64
      %v2144 = vpop.permute.xlu0 %2143
      %2145 = vrot.lane.b32.xlu0 %v2072, 64
      %v2146 = vpop.permute.xlu0 %2145
      %2147 = vrot.lane.b32.xlu0 %v2073, 64
      %v2148 = vpop.permute.xlu0 %2147
      %2149 = vrot.lane.b32.xlu0 %v2074, 64
      %v2150 = vpop.permute.xlu0 %2149
      %2151 = vrot.lane.b32.xlu0 %v2075, 64
      %v2152 = vpop.permute.xlu0 %2151
      %2153 = vrot.lane.b32.xlu0 %v2076, 64
      %v2154 = vpop.permute.xlu0 %2153
      %2155 = vrot.lane.b32.xlu0 %v2077, 64
      %v2156 = vpop.permute.xlu0 %2155
      %2157 = vrot.lane.b32.xlu0 %v2078, 64
      %v2158 = vpop.permute.xlu0 %2157
      %2159 = vrot.lane.b32.xlu0 %v2079, 64
      %v2160 = vpop.permute.xlu0 %2159
      %2161 = vrot.lane.b32.xlu0 %v2080, 64
      %v2162 = vpop.permute.xlu0 %2161
      %2163 = vrot.lane.b32.xlu0 %v2081, 64
      %v2164 = vpop.permute.xlu0 %2163
      %2165 = vrot.lane.b32.xlu0 %v2082, 64
      %v2166 = vpop.permute.xlu0 %2165
      %2167 = vrot.lane.b32.xlu0 %v2083, 64
      %v2168 = vpop.permute.xlu0 %2167
      %2169 = vrot.lane.b32.xlu0 %v2084, 64
      %v2170 = vpop.permute.xlu0 %2169
      %2171 = vrot.lane.b32.xlu0 %v2085, 64
      %v2172 = vpop.permute.xlu0 %2171
      %2173 = vrot.lane.b32.xlu0 %v2086, 64
      %v2174 = vpop.permute.xlu0 %2173
      %2175 = vrot.lane.b32.xlu0 %v2087, 64
      %v2176 = vpop.permute.xlu0 %2175
      %2177 = vrot.lane.b32.xlu0 %v2088, 64
      %v2178 = vpop.permute.xlu0 %2177
      %2179 = vrot.lane.b32.xlu0 %v2089, 64
      %v2180 = vpop.permute.xlu0 %2179
      %2181 = vrot.lane.b32.xlu0 %v2090, 64
      %v2182 = vpop.permute.xlu0 %2181
      %2183 = vrot.lane.b32.xlu0 %v2091, 64
      %v2184 = vpop.permute.xlu0 %2183
      %2185 = vrot.lane.b32.xlu0 %v2092, 64
      %v2186 = vpop.permute.xlu0 %2185
      %2187 = vrot.lane.b32.xlu0 %v2093, 64
      %v2188 = vpop.permute.xlu0 %2187
      %2189 = vrot.lane.b32.xlu0 %v2094, 64
      %v2190 = vpop.permute.xlu0 %2189
      %vm2223 = vcmask 589312
      %2224 = vst.msk [vmem:[#allocation4] sm:$0xff] %vm2223, %v2128
      %2225 = vst.msk [vmem:[#allocation4 + $0x8] sm:$0xff] %vm2223, %v2130
      %2226 = vst.msk [vmem:[#allocation4 + $0x10] sm:$0xff] %vm2223, %v2132
      %2227 = vst.msk [vmem:[#allocation4 + $0x18] sm:$0xff] %vm2223, %v2134
      %2228 = vst.msk [vmem:[#allocation4 + $0x20] sm:$0xff] %vm2223, %v2136
      %2229 = vst.msk [vmem:[#allocation4 + $0x28] sm:$0xff] %vm2223, %v2138
      %2230 = vst.msk [vmem:[#allocation4 + $0x30] sm:$0xff] %vm2223, %v2140
      %2231 = vst.msk [vmem:[#allocation4 + $0x38] sm:$0xff] %vm2223, %v2142
      %2232 = vst.msk [vmem:[#allocation4 + $0x40] sm:$0xff] %vm2223, %v2144
      %2233 = vst.msk [vmem:[#allocation4 + $0x48] sm:$0xff] %vm2223, %v2146
      %2234 = vst.msk [vmem:[#allocation4 + $0x50] sm:$0xff] %vm2223, %v2148
      %2235 = vst.msk [vmem:[#allocation4 + $0x58] sm:$0xff] %vm2223, %v2150
      %2236 = vst.msk [vmem:[#allocation4 + $0x60] sm:$0xff] %vm2223, %v2152
      %2237 = vst.msk [vmem:[#allocation4 + $0x68] sm:$0xff] %vm2223, %v2154
      %2238 = vst.msk [vmem:[#allocation4 + $0x70] sm:$0xff] %vm2223, %v2156
      %2239 = vst.msk [vmem:[#allocation4 + $0x78] sm:$0xff] %vm2223, %v2158
      %2240 = vst.msk [vmem:[#allocation4 + $0x80] sm:$0xff] %vm2223, %v2160
      %2241 = vst.msk [vmem:[#allocation4 + $0x88] sm:$0xff] %vm2223, %v2162
      %2242 = vst.msk [vmem:[#allocation4 + $0x90] sm:$0xff] %vm2223, %v2164
      %2243 = vst.msk [vmem:[#allocation4 + $0x98] sm:$0xff] %vm2223, %v2166
      %2244 = vst.msk [vmem:[#allocation4 + $0xa0] sm:$0xff] %vm2223, %v2168
      %2245 = vst.msk [vmem:[#allocation4 + $0xa8] sm:$0xff] %vm2223, %v2170
      %2246 = vst.msk [vmem:[#allocation4 + $0xb0] sm:$0xff] %vm2223, %v2172
      %2247 = vst.msk [vmem:[#allocation4 + $0xb8] sm:$0xff] %vm2223, %v2174
      %2248 = vst.msk [vmem:[#allocation4 + $0xc0] sm:$0xff] %vm2223, %v2176
      %2249 = vst.msk [vmem:[#allocation4 + $0xc8] sm:$0xff] %vm2223, %v2178
      %2250 = vst.msk [vmem:[#allocation4 + $0xd0] sm:$0xff] %vm2223, %v2180
      %2251 = vst.msk [vmem:[#allocation4 + $0xd8] sm:$0xff] %vm2223, %v2182
      %2252 = vst.msk [vmem:[#allocation4 + $0xe0] sm:$0xff] %vm2223, %v2184
      %2253 = vst.msk [vmem:[#allocation4 + $0xe8] sm:$0xff] %vm2223, %v2186
      %2254 = vst.msk [vmem:[#allocation4 + $0xf0] sm:$0xff] %vm2223, %v2188
      %2255 = vst.msk [vmem:[#allocation4 + $0xf8] sm:$0xff] %vm2223, %v2190
      %v2256 = vld [vmem:[#allocation4] sm:$0xff]
      %v2257 = vld [vmem:[#allocation4 + $0x8] sm:$0xff]
      %v2258 = vld [vmem:[#allocation4 + $0x10] sm:$0xff]
      %v2259 = vld [vmem:[#allocation4 + $0x18] sm:$0xff]
      %v2260 = vld [vmem:[#allocation4 + $0x20] sm:$0xff]
      %v2261 = vld [vmem:[#allocation4 + $0x28] sm:$0xff]
      %v2262 = vld [vmem:[#allocation4 + $0x30] sm:$0xff]
      %v2263 = vld [vmem:[#allocation4 + $0x38] sm:$0xff]
      %v2264 = vld [vmem:[#allocation4 + $0x40] sm:$0xff]
      %v2265 = vld [vmem:[#allocation4 + $0x48] sm:$0xff]
      %v2266 = vld [vmem:[#allocation4 + $0x50] sm:$0xff]
      %v2267 = vld [vmem:[#allocation4 + $0x58] sm:$0xff]
      %v2268 = vld [vmem:[#allocation4 + $0x60] sm:$0xff]
      %v2269 = vld [vmem:[#allocation4 + $0x68] sm:$0xff]
      %v2270 = vld [vmem:[#allocation4 + $0x70] sm:$0xff]
      %v2271 = vld [vmem:[#allocation4 + $0x78] sm:$0xff]
      %v2272 = vld [vmem:[#allocation4 + $0x80] sm:$0xff]
      %v2273 = vld [vmem:[#allocation4 + $0x88] sm:$0xff]
      %v2274 = vld [vmem:[#allocation4 + $0x90] sm:$0xff]
      %v2275 = vld [vmem:[#allocation4 + $0x98] sm:$0xff]
      %v2276 = vld [vmem:[#allocation4 + $0xa0] sm:$0xff]
      %v2277 = vld [vmem:[#allocation4 + $0xa8] sm:$0xff]
      %v2278 = vld [vmem:[#allocation4 + $0xb0] sm:$0xff]
      %v2279 = vld [vmem:[#allocation4 + $0xb8] sm:$0xff]
      %v2280 = vld [vmem:[#allocation4 + $0xc0] sm:$0xff]
      %v2281 = vld [vmem:[#allocation4 + $0xc8] sm:$0xff]
      %v2282 = vld [vmem:[#allocation4 + $0xd0] sm:$0xff]
      %v2283 = vld [vmem:[#allocation4 + $0xd8] sm:$0xff]
      %v2284 = vld [vmem:[#allocation4 + $0xe0] sm:$0xff]
      %v2285 = vld [vmem:[#allocation4 + $0xe8] sm:$0xff]
      %v2286 = vld [vmem:[#allocation4 + $0xf0] sm:$0xff]
      %v2287 = vld [vmem:[#allocation4 + $0xf8] sm:$0xff]
      %v2288 = vld [vmem:[%s2] sm:$0xff]
      %v2289 = vld [vmem:[%s2 + $0x8] sm:$0xff]
      %v2290 = vld [vmem:[%s2 + $0x10] sm:$0xff]
      %v2291 = vld [vmem:[%s2 + $0x18] sm:$0xff]
      %v2292 = vld [vmem:[%s2 + $0x20] sm:$0xff]
      %v2293 = vld [vmem:[%s2 + $0x28] sm:$0xff]
      %v2294 = vld [vmem:[%s2 + $0x30] sm:$0xff]
      %v2295 = vld [vmem:[%s2 + $0x38] sm:$0xff]
      %v2296 = vld [vmem:[%s2 + $0x40] sm:$0xff]
      %vm2297 = vcmask 588800
      %v2299 = vsel %vm2297, %v2256, 0
      %v2302 = vsel %vm2297, %v2257, 0
      %v2305 = vsel %vm2297, %v2258, 0
      %v2308 = vsel %vm2297, %v2259, 0
      %v2311 = vsel %vm2297, %v2260, 0
      %v2314 = vsel %vm2297, %v2261, 0
      %v2317 = vsel %vm2297, %v2262, 0
      %v2320 = vsel %vm2297, %v2263, 0
      %v2323 = vsel %vm2297, %v2264, 0
      %v2326 = vsel %vm2297, %v2265, 0
      %v2329 = vsel %vm2297, %v2266, 0
      %v2332 = vsel %vm2297, %v2267, 0
      %v2335 = vsel %vm2297, %v2268, 0
      %v2338 = vsel %vm2297, %v2269, 0
      %v2341 = vsel %vm2297, %v2270, 0
      %v2344 = vsel %vm2297, %v2271, 0
      %v2347 = vsel %vm2297, %v2272, 0
      %v2350 = vsel %vm2297, %v2273, 0
      %v2353 = vsel %vm2297, %v2274, 0
      %v2356 = vsel %vm2297, %v2275, 0
      %v2359 = vsel %vm2297, %v2276, 0
      %v2362 = vsel %vm2297, %v2277, 0
      %v2365 = vsel %vm2297, %v2278, 0
      %v2368 = vsel %vm2297, %v2279, 0
      %v2371 = vsel %vm2297, %v2280, 0
      %v2374 = vsel %vm2297, %v2281, 0
      %v2377 = vsel %vm2297, %v2282, 0
      %v2380 = vsel %vm2297, %v2283, 0
      %v2383 = vsel %vm2297, %v2284, 0
      %v2386 = vsel %vm2297, %v2285, 0
      %v2389 = vsel %vm2297, %v2286, 0
      %v2392 = vsel %vm2297, %v2287, 0
      %2394 = vmatprep.subr.mxu0 0.0
      %2395 = vmatpush1.msra.mxu0 %v2288
      %2396 = vmatprep.subr.mxu0 0.0
      %2397 = vmatpush1.msra.mxu0 %v2289
      %2398 = vmatprep.subr.mxu0 0.0
      %2399 = vmatpush1.msra.mxu0 %v2290
      %2400 = vmatprep.subr.mxu0 0.0
      %2401 = vmatpush1.msra.mxu0 %v2291
      %2402 = vmatprep.subr.mxu0 0.0
      %2403 = vmatpush1.msra.mxu0 %v2292
      %2404 = vmatprep.subr.mxu0 0.0
      %2405 = vmatpush1.msra.mxu0 %v2293
      %2406 = vmatprep.subr.mxu0 0.0
      %2407 = vmatpush1.msra.mxu0 %v2294
      %2408 = vmatprep.subr.mxu0 0.0
      %2409 = vmatpush1.msra.mxu0 %v2295
      %2410 = vmatprep.subr.mxu0 0.0
      %2411 = vmatpush1.msra.mxu0 %v2296
      %2412 = vmatprep.subr.mxu0 0.0
      %2413 = vmatpush1.msra.mxu0 0.0
      %2414 = vmatprep.subr.mxu0 0.0
      %2415 = vmatpush1.msra.mxu0 0.0
      %2416 = vmatprep.subr.mxu0 0.0
      %2417 = vmatpush1.msra.mxu0 0.0
      %2418 = vmatprep.subr.mxu0 0.0
      %2419 = vmatpush1.msra.mxu0 0.0
      %2420 = vmatprep.subr.mxu0 0.0
      %2421 = vmatpush1.msra.mxu0 0.0
      %2422 = vmatprep.subr.mxu0 0.0
      %2423 = vmatpush1.msra.mxu0 0.0
      %2424 = vmatprep.subr.mxu0 0.0
      %2425 = vmatpush1.msra.mxu0 0.0
      %2426 = vmatprep.subr.mxu0 0.0
      %2427 = vmatpush1.msra.mxu0 0.0
      %2428 = vmatprep.subr.mxu0 0.0
      %2429 = vmatpush1.msra.mxu0 0.0
      %2430 = vmatprep.subr.mxu0 0.0
      %2431 = vmatpush1.msra.mxu0 0.0
      %2432 = vmatprep.subr.mxu0 0.0
      %2433 = vmatpush1.msra.mxu0 0.0
      %2434 = vmatprep.subr.mxu0 0.0
      %2435 = vmatpush1.msra.mxu0 0.0
      %2436 = vmatprep.subr.mxu0 0.0
      %2437 = vmatpush1.msra.mxu0 0.0
      %2438 = vmatprep.subr.mxu0 0.0
      %2439 = vmatpush1.msra.mxu0 0.0
      %2440 = vmatprep.subr.mxu0 0.0
      %2441 = vmatpush1.msra.mxu0 0.0
      %2442 = vmatprep.subr.mxu0 0.0
      %2443 = vmatpush1.msra.mxu0 0.0
      %2444 = vmatprep.subr.mxu0 0.0
      %2445 = vmatpush1.msra.mxu0 0.0
      %2446 = vmatprep.subr.mxu0 0.0
      %2447 = vmatpush1.msra.mxu0 0.0
      %2448 = vmatprep.subr.mxu0 0.0
      %2449 = vmatpush1.msra.mxu0 0.0
      %2450 = vmatprep.subr.mxu0 0.0
      %2451 = vmatpush1.msra.mxu0 0.0
      %2452 = vmatprep.subr.mxu0 0.0
      %2453 = vmatpush1.msra.mxu0 0.0
      %2454 = vmatprep.subr.mxu0 0.0
      %2455 = vmatpush1.msra.mxu0 0.0
      %2456 = vmatprep.subr.mxu0 0.0
      %2457 = vmatpush1.msra.mxu0 0.0
      %2458 = vmatprep.mubr.f32.mxu0 0.0
      %2459 = vmatmul.mubr.f32.gmra.mrb[0].mxu0 %v2299
      %v2460 = vpop.f32.mrb[0].mxu0
      %v2461 = vadd.f32 0.0, %v2460
      %v2462 = vpop.f32.mrb[0].mxu0
      %2463 = vmatprep.mubr.f32.mxu0 0.0
      %2464 = vmatmul.mubr.f32.gmra.mrb[0].mxu0 %v2302
      %v2465 = vpop.f32.mrb[0].mxu0
      %v2466 = vadd.f32 0.0, %v2465
      %v2467 = vpop.f32.mrb[0].mxu0
      %2468 = vmatprep.mubr.f32.mxu0 0.0
      %2469 = vmatmul.mubr.f32.gmra.mrb[0].mxu0 %v2305
      %v2470 = vpop.f32.mrb[0].mxu0
      %v2471 = vadd.f32 0.0, %v2470
      %v2472 = vpop.f32.mrb[0].mxu0
      %2473 = vmatprep.mubr.f32.mxu0 0.0
      %2474 = vmatmul.mubr.f32.gmra.mrb[0].mxu0 %v2308
      %v2475 = vpop.f32.mrb[0].mxu0
      %v2476 = vadd.f32 0.0, %v2475
      %v2477 = vpop.f32.mrb[0].mxu0
      %2478 = vmatprep.mubr.f32.mxu0 0.0
      %2479 = vmatmul.mubr.f32.gmra.mrb[0].mxu0 %v2311
      %v2480 = vpop.f32.mrb[0].mxu0
      %v2481 = vadd.f32 0.0, %v2480
      %v2482 = vpop.f32.mrb[0].mxu0
      %2483 = vmatprep.mubr.f32.mxu0 0.0
      %2484 = vmatmul.mubr.f32.gmra.mrb[0].mxu0 %v2314
      %v2485 = vpop.f32.mrb[0].mxu0
      %v2486 = vadd.f32 0.0, %v2485
      %v2487 = vpop.f32.mrb[0].mxu0
      %2488 = vmatprep.mubr.f32.mxu0 0.0
      %2489 = vmatmul.mubr.f32.gmra.mrb[0].mxu0 %v2317
      %v2490 = vpop.f32.mrb[0].mxu0
      %v2491 = vadd.f32 0.0, %v2490
      %v2492 = vpop.f32.mrb[0].mxu0
      %2493 = vmatprep.mubr.f32.mxu0 0.0
      %2494 = vmatmul.mubr.f32.gmra.mrb[0].mxu0 %v2320
      %v2495 = vpop.f32.mrb[0].mxu0
      %v2496 = vadd.f32 0.0, %v2495
      %v2497 = vpop.f32.mrb[0].mxu0
      %2498 = vmatprep.mubr.f32.mxu0 0.0
      %2499 = vmatmul.mubr.f32.gmra.mrb[0].mxu0 %v2323
      %v2500 = vpop.f32.mrb[0].mxu0
      %v2501 = vadd.f32 0.0, %v2500
      %v2502 = vpop.f32.mrb[0].mxu0
      %2503 = vmatprep.mubr.f32.mxu0 0.0
      %2504 = vmatmul.mubr.f32.gmra.mrb[0].mxu0 %v2326
      %v2505 = vpop.f32.mrb[0].mxu0
      %v2506 = vadd.f32 0.0, %v2505
      %v2507 = vpop.f32.mrb[0].mxu0
      %2508 = vmatprep.mubr.f32.mxu0 0.0
      %2509 = vmatmul.mubr.f32.gmra.mrb[0].mxu0 %v2329
      %v2510 = vpop.f32.mrb[0].mxu0
      %v2511 = vadd.f32 0.0, %v2510
      %v2512 = vpop.f32.mrb[0].mxu0
      %2513 = vmatprep.mubr.f32.mxu0 0.0
      %2514 = vmatmul.mubr.f32.gmra.mrb[0].mxu0 %v2332
      %v2515 = vpop.f32.mrb[0].mxu0
      %v2516 = vadd.f32 0.0, %v2515
      %v2517 = vpop.f32.mrb[0].mxu0
      %2518 = vmatprep.mubr.f32.mxu0 0.0
      %2519 = vmatmul.mubr.f32.gmra.mrb[0].mxu0 %v2335
      %v2520 = vpop.f32.mrb[0].mxu0
      %v2521 = vadd.f32 0.0, %v2520
      %v2522 = vpop.f32.mrb[0].mxu0
      %2523 = vmatprep.mubr.f32.mxu0 0.0
      %2524 = vmatmul.mubr.f32.gmra.mrb[0].mxu0 %v2338
      %v2525 = vpop.f32.mrb[0].mxu0
      %v2526 = vadd.f32 0.0, %v2525
      %v2527 = vpop.f32.mrb[0].mxu0
      %2528 = vmatprep.mubr.f32.mxu0 0.0
      %2529 = vmatmul.mubr.f32.gmra.mrb[0].mxu0 %v2341
      %v2530 = vpop.f32.mrb[0].mxu0
      %v2531 = vadd.f32 0.0, %v2530
      %v2532 = vpop.f32.mrb[0].mxu0
      %2533 = vmatprep.mubr.f32.mxu0 0.0
      %2534 = vmatmul.mubr.f32.gmra.mrb[0].mxu0 %v2344
      %v2535 = vpop.f32.mrb[0].mxu0
      %v2536 = vadd.f32 0.0, %v2535
      %v2537 = vpop.f32.mrb[0].mxu0
      %2538 = vmatprep.mubr.f32.mxu0 0.0
      %2539 = vmatmul.mubr.f32.gmra.mrb[0].mxu0 %v2347
      %v2540 = vpop.f32.mrb[0].mxu0
      %v2541 = vadd.f32 0.0, %v2540
      %v2542 = vpop.f32.mrb[0].mxu0
      %2543 = vmatprep.mubr.f32.mxu0 0.0
      %2544 = vmatmul.mubr.f32.gmra.mrb[0].mxu0 %v2350
      %v2545 = vpop.f32.mrb[0].mxu0
      %v2546 = vadd.f32 0.0, %v2545
      %v2547 = vpop.f32.mrb[0].mxu0
      %2548 = vmatprep.mubr.f32.mxu0 0.0
      %2549 = vmatmul.mubr.f32.gmra.mrb[0].mxu0 %v2353
      %v2550 = vpop.f32.mrb[0].mxu0
      %v2551 = vadd.f32 0.0, %v2550
      %v2552 = vpop.f32.mrb[0].mxu0
      %2553 = vmatprep.mubr.f32.mxu0 0.0
      %2554 = vmatmul.mubr.f32.gmra.mrb[0].mxu0 %v2356
      %v2555 = vpop.f32.mrb[0].mxu0
      %v2556 = vadd.f32 0.0, %v2555
      %v2557 = vpop.f32.mrb[0].mxu0
      %2558 = vmatprep.mubr.f32.mxu0 0.0
      %2559 = vmatmul.mubr.f32.gmra.mrb[0].mxu0 %v2359
      %v2560 = vpop.f32.mrb[0].mxu0
      %v2561 = vadd.f32 0.0, %v2560
      %v2562 = vpop.f32.mrb[0].mxu0
      %2563 = vmatprep.mubr.f32.mxu0 0.0
      %2564 = vmatmul.mubr.f32.gmra.mrb[0].mxu0 %v2362
      %v2565 = vpop.f32.mrb[0].mxu0
      %v2566 = vadd.f32 0.0, %v2565
      %v2567 = vpop.f32.mrb[0].mxu0
      %2568 = vmatprep.mubr.f32.mxu0 0.0
      %2569 = vmatmul.mubr.f32.gmra.mrb[0].mxu0 %v2365
      %v2570 = vpop.f32.mrb[0].mxu0
      %v2571 = vadd.f32 0.0, %v2570
      %v2572 = vpop.f32.mrb[0].mxu0
      %2573 = vmatprep.mubr.f32.mxu0 0.0
      %2574 = vmatmul.mubr.f32.gmra.mrb[0].mxu0 %v2368
      %v2575 = vpop.f32.mrb[0].mxu0
      %v2576 = vadd.f32 0.0, %v2575
      %v2577 = vpop.f32.mrb[0].mxu0
      %2578 = vmatprep.mubr.f32.mxu0 0.0
      %2579 = vmatmul.mubr.f32.gmra.mrb[0].mxu0 %v2371
      %v2580 = vpop.f32.mrb[0].mxu0
      %v2581 = vadd.f32 0.0, %v2580
      %v2582 = vpop.f32.mrb[0].mxu0
      %2583 = vmatprep.mubr.f32.mxu0 0.0
      %2584 = vmatmul.mubr.f32.gmra.mrb[0].mxu0 %v2374
      %v2585 = vpop.f32.mrb[0].mxu0
      %v2586 = vadd.f32 0.0, %v2585
      %v2587 = vpop.f32.mrb[0].mxu0
      %2588 = vmatprep.mubr.f32.mxu0 0.0
      %2589 = vmatmul.mubr.f32.gmra.mrb[0].mxu0 %v2377
      %v2590 = vpop.f32.mrb[0].mxu0
      %v2591 = vadd.f32 0.0, %v2590
      %v2592 = vpop.f32.mrb[0].mxu0
      %2593 = vmatprep.mubr.f32.mxu0 0.0
      %2594 = vmatmul.mubr.f32.gmra.mrb[0].mxu0 %v2380
      %v2595 = vpop.f32.mrb[0].mxu0
      %v2596 = vadd.f32 0.0, %v2595
      %v2597 = vpop.f32.mrb[0].mxu0
      %2598 = vmatprep.mubr.f32.mxu0 0.0
      %2599 = vmatmul.mubr.f32.gmra.mrb[0].mxu0 %v2383
      %v2600 = vpop.f32.mrb[0].mxu0
      %v2601 = vadd.f32 0.0, %v2600
      %v2602 = vpop.f32.mrb[0].mxu0
      %2603 = vmatprep.mubr.f32.mxu0 0.0
      %2604 = vmatmul.mubr.f32.gmra.mrb[0].mxu0 %v2386
      %v2605 = vpop.f32.mrb[0].mxu0
      %v2606 = vadd.f32 0.0, %v2605
      %v2607 = vpop.f32.mrb[0].mxu0
      %2608 = vmatprep.mubr.f32.mxu0 0.0
      %2609 = vmatmul.mubr.f32.gmra.mrb[0].mxu0 %v2389
      %v2610 = vpop.f32.mrb[0].mxu0
      %v2611 = vadd.f32 0.0, %v2610
      %v2612 = vpop.f32.mrb[0].mxu0
      %2613 = vmatprep.mubr.f32.mxu0 0.0
      %2614 = vmatmul.mubr.f32.gmra.mrb[0].mxu0 %v2392
      %v2615 = vpop.f32.mrb[0].mxu0
      %v2616 = vadd.f32 0.0, %v2615
      %v2617 = vpop.f32.mrb[0].mxu0
      %2618 = vdwg.mxu0
      %v2619 = vld [vmem:[%s3] sm:$0x1]
      %v2621 = vlaneseq
      %v2622 = vshrl.u32 %v2621, 7
      %v2623 = vsub.s32 0, %v2622
      %v2624 = vrot.slane %v2619, %v2623
      %v2626 = vmul.f32 %v2461, %v2624
      %v2627 = vmul.f32 %v2466, %v2624
      %v2628 = vmul.f32 %v2471, %v2624
      %v2629 = vmul.f32 %v2476, %v2624
      %v2630 = vmul.f32 %v2481, %v2624
      %v2631 = vmul.f32 %v2486, %v2624
      %v2632 = vmul.f32 %v2491, %v2624
      %v2633 = vmul.f32 %v2496, %v2624
      %v2634 = vmul.f32 %v2501, %v2624
      %v2635 = vmul.f32 %v2506, %v2624
      %v2636 = vmul.f32 %v2511, %v2624
      %v2637 = vmul.f32 %v2516, %v2624
      %v2638 = vmul.f32 %v2521, %v2624
      %v2639 = vmul.f32 %v2526, %v2624
      %v2640 = vmul.f32 %v2531, %v2624
      %v2641 = vmul.f32 %v2536, %v2624
      %v2642 = vmul.f32 %v2541, %v2624
      %v2643 = vmul.f32 %v2546, %v2624
      %v2644 = vmul.f32 %v2551, %v2624
      %v2645 = vmul.f32 %v2556, %v2624
      %v2646 = vmul.f32 %v2561, %v2624
      %v2647 = vmul.f32 %v2566, %v2624
      %v2648 = vmul.f32 %v2571, %v2624
      %v2649 = vmul.f32 %v2576, %v2624
      %v2650 = vmul.f32 %v2581, %v2624
      %v2651 = vmul.f32 %v2586, %v2624
      %v2652 = vmul.f32 %v2591, %v2624
      %v2653 = vmul.f32 %v2596, %v2624
      %v2654 = vmul.f32 %v2601, %v2624
      %v2655 = vmul.f32 %v2606, %v2624
      %v2656 = vmul.f32 %v2611, %v2624
      %v2657 = vmul.f32 %v2616, %v2624
      %v2658 = vld [vmem:[%s4] sm:$0x1]
      %v2660 = vlaneseq
      %v2661 = vshrl.u32 %v2660, 7
      %v2662 = vsub.s32 0, %v2661
      %v2663 = vrot.slane %v2658, %v2662
      %v2665 = vadd.f32 %v2626, %v2663
      %v2666 = vadd.f32 %v2627, %v2663
      %v2667 = vadd.f32 %v2628, %v2663
      %v2668 = vadd.f32 %v2629, %v2663
      %v2669 = vadd.f32 %v2630, %v2663
      %v2670 = vadd.f32 %v2631, %v2663
      %v2671 = vadd.f32 %v2632, %v2663
      %v2672 = vadd.f32 %v2633, %v2663
      %v2673 = vadd.f32 %v2634, %v2663
      %v2674 = vadd.f32 %v2635, %v2663
      %v2675 = vadd.f32 %v2636, %v2663
      %v2676 = vadd.f32 %v2637, %v2663
      %v2677 = vadd.f32 %v2638, %v2663
      %v2678 = vadd.f32 %v2639, %v2663
      %v2679 = vadd.f32 %v2640, %v2663
      %v2680 = vadd.f32 %v2641, %v2663
      %v2681 = vadd.f32 %v2642, %v2663
      %v2682 = vadd.f32 %v2643, %v2663
      %v2683 = vadd.f32 %v2644, %v2663
      %v2684 = vadd.f32 %v2645, %v2663
      %v2685 = vadd.f32 %v2646, %v2663
      %v2686 = vadd.f32 %v2647, %v2663
      %v2687 = vadd.f32 %v2648, %v2663
      %v2688 = vadd.f32 %v2649, %v2663
      %v2689 = vadd.f32 %v2650, %v2663
      %v2690 = vadd.f32 %v2651, %v2663
      %v2691 = vadd.f32 %v2652, %v2663
      %v2692 = vadd.f32 %v2653, %v2663
      %v2693 = vadd.f32 %v2654, %v2663
      %v2694 = vadd.f32 %v2655, %v2663
      %v2695 = vadd.f32 %v2656, %v2663
      %v2696 = vadd.f32 %v2657, %v2663
      %v2697 = vmax.f32 %v2665, 0.0
      %v2698 = vmax.f32 %v2666, 0.0
      %v2699 = vmax.f32 %v2667, 0.0
      %v2700 = vmax.f32 %v2668, 0.0
      %v2701 = vmax.f32 %v2669, 0.0
      %v2702 = vmax.f32 %v2670, 0.0
      %v2703 = vmax.f32 %v2671, 0.0
      %v2704 = vmax.f32 %v2672, 0.0
      %v2705 = vmax.f32 %v2673, 0.0
      %v2706 = vmax.f32 %v2674, 0.0
      %v2707 = vmax.f32 %v2675, 0.0
      %v2708 = vmax.f32 %v2676, 0.0
      %v2709 = vmax.f32 %v2677, 0.0
      %v2710 = vmax.f32 %v2678, 0.0
      %v2711 = vmax.f32 %v2679, 0.0
      %v2712 = vmax.f32 %v2680, 0.0
      %v2713 = vmax.f32 %v2681, 0.0
      %v2714 = vmax.f32 %v2682, 0.0
      %v2715 = vmax.f32 %v2683, 0.0
      %v2716 = vmax.f32 %v2684, 0.0
      %v2717 = vmax.f32 %v2685, 0.0
      %v2718 = vmax.f32 %v2686, 0.0
      %v2719 = vmax.f32 %v2687, 0.0
      %v2720 = vmax.f32 %v2688, 0.0
      %v2721 = vmax.f32 %v2689, 0.0
      %v2722 = vmax.f32 %v2690, 0.0
      %v2723 = vmax.f32 %v2691, 0.0
      %v2724 = vmax.f32 %v2692, 0.0
      %v2725 = vmax.f32 %v2693, 0.0
      %v2726 = vmax.f32 %v2694, 0.0
      %v2727 = vmax.f32 %v2695, 0.0
      %v2728 = vmax.f32 %v2696, 0.0
      %2729 = vst.msk [vmem:[#allocation3] sm:$0xff] %vm326, 0.0
      %2730 = vst.msk [vmem:[#allocation3 + $0x8] sm:$0xff] %vm326, 0.0
      %vm2731 = vcmask 62464
      %2732 = vst.msk [vmem:[#allocation3 + $0x10] sm:$0x3f] %vm2731, 0.0
      %2733 = vst.msk [vmem:[#allocation3 + $0x18] sm:$0xff] %vm326, 0.0
      %2734 = vst.msk [vmem:[#allocation3 + $0x20] sm:$0xff] %vm326, 0.0
      %2735 = vst.msk [vmem:[#allocation3 + $0x28] sm:$0x3f] %vm2731, 0.0
      %2736 = vst.msk [vmem:[#allocation3 + $0x30] sm:$0xff] %vm326, 0.0
      %2737 = vst.msk [vmem:[#allocation3 + $0x38] sm:$0xff] %vm326, 0.0
      %2738 = vst.msk [vmem:[#allocation3 + $0x40] sm:$0x3f] %vm2731, 0.0
      %2739 = vst.msk [vmem:[#allocation3 + $0x48] sm:$0xff] %vm326, 0.0
      %2740 = vst.msk [vmem:[#allocation3 + $0x50] sm:$0xff] %vm326, 0.0
      %2741 = vst.msk [vmem:[#allocation3 + $0x58] sm:$0x3f] %vm2731, 0.0
      %2742 = vst.msk [vmem:[#allocation3 + $0x60] sm:$0xff] %vm326, 0.0
      %2743 = vst.msk [vmem:[#allocation3 + $0x68] sm:$0xff] %vm326, 0.0
      %2744 = vst.msk [vmem:[#allocation3 + $0x70] sm:$0x3f] %vm2731, 0.0
      %2745 = vst.msk [vmem:[#allocation3 + $0x78] sm:$0xff] %vm326, 0.0
      %2746 = vst.msk [vmem:[#allocation3 + $0x80] sm:$0xff] %vm326, 0.0
      %2747 = vst.msk [vmem:[#allocation3 + $0x88] sm:$0x3f] %vm2731, 0.0
      %2748 = vst.msk [vmem:[#allocation3 + $0x90] sm:$0xff] %vm326, 0.0
      %2749 = vst.msk [vmem:[#allocation3 + $0x98] sm:$0xff] %vm326, 0.0
      %2750 = vst.msk [vmem:[#allocation3 + $0xa0] sm:$0x3f] %vm2731, 0.0
      %2751 = vst.msk [vmem:[#allocation3 + $0xa8] sm:$0xff] %vm326, 0.0
      %2752 = vst.msk [vmem:[#allocation3 + $0xb0] sm:$0xff] %vm326, 0.0
      %2753 = vst.msk [vmem:[#allocation3 + $0xb8] sm:$0x3f] %vm2731, 0.0
      %2754 = vst.msk [vmem:[#allocation3 + $0xc0] sm:$0xff] %vm326, 0.0
      %2755 = vst.msk [vmem:[#allocation3 + $0xc8] sm:$0xff] %vm326, 0.0
      %2756 = vst.msk [vmem:[#allocation3 + $0xd0] sm:$0x3f] %vm2731, 0.0
      %2757 = vst.msk [vmem:[#allocation3 + $0xd8] sm:$0xff] %vm326, 0.0
      %2758 = vst.msk [vmem:[#allocation3 + $0xe0] sm:$0xff] %vm326, 0.0
      %2759 = vst.msk [vmem:[#allocation3 + $0xe8] sm:$0x3f] %vm2731, 0.0
      %2760 = vst.msk [vmem:[#allocation3 + $0xf0] sm:$0xff] %vm326, 0.0
      %2761 = vst.msk [vmem:[#allocation3 + $0xf8] sm:$0xff] %vm326, 0.0
      %2762 = vst.msk [vmem:[#allocation3 + $0x100] sm:$0x3f] %vm2731, 0.0
      %2763 = vst.msk [vmem:[#allocation3 + $0x108] sm:$0xff] %vm326, 0.0
      %2764 = vst.msk [vmem:[#allocation3 + $0x110] sm:$0xff] %vm326, 0.0
      %2765 = vst.msk [vmem:[#allocation3 + $0x118] sm:$0x3f] %vm2731, 0.0
      %2766 = vst.msk [vmem:[#allocation3 + $0x120] sm:$0xff] %vm326, 0.0
      %2767 = vst.msk [vmem:[#allocation3 + $0x128] sm:$0xff] %vm326, 0.0
      %2768 = vst.msk [vmem:[#allocation3 + $0x130] sm:$0x3f] %vm2731, 0.0
      %2769 = vst.msk [vmem:[#allocation3 + $0x138] sm:$0xff] %vm326, 0.0
      %2770 = vst.msk [vmem:[#allocation3 + $0x140] sm:$0xff] %vm326, 0.0
      %2771 = vst.msk [vmem:[#allocation3 + $0x148] sm:$0x3f] %vm2731, 0.0
      %2772 = vst.msk [vmem:[#allocation3 + $0x150] sm:$0xff] %vm326, 0.0
      %2773 = vst.msk [vmem:[#allocation3 + $0x158] sm:$0xff] %vm326, 0.0
      %2774 = vst.msk [vmem:[#allocation3 + $0x160] sm:$0x3f] %vm2731, 0.0
      %2775 = vst.msk [vmem:[#allocation3 + $0x168] sm:$0xff] %vm326, 0.0
      %2776 = vst.msk [vmem:[#allocation3 + $0x170] sm:$0xff] %vm326, 0.0
      %2777 = vst.msk [vmem:[#allocation3 + $0x178] sm:$0x3f] %vm2731, 0.0
      %2778 = vst.msk [vmem:[#allocation3 + $0x180] sm:$0xff] %vm326, 0.0
      %2779 = vst.msk [vmem:[#allocation3 + $0x188] sm:$0xff] %vm326, 0.0
      %2780 = vst.msk [vmem:[#allocation3 + $0x190] sm:$0x3f] %vm2731, 0.0
      %2781 = vst.msk [vmem:[#allocation3 + $0x198] sm:$0xff] %vm326, 0.0
      %2782 = vst.msk [vmem:[#allocation3 + $0x1a0] sm:$0xff] %vm326, 0.0
      %2783 = vst.msk [vmem:[#allocation3 + $0x1a8] sm:$0x3f] %vm2731, 0.0
      %2784 = vst.msk [vmem:[#allocation3 + $0x1b0] sm:$0xff] %vm326, 0.0
      %2785 = vst.msk [vmem:[#allocation3 + $0x1b8] sm:$0xff] %vm326, 0.0
      %2786 = vst.msk [vmem:[#allocation3 + $0x1c0] sm:$0x3f] %vm2731, 0.0
      %2787 = vst.msk [vmem:[#allocation3 + $0x1c8] sm:$0xff] %vm326, 0.0
      %2788 = vst.msk [vmem:[#allocation3 + $0x1d0] sm:$0xff] %vm326, 0.0
      %2789 = vst.msk [vmem:[#allocation3 + $0x1d8] sm:$0x3f] %vm2731, 0.0
      %2790 = vst.msk [vmem:[#allocation3 + $0x1e0] sm:$0xff] %vm326, 0.0
      %2791 = vst.msk [vmem:[#allocation3 + $0x1e8] sm:$0xff] %vm326, 0.0
      %2792 = vst.msk [vmem:[#allocation3 + $0x1f0] sm:$0x3f] %vm2731, 0.0
      %2793 = vst.msk [vmem:[#allocation3 + $0x1f8] sm:$0xff] %vm326, 0.0
      %2794 = vst.msk [vmem:[#allocation3 + $0x200] sm:$0xff] %vm326, 0.0
      %2795 = vst.msk [vmem:[#allocation3 + $0x208] sm:$0x3f] %vm2731, 0.0
      %s2796 = scalar_lea.vmem [#allocation3], 72
      %2797 = vst.msk [vmem:[%s2796 + $0x3] sm:$0xff] %vm326, %v2697
      %2798 = vst.msk [vmem:[%s2796 + $0xb] sm:$0xff] %vm326, %v2698
      %2799 = vst.msk [vmem:[%s2796 + $0x1b] sm:$0xff] %vm326, %v2699
      %2800 = vst.msk [vmem:[%s2796 + $0x23] sm:$0xff] %vm326, %v2700
      %2801 = vst.msk [vmem:[%s2796 + $0x33] sm:$0xff] %vm326, %v2701
      %2802 = vst.msk [vmem:[%s2796 + $0x3b] sm:$0xff] %vm326, %v2702
      %2803 = vst.msk [vmem:[%s2796 + $0x4b] sm:$0xff] %vm326, %v2703
      %2804 = vst.msk [vmem:[%s2796 + $0x53] sm:$0xff] %vm326, %v2704
      %2805 = vst.msk [vmem:[%s2796 + $0x63] sm:$0xff] %vm326, %v2705
      %2806 = vst.msk [vmem:[%s2796 + $0x6b] sm:$0xff] %vm326, %v2706
      %2807 = vst.msk [vmem:[%s2796 + $0x7b] sm:$0xff] %vm326, %v2707
      %2808 = vst.msk [vmem:[%s2796 + $0x83] sm:$0xff] %vm326, %v2708
      %2809 = vst.msk [vmem:[%s2796 + $0x93] sm:$0xff] %vm326, %v2709
      %2810 = vst.msk [vmem:[%s2796 + $0x9b] sm:$0xff] %vm326, %v2710
      %2811 = vst.msk [vmem:[%s2796 + $0xab] sm:$0xff] %vm326, %v2711
      %2812 = vst.msk [vmem:[%s2796 + $0xb3] sm:$0xff] %vm326, %v2712
      %2813 = vst.msk [vmem:[%s2796 + $0xc3] sm:$0xff] %vm326, %v2713
      %2814 = vst.msk [vmem:[%s2796 + $0xcb] sm:$0xff] %vm326, %v2714
      %2815 = vst.msk [vmem:[%s2796 + $0xdb] sm:$0xff] %vm326, %v2715
      %2816 = vst.msk [vmem:[%s2796 + $0xe3] sm:$0xff] %vm326, %v2716
      %2817 = vst.msk [vmem:[%s2796 + $0xf3] sm:$0xff] %vm326, %v2717
      %2818 = vst.msk [vmem:[%s2796 + $0xfb] sm:$0xff] %vm326, %v2718
      %2819 = vst.msk [vmem:[%s2796 + $0x10b] sm:$0xff] %vm326, %v2719
      %2820 = vst.msk [vmem:[%s2796 + $0x113] sm:$0xff] %vm326, %v2720
      %2821 = vst.msk [vmem:[%s2796 + $0x123] sm:$0xff] %vm326, %v2721
      %2822 = vst.msk [vmem:[%s2796 + $0x12b] sm:$0xff] %vm326, %v2722
      %2823 = vst.msk [vmem:[%s2796 + $0x13b] sm:$0xff] %vm326, %v2723
      %2824 = vst.msk [vmem:[%s2796 + $0x143] sm:$0xff] %vm326, %v2724
      %2825 = vst.msk [vmem:[%s2796 + $0x153] sm:$0xff] %vm326, %v2725
      %2826 = vst.msk [vmem:[%s2796 + $0x15b] sm:$0xff] %vm326, %v2726
      %2827 = vst.msk [vmem:[%s2796 + $0x16b] sm:$0xff] %vm326, %v2727
      %2828 = vst.msk [vmem:[%s2796 + $0x173] sm:$0xff] %vm326, %v2728
      %v2829 = vld [vmem:[#allocation3] sm:$0xff]
      %v2830 = vld [vmem:[#allocation3 + $0x8] sm:$0xff]
      %v2831 = vld [vmem:[#allocation3 + $0x18] sm:$0xff]
      %v2832 = vld [vmem:[#allocation3 + $0x20] sm:$0xff]
      %v2833 = vld [vmem:[#allocation3 + $0x30] sm:$0xff]
      %v2834 = vld [vmem:[#allocation3 + $0x38] sm:$0xff]
      %v2835 = vld [vmem:[#allocation3 + $0x48] sm:$0xff]
      %v2836 = vld [vmem:[#allocation3 + $0x50] sm:$0xff]
      %v2837 = vld [vmem:[#allocation3 + $0x60] sm:$0xff]
      %v2838 = vld [vmem:[#allocation3 + $0x68] sm:$0xff]
      %v2839 = vld [vmem:[#allocation3 + $0x78] sm:$0xff]
      %v2840 = vld [vmem:[#allocation3 + $0x80] sm:$0xff]
      %v2841 = vld [vmem:[#allocation3 + $0x90] sm:$0xff]
      %v2842 = vld [vmem:[#allocation3 + $0x98] sm:$0xff]
      %v2843 = vld [vmem:[#allocation3 + $0xa8] sm:$0xff]
      %v2844 = vld [vmem:[#allocation3 + $0xb0] sm:$0xff]
      %v2845 = vld [vmem:[#allocation3 + $0xc0] sm:$0xff]
      %v2846 = vld [vmem:[#allocation3 + $0xc8] sm:$0xff]
      %v2847 = vld [vmem:[#allocation3 + $0xd8] sm:$0xff]
      %v2848 = vld [vmem:[#allocation3 + $0xe0] sm:$0xff]
      %v2849 = vld [vmem:[#allocation3 + $0xf0] sm:$0xff]
      %v2850 = vld [vmem:[#allocation3 + $0xf8] sm:$0xff]
      %v2851 = vld [vmem:[#allocation3 + $0x108] sm:$0xff]
      %v2852 = vld [vmem:[#allocation3 + $0x110] sm:$0xff]
      %v2853 = vld [vmem:[#allocation3 + $0x120] sm:$0xff]
      %v2854 = vld [vmem:[#allocation3 + $0x128] sm:$0xff]
      %v2855 = vld [vmem:[#allocation3 + $0x138] sm:$0xff]
      %v2856 = vld [vmem:[#allocation3 + $0x140] sm:$0xff]
      %v2857 = vld [vmem:[#allocation3 + $0x150] sm:$0xff]
      %v2858 = vld [vmem:[#allocation3 + $0x158] sm:$0xff]
      %v2859 = vld [vmem:[#allocation3 + $0x168] sm:$0xff]
      %v2860 = vld [vmem:[#allocation3 + $0x170] sm:$0xff]
      %2861 = vst.msk [vmem:[#allocation5] sm:$0xff] %vm326, %v2829
      %2862 = vst.msk [vmem:[#allocation5 + $0x8] sm:$0xff] %vm326, %v2830
      %2863 = vst.msk [vmem:[#allocation5 + $0x10] sm:$0xff] %vm326, %v2831
      %2864 = vst.msk [vmem:[#allocation5 + $0x18] sm:$0xff] %vm326, %v2832
      %2865 = vst.msk [vmem:[#allocation5 + $0x20] sm:$0xff] %vm326, %v2833
      %2866 = vst.msk [vmem:[#allocation5 + $0x28] sm:$0xff] %vm326, %v2834
      %2867 = vst.msk [vmem:[#allocation5 + $0x30] sm:$0xff] %vm326, %v2835
      %2868 = vst.msk [vmem:[#allocation5 + $0x38] sm:$0xff] %vm326, %v2836
      %2869 = vst.msk [vmem:[#allocation5 + $0x40] sm:$0xff] %vm326, %v2837
      %2870 = vst.msk [vmem:[#allocation5 + $0x48] sm:$0xff] %vm326, %v2838
      %2871 = vst.msk [vmem:[#allocation5 + $0x50] sm:$0xff] %vm326, %v2839
      %2872 = vst.msk [vmem:[#allocation5 + $0x58] sm:$0xff] %vm326, %v2840
      %2873 = vst.msk [vmem:[#allocation5 + $0x60] sm:$0xff] %vm326, %v2841
      %2874 = vst.msk [vmem:[#allocation5 + $0x68] sm:$0xff] %vm326, %v2842
      %2875 = vst.msk [vmem:[#allocation5 + $0x70] sm:$0xff] %vm326, %v2843
      %2876 = vst.msk [vmem:[#allocation5 + $0x78] sm:$0xff] %vm326, %v2844
      %2877 = vst.msk [vmem:[#allocation5 + $0x80] sm:$0xff] %vm326, %v2845
      %2878 = vst.msk [vmem:[#allocation5 + $0x88] sm:$0xff] %vm326, %v2846
      %2879 = vst.msk [vmem:[#allocation5 + $0x90] sm:$0xff] %vm326, %v2847
      %2880 = vst.msk [vmem:[#allocation5 + $0x98] sm:$0xff] %vm326, %v2848
      %2881 = vst.msk [vmem:[#allocation5 + $0xa0] sm:$0xff] %vm326, %v2849
      %2882 = vst.msk [vmem:[#allocation5 + $0xa8] sm:$0xff] %vm326, %v2850
      %2883 = vst.msk [vmem:[#allocation5 + $0xb0] sm:$0xff] %vm326, %v2851
      %2884 = vst.msk [vmem:[#allocation5 + $0xb8] sm:$0xff] %vm326, %v2852
      %2885 = vst.msk [vmem:[#allocation5 + $0xc0] sm:$0xff] %vm326, %v2853
      %2886 = vst.msk [vmem:[#allocation5 + $0xc8] sm:$0xff] %vm326, %v2854
      %2887 = vst.msk [vmem:[#allocation5 + $0xd0] sm:$0xff] %vm326, %v2855
      %2888 = vst.msk [vmem:[#allocation5 + $0xd8] sm:$0xff] %vm326, %v2856
      %2889 = vst.msk [vmem:[#allocation5 + $0xe0] sm:$0xff] %vm326, %v2857
      %2890 = vst.msk [vmem:[#allocation5 + $0xe8] sm:$0xff] %vm326, %v2858
      %2891 = vst.msk [vmem:[#allocation5 + $0xf0] sm:$0xff] %vm326, %v2859
      %2892 = vst.msk [vmem:[#allocation5 + $0xf8] sm:$0xff] %vm326, %v2860
      %v2893 = vld [vmem:[#allocation3 + $0x3] sm:$0xff]
      %v2894 = vld [vmem:[#allocation3 + $0xb] sm:$0xff]
      %v2895 = vld [vmem:[#allocation3 + $0x1b] sm:$0xff]
      %v2896 = vld [vmem:[#allocation3 + $0x23] sm:$0xff]
      %v2897 = vld [vmem:[#allocation3 + $0x33] sm:$0xff]
      %v2898 = vld [vmem:[#allocation3 + $0x3b] sm:$0xff]
      %v2899 = vld [vmem:[#allocation3 + $0x4b] sm:$0xff]
      %v2900 = vld [vmem:[#allocation3 + $0x53] sm:$0xff]
      %v2901 = vld [vmem:[#allocation3 + $0x63] sm:$0xff]
      %v2902 = vld [vmem:[#allocation3 + $0x6b] sm:$0xff]
      %v2903 = vld [vmem:[#allocation3 + $0x7b] sm:$0xff]
      %v2904 = vld [vmem:[#allocation3 + $0x83] sm:$0xff]
      %v2905 = vld [vmem:[#allocation3 + $0x93] sm:$0xff]
      %v2906 = vld [vmem:[#allocation3 + $0x9b] sm:$0xff]
      %v2907 = vld [vmem:[#allocation3 + $0xab] sm:$0xff]
      %v2908 = vld [vmem:[#allocation3 + $0xb3] sm:$0xff]
      %v2909 = vld [vmem:[#allocation3 + $0xc3] sm:$0xff]
      %v2910 = vld [vmem:[#allocation3 + $0xcb] sm:$0xff]
      %v2911 = vld [vmem:[#allocation3 + $0xdb] sm:$0xff]
      %v2912 = vld [vmem:[#allocation3 + $0xe3] sm:$0xff]
      %v2913 = vld [vmem:[#allocation3 + $0xf3] sm:$0xff]
      %v2914 = vld [vmem:[#allocation3 + $0xfb] sm:$0xff]
      %v2915 = vld [vmem:[#allocation3 + $0x10b] sm:$0xff]
      %v2916 = vld [vmem:[#allocation3 + $0x113] sm:$0xff]
      %v2917 = vld [vmem:[#allocation3 + $0x123] sm:$0xff]
      %v2918 = vld [vmem:[#allocation3 + $0x12b] sm:$0xff]
      %v2919 = vld [vmem:[#allocation3 + $0x13b] sm:$0xff]
      %v2920 = vld [vmem:[#allocation3 + $0x143] sm:$0xff]
      %v2921 = vld [vmem:[#allocation3 + $0x153] sm:$0xff]
      %v2922 = vld [vmem:[#allocation3 + $0x15b] sm:$0xff]
      %v2923 = vld [vmem:[#allocation3 + $0x16b] sm:$0xff]
      %v2924 = vld [vmem:[#allocation3 + $0x173] sm:$0xff]
      %2957 = vrot.lane.b32.xlu0 %v2893, 8
      %v2958 = vpop.permute.xlu0 %2957
      %2959 = vrot.lane.b32.xlu0 %v2894, 8
      %v2960 = vpop.permute.xlu0 %2959
      %2961 = vrot.lane.b32.xlu0 %v2895, 8
      %v2962 = vpop.permute.xlu0 %2961
      %2963 = vrot.lane.b32.xlu0 %v2896, 8
      %v2964 = vpop.permute.xlu0 %2963
      %2965 = vrot.lane.b32.xlu0 %v2897, 8
      %v2966 = vpop.permute.xlu0 %2965
      %2967 = vrot.lane.b32.xlu0 %v2898, 8
      %v2968 = vpop.permute.xlu0 %2967
      %2969 = vrot.lane.b32.xlu0 %v2899, 8
      %v2970 = vpop.permute.xlu0 %2969
      %2971 = vrot.lane.b32.xlu0 %v2900, 8
      %v2972 = vpop.permute.xlu0 %2971
      %2973 = vrot.lane.b32.xlu0 %v2901, 8
      %v2974 = vpop.permute.xlu0 %2973
      %2975 = vrot.lane.b32.xlu0 %v2902, 8
      %v2976 = vpop.permute.xlu0 %2975
      %2977 = vrot.lane.b32.xlu0 %v2903, 8
      %v2978 = vpop.permute.xlu0 %2977
      %2979 = vrot.lane.b32.xlu0 %v2904, 8
      %v2980 = vpop.permute.xlu0 %2979
      %2981 = vrot.lane.b32.xlu0 %v2905, 8
      %v2982 = vpop.permute.xlu0 %2981
      %2983 = vrot.lane.b32.xlu0 %v2906, 8
      %v2984 = vpop.permute.xlu0 %2983
      %2985 = vrot.lane.b32.xlu0 %v2907, 8
      %v2986 = vpop.permute.xlu0 %2985
      %2987 = vrot.lane.b32.xlu0 %v2908, 8
      %v2988 = vpop.permute.xlu0 %2987
      %2989 = vrot.lane.b32.xlu0 %v2909, 8
      %v2990 = vpop.permute.xlu0 %2989
      %2991 = vrot.lane.b32.xlu0 %v2910, 8
      %v2992 = vpop.permute.xlu0 %2991
      %2993 = vrot.lane.b32.xlu0 %v2911, 8
      %v2994 = vpop.permute.xlu0 %2993
      %2995 = vrot.lane.b32.xlu0 %v2912, 8
      %v2996 = vpop.permute.xlu0 %2995
      %2997 = vrot.lane.b32.xlu0 %v2913, 8
      %v2998 = vpop.permute.xlu0 %2997
      %2999 = vrot.lane.b32.xlu0 %v2914, 8
      %v3000 = vpop.permute.xlu0 %2999
      %3001 = vrot.lane.b32.xlu0 %v2915, 8
      %v3002 = vpop.permute.xlu0 %3001
      %3003 = vrot.lane.b32.xlu0 %v2916, 8
      %v3004 = vpop.permute.xlu0 %3003
      %3005 = vrot.lane.b32.xlu0 %v2917, 8
      %v3006 = vpop.permute.xlu0 %3005
      %3007 = vrot.lane.b32.xlu0 %v2918, 8
      %v3008 = vpop.permute.xlu0 %3007
      %3009 = vrot.lane.b32.xlu0 %v2919, 8
      %v3010 = vpop.permute.xlu0 %3009
      %3011 = vrot.lane.b32.xlu0 %v2920, 8
      %v3012 = vpop.permute.xlu0 %3011
      %3013 = vrot.lane.b32.xlu0 %v2921, 8
      %v3014 = vpop.permute.xlu0 %3013
      %3015 = vrot.lane.b32.xlu0 %v2922, 8
      %v3016 = vpop.permute.xlu0 %3015
      %3017 = vrot.lane.b32.xlu0 %v2923, 8
      %v3018 = vpop.permute.xlu0 %3017
      %3019 = vrot.lane.b32.xlu0 %v2924, 8
      %v3020 = vpop.permute.xlu0 %3019
      %3053 = vst.msk [vmem:[#allocation5] sm:$0xff] %vm871, %v2958
      %3054 = vst.msk [vmem:[#allocation5 + $0x8] sm:$0xff] %vm871, %v2960
      %3055 = vst.msk [vmem:[#allocation5 + $0x10] sm:$0xff] %vm871, %v2962
      %3056 = vst.msk [vmem:[#allocation5 + $0x18] sm:$0xff] %vm871, %v2964
      %3057 = vst.msk [vmem:[#allocation5 + $0x20] sm:$0xff] %vm871, %v2966
      %3058 = vst.msk [vmem:[#allocation5 + $0x28] sm:$0xff] %vm871, %v2968
      %3059 = vst.msk [vmem:[#allocation5 + $0x30] sm:$0xff] %vm871, %v2970
      %3060 = vst.msk [vmem:[#allocation5 + $0x38] sm:$0xff] %vm871, %v2972
      %3061 = vst.msk [vmem:[#allocation5 + $0x40] sm:$0xff] %vm871, %v2974
      %3062 = vst.msk [vmem:[#allocation5 + $0x48] sm:$0xff] %vm871, %v2976
      %3063 = vst.msk [vmem:[#allocation5 + $0x50] sm:$0xff] %vm871, %v2978
      %3064 = vst.msk [vmem:[#allocation5 + $0x58] sm:$0xff] %vm871, %v2980
      %3065 = vst.msk [vmem:[#allocation5 + $0x60] sm:$0xff] %vm871, %v2982
      %3066 = vst.msk [vmem:[#allocation5 + $0x68] sm:$0xff] %vm871, %v2984
      %3067 = vst.msk [vmem:[#allocation5 + $0x70] sm:$0xff] %vm871, %v2986
      %3068 = vst.msk [vmem:[#allocation5 + $0x78] sm:$0xff] %vm871, %v2988
      %3069 = vst.msk [vmem:[#allocation5 + $0x80] sm:$0xff] %vm871, %v2990
      %3070 = vst.msk [vmem:[#allocation5 + $0x88] sm:$0xff] %vm871, %v2992
      %3071 = vst.msk [vmem:[#allocation5 + $0x90] sm:$0xff] %vm871, %v2994
      %3072 = vst.msk [vmem:[#allocation5 + $0x98] sm:$0xff] %vm871, %v2996
      %3073 = vst.msk [vmem:[#allocation5 + $0xa0] sm:$0xff] %vm871, %v2998
      %3074 = vst.msk [vmem:[#allocation5 + $0xa8] sm:$0xff] %vm871, %v3000
      %3075 = vst.msk [vmem:[#allocation5 + $0xb0] sm:$0xff] %vm871, %v3002
      %3076 = vst.msk [vmem:[#allocation5 + $0xb8] sm:$0xff] %vm871, %v3004
      %3077 = vst.msk [vmem:[#allocation5 + $0xc0] sm:$0xff] %vm871, %v3006
      %3078 = vst.msk [vmem:[#allocation5 + $0xc8] sm:$0xff] %vm871, %v3008
      %3079 = vst.msk [vmem:[#allocation5 + $0xd0] sm:$0xff] %vm871, %v3010
      %3080 = vst.msk [vmem:[#allocation5 + $0xd8] sm:$0xff] %vm871, %v3012
      %3081 = vst.msk [vmem:[#allocation5 + $0xe0] sm:$0xff] %vm871, %v3014
      %3082 = vst.msk [vmem:[#allocation5 + $0xe8] sm:$0xff] %vm871, %v3016
      %3083 = vst.msk [vmem:[#allocation5 + $0xf0] sm:$0xff] %vm871, %v3018
      %3084 = vst.msk [vmem:[#allocation5 + $0xf8] sm:$0xff] %vm871, %v3020
      %v3085 = vld [vmem:[#allocation3 + $0x6] sm:$0xff]
      %v3086 = vld [vmem:[#allocation3 + $0xe] sm:$0xff]
      %v3087 = vld [vmem:[#allocation3 + $0x1e] sm:$0xff]
      %v3088 = vld [vmem:[#allocation3 + $0x26] sm:$0xff]
      %v3089 = vld [vmem:[#allocation3 + $0x36] sm:$0xff]
      %v3090 = vld [vmem:[#allocation3 + $0x3e] sm:$0xff]
      %v3091 = vld [vmem:[#allocation3 + $0x4e] sm:$0xff]
      %v3092 = vld [vmem:[#allocation3 + $0x56] sm:$0xff]
      %v3093 = vld [vmem:[#allocation3 + $0x66] sm:$0xff]
      %v3094 = vld [vmem:[#allocation3 + $0x6e] sm:$0xff]
      %v3095 = vld [vmem:[#allocation3 + $0x7e] sm:$0xff]
      %v3096 = vld [vmem:[#allocation3 + $0x86] sm:$0xff]
      %v3097 = vld [vmem:[#allocation3 + $0x96] sm:$0xff]
      %v3098 = vld [vmem:[#allocation3 + $0x9e] sm:$0xff]
      %v3099 = vld [vmem:[#allocation3 + $0xae] sm:$0xff]
      %v3100 = vld [vmem:[#allocation3 + $0xb6] sm:$0xff]
      %v3101 = vld [vmem:[#allocation3 + $0xc6] sm:$0xff]
      %v3102 = vld [vmem:[#allocation3 + $0xce] sm:$0xff]
      %v3103 = vld [vmem:[#allocation3 + $0xde] sm:$0xff]
      %v3104 = vld [vmem:[#allocation3 + $0xe6] sm:$0xff]
      %v3105 = vld [vmem:[#allocation3 + $0xf6] sm:$0xff]
      %v3106 = vld [vmem:[#allocation3 + $0xfe] sm:$0xff]
      %v3107 = vld [vmem:[#allocation3 + $0x10e] sm:$0xff]
      %v3108 = vld [vmem:[#allocation3 + $0x116] sm:$0xff]
      %v3109 = vld [vmem:[#allocation3 + $0x126] sm:$0xff]
      %v3110 = vld [vmem:[#allocation3 + $0x12e] sm:$0xff]
      %v3111 = vld [vmem:[#allocation3 + $0x13e] sm:$0xff]
      %v3112 = vld [vmem:[#allocation3 + $0x146] sm:$0xff]
      %v3113 = vld [vmem:[#allocation3 + $0x156] sm:$0xff]
      %v3114 = vld [vmem:[#allocation3 + $0x15e] sm:$0xff]
      %v3115 = vld [vmem:[#allocation3 + $0x16e] sm:$0xff]
      %v3116 = vld [vmem:[#allocation3 + $0x176] sm:$0xff]
      %3149 = vrot.lane.b32.xlu0 %v3085, 16
      %v3150 = vpop.permute.xlu0 %3149
      %3151 = vrot.lane.b32.xlu0 %v3086, 16
      %v3152 = vpop.permute.xlu0 %3151
      %3153 = vrot.lane.b32.xlu0 %v3087, 16
      %v3154 = vpop.permute.xlu0 %3153
      %3155 = vrot.lane.b32.xlu0 %v3088, 16
      %v3156 = vpop.permute.xlu0 %3155
      %3157 = vrot.lane.b32.xlu0 %v3089, 16
      %v3158 = vpop.permute.xlu0 %3157
      %3159 = vrot.lane.b32.xlu0 %v3090, 16
      %v3160 = vpop.permute.xlu0 %3159
      %3161 = vrot.lane.b32.xlu0 %v3091, 16
      %v3162 = vpop.permute.xlu0 %3161
      %3163 = vrot.lane.b32.xlu0 %v3092, 16
      %v3164 = vpop.permute.xlu0 %3163
      %3165 = vrot.lane.b32.xlu0 %v3093, 16
      %v3166 = vpop.permute.xlu0 %3165
      %3167 = vrot.lane.b32.xlu0 %v3094, 16
      %v3168 = vpop.permute.xlu0 %3167
      %3169 = vrot.lane.b32.xlu0 %v3095, 16
      %v3170 = vpop.permute.xlu0 %3169
      %3171 = vrot.lane.b32.xlu0 %v3096, 16
      %v3172 = vpop.permute.xlu0 %3171
      %3173 = vrot.lane.b32.xlu0 %v3097, 16
      %v3174 = vpop.permute.xlu0 %3173
      %3175 = vrot.lane.b32.xlu0 %v3098, 16
      %v3176 = vpop.permute.xlu0 %3175
      %3177 = vrot.lane.b32.xlu0 %v3099, 16
      %v3178 = vpop.permute.xlu0 %3177
      %3179 = vrot.lane.b32.xlu0 %v3100, 16
      %v3180 = vpop.permute.xlu0 %3179
      %3181 = vrot.lane.b32.xlu0 %v3101, 16
      %v3182 = vpop.permute.xlu0 %3181
      %3183 = vrot.lane.b32.xlu0 %v3102, 16
      %v3184 = vpop.permute.xlu0 %3183
      %3185 = vrot.lane.b32.xlu0 %v3103, 16
      %v3186 = vpop.permute.xlu0 %3185
      %3187 = vrot.lane.b32.xlu0 %v3104, 16
      %v3188 = vpop.permute.xlu0 %3187
      %3189 = vrot.lane.b32.xlu0 %v3105, 16
      %v3190 = vpop.permute.xlu0 %3189
      %3191 = vrot.lane.b32.xlu0 %v3106, 16
      %v3192 = vpop.permute.xlu0 %3191
      %3193 = vrot.lane.b32.xlu0 %v3107, 16
      %v3194 = vpop.permute.xlu0 %3193
      %3195 = vrot.lane.b32.xlu0 %v3108, 16
      %v3196 = vpop.permute.xlu0 %3195
      %3197 = vrot.lane.b32.xlu0 %v3109, 16
      %v3198 = vpop.permute.xlu0 %3197
      %3199 = vrot.lane.b32.xlu0 %v3110, 16
      %v3200 = vpop.permute.xlu0 %3199
      %3201 = vrot.lane.b32.xlu0 %v3111, 16
      %v3202 = vpop.permute.xlu0 %3201
      %3203 = vrot.lane.b32.xlu0 %v3112, 16
      %v3204 = vpop.permute.xlu0 %3203
      %3205 = vrot.lane.b32.xlu0 %v3113, 16
      %v3206 = vpop.permute.xlu0 %3205
      %3207 = vrot.lane.b32.xlu0 %v3114, 16
      %v3208 = vpop.permute.xlu0 %3207
      %3209 = vrot.lane.b32.xlu0 %v3115, 16
      %v3210 = vpop.permute.xlu0 %3209
      %3211 = vrot.lane.b32.xlu0 %v3116, 16
      %v3212 = vpop.permute.xlu0 %3211
      %3245 = vst.msk [vmem:[#allocation5] sm:$0xff] %vm1064, %v3150
      %3246 = vst.msk [vmem:[#allocation5 + $0x8] sm:$0xff] %vm1064, %v3152
      %3247 = vst.msk [vmem:[#allocation5 + $0x10] sm:$0xff] %vm1064, %v3154
      %3248 = vst.msk [vmem:[#allocation5 + $0x18] sm:$0xff] %vm1064, %v3156
      %3249 = vst.msk [vmem:[#allocation5 + $0x20] sm:$0xff] %vm1064, %v3158
      %3250 = vst.msk [vmem:[#allocation5 + $0x28] sm:$0xff] %vm1064, %v3160
      %3251 = vst.msk [vmem:[#allocation5 + $0x30] sm:$0xff] %vm1064, %v3162
      %3252 = vst.msk [vmem:[#allocation5 + $0x38] sm:$0xff] %vm1064, %v3164
      %3253 = vst.msk [vmem:[#allocation5 + $0x40] sm:$0xff] %vm1064, %v3166
      %3254 = vst.msk [vmem:[#allocation5 + $0x48] sm:$0xff] %vm1064, %v3168
      %3255 = vst.msk [vmem:[#allocation5 + $0x50] sm:$0xff] %vm1064, %v3170
      %3256 = vst.msk [vmem:[#allocation5 + $0x58] sm:$0xff] %vm1064, %v3172
      %3257 = vst.msk [vmem:[#allocation5 + $0x60] sm:$0xff] %vm1064, %v3174
      %3258 = vst.msk [vmem:[#allocation5 + $0x68] sm:$0xff] %vm1064, %v3176
      %3259 = vst.msk [vmem:[#allocation5 + $0x70] sm:$0xff] %vm1064, %v3178
      %3260 = vst.msk [vmem:[#allocation5 + $0x78] sm:$0xff] %vm1064, %v3180
      %3261 = vst.msk [vmem:[#allocation5 + $0x80] sm:$0xff] %vm1064, %v3182
      %3262 = vst.msk [vmem:[#allocation5 + $0x88] sm:$0xff] %vm1064, %v3184
      %3263 = vst.msk [vmem:[#allocation5 + $0x90] sm:$0xff] %vm1064, %v3186
      %3264 = vst.msk [vmem:[#allocation5 + $0x98] sm:$0xff] %vm1064, %v3188
      %3265 = vst.msk [vmem:[#allocation5 + $0xa0] sm:$0xff] %vm1064, %v3190
      %3266 = vst.msk [vmem:[#allocation5 + $0xa8] sm:$0xff] %vm1064, %v3192
      %3267 = vst.msk [vmem:[#allocation5 + $0xb0] sm:$0xff] %vm1064, %v3194
      %3268 = vst.msk [vmem:[#allocation5 + $0xb8] sm:$0xff] %vm1064, %v3196
      %3269 = vst.msk [vmem:[#allocation5 + $0xc0] sm:$0xff] %vm1064, %v3198
      %3270 = vst.msk [vmem:[#allocation5 + $0xc8] sm:$0xff] %vm1064, %v3200
      %3271 = vst.msk [vmem:[#allocation5 + $0xd0] sm:$0xff] %vm1064, %v3202
      %3272 = vst.msk [vmem:[#allocation5 + $0xd8] sm:$0xff] %vm1064, %v3204
      %3273 = vst.msk [vmem:[#allocation5 + $0xe0] sm:$0xff] %vm1064, %v3206
      %3274 = vst.msk [vmem:[#allocation5 + $0xe8] sm:$0xff] %vm1064, %v3208
      %3275 = vst.msk [vmem:[#allocation5 + $0xf0] sm:$0xff] %vm1064, %v3210
      %3276 = vst.msk [vmem:[#allocation5 + $0xf8] sm:$0xff] %vm1064, %v3212
      %v3277 = vld [vmem:[%s2796] sm:$0xff]
      %v3278 = vld [vmem:[%s2796 + $0x8] sm:$0xff]
      %v3279 = vld [vmem:[%s2796 + $0x18] sm:$0xff]
      %v3280 = vld [vmem:[%s2796 + $0x20] sm:$0xff]
      %v3281 = vld [vmem:[%s2796 + $0x30] sm:$0xff]
      %v3282 = vld [vmem:[%s2796 + $0x38] sm:$0xff]
      %v3283 = vld [vmem:[%s2796 + $0x48] sm:$0xff]
      %v3284 = vld [vmem:[%s2796 + $0x50] sm:$0xff]
      %v3285 = vld [vmem:[%s2796 + $0x60] sm:$0xff]
      %v3286 = vld [vmem:[%s2796 + $0x68] sm:$0xff]
      %v3287 = vld [vmem:[%s2796 + $0x78] sm:$0xff]
      %v3288 = vld [vmem:[%s2796 + $0x80] sm:$0xff]
      %v3289 = vld [vmem:[%s2796 + $0x90] sm:$0xff]
      %v3290 = vld [vmem:[%s2796 + $0x98] sm:$0xff]
      %v3291 = vld [vmem:[%s2796 + $0xa8] sm:$0xff]
      %v3292 = vld [vmem:[%s2796 + $0xb0] sm:$0xff]
      %v3293 = vld [vmem:[%s2796 + $0xc0] sm:$0xff]
      %v3294 = vld [vmem:[%s2796 + $0xc8] sm:$0xff]
      %v3295 = vld [vmem:[%s2796 + $0xd8] sm:$0xff]
      %v3296 = vld [vmem:[%s2796 + $0xe0] sm:$0xff]
      %v3297 = vld [vmem:[%s2796 + $0xf0] sm:$0xff]
      %v3298 = vld [vmem:[%s2796 + $0xf8] sm:$0xff]
      %v3299 = vld [vmem:[%s2796 + $0x108] sm:$0xff]
      %v3300 = vld [vmem:[%s2796 + $0x110] sm:$0xff]
      %v3301 = vld [vmem:[%s2796 + $0x120] sm:$0xff]
      %v3302 = vld [vmem:[%s2796 + $0x128] sm:$0xff]
      %v3303 = vld [vmem:[%s2796 + $0x138] sm:$0xff]
      %v3304 = vld [vmem:[%s2796 + $0x140] sm:$0xff]
      %v3305 = vld [vmem:[%s2796 + $0x150] sm:$0xff]
      %v3306 = vld [vmem:[%s2796 + $0x158] sm:$0xff]
      %v3307 = vld [vmem:[%s2796 + $0x168] sm:$0xff]
      %v3308 = vld [vmem:[%s2796 + $0x170] sm:$0xff]
      %3341 = vrot.lane.b32.xlu0 %v3277, 24
      %v3342 = vpop.permute.xlu0 %3341
      %3343 = vrot.lane.b32.xlu0 %v3278, 24
      %v3344 = vpop.permute.xlu0 %3343
      %3345 = vrot.lane.b32.xlu0 %v3279, 24
      %v3346 = vpop.permute.xlu0 %3345
      %3347 = vrot.lane.b32.xlu0 %v3280, 24
      %v3348 = vpop.permute.xlu0 %3347
      %3349 = vrot.lane.b32.xlu0 %v3281, 24
      %v3350 = vpop.permute.xlu0 %3349
      %3351 = vrot.lane.b32.xlu0 %v3282, 24
      %v3352 = vpop.permute.xlu0 %3351
      %3353 = vrot.lane.b32.xlu0 %v3283, 24
      %v3354 = vpop.permute.xlu0 %3353
      %3355 = vrot.lane.b32.xlu0 %v3284, 24
      %v3356 = vpop.permute.xlu0 %3355
      %3357 = vrot.lane.b32.xlu0 %v3285, 24
      %v3358 = vpop.permute.xlu0 %3357
      %3359 = vrot.lane.b32.xlu0 %v3286, 24
      %v3360 = vpop.permute.xlu0 %3359
      %3361 = vrot.lane.b32.xlu0 %v3287, 24
      %v3362 = vpop.permute.xlu0 %3361
      %3363 = vrot.lane.b32.xlu0 %v3288, 24
      %v3364 = vpop.permute.xlu0 %3363
      %3365 = vrot.lane.b32.xlu0 %v3289, 24
      %v3366 = vpop.permute.xlu0 %3365
      %3367 = vrot.lane.b32.xlu0 %v3290, 24
      %v3368 = vpop.permute.xlu0 %3367
      %3369 = vrot.lane.b32.xlu0 %v3291, 24
      %v3370 = vpop.permute.xlu0 %3369
      %3371 = vrot.lane.b32.xlu0 %v3292, 24
      %v3372 = vpop.permute.xlu0 %3371
      %3373 = vrot.lane.b32.xlu0 %v3293, 24
      %v3374 = vpop.permute.xlu0 %3373
      %3375 = vrot.lane.b32.xlu0 %v3294, 24
      %v3376 = vpop.permute.xlu0 %3375
      %3377 = vrot.lane.b32.xlu0 %v3295, 24
      %v3378 = vpop.permute.xlu0 %3377
      %3379 = vrot.lane.b32.xlu0 %v3296, 24
      %v3380 = vpop.permute.xlu0 %3379
      %3381 = vrot.lane.b32.xlu0 %v3297, 24
      %v3382 = vpop.permute.xlu0 %3381
      %3383 = vrot.lane.b32.xlu0 %v3298, 24
      %v3384 = vpop.permute.xlu0 %3383
      %3385 = vrot.lane.b32.xlu0 %v3299, 24
      %v3386 = vpop.permute.xlu0 %3385
      %3387 = vrot.lane.b32.xlu0 %v3300, 24
      %v3388 = vpop.permute.xlu0 %3387
      %3389 = vrot.lane.b32.xlu0 %v3301, 24
      %v3390 = vpop.permute.xlu0 %3389
      %3391 = vrot.lane.b32.xlu0 %v3302, 24
      %v3392 = vpop.permute.xlu0 %3391
      %3393 = vrot.lane.b32.xlu0 %v3303, 24
      %v3394 = vpop.permute.xlu0 %3393
      %3395 = vrot.lane.b32.xlu0 %v3304, 24
      %v3396 = vpop.permute.xlu0 %3395
      %3397 = vrot.lane.b32.xlu0 %v3305, 24
      %v3398 = vpop.permute.xlu0 %3397
      %3399 = vrot.lane.b32.xlu0 %v3306, 24
      %v3400 = vpop.permute.xlu0 %3399
      %3401 = vrot.lane.b32.xlu0 %v3307, 24
      %v3402 = vpop.permute.xlu0 %3401
      %3403 = vrot.lane.b32.xlu0 %v3308, 24
      %v3404 = vpop.permute.xlu0 %3403
      %3437 = vst.msk [vmem:[#allocation5] sm:$0xff] %vm1257, %v3342
      %3438 = vst.msk [vmem:[#allocation5 + $0x8] sm:$0xff] %vm1257, %v3344
      %3439 = vst.msk [vmem:[#allocation5 + $0x10] sm:$0xff] %vm1257, %v3346
      %3440 = vst.msk [vmem:[#allocation5 + $0x18] sm:$0xff] %vm1257, %v3348
      %3441 = vst.msk [vmem:[#allocation5 + $0x20] sm:$0xff] %vm1257, %v3350
      %3442 = vst.msk [vmem:[#allocation5 + $0x28] sm:$0xff] %vm1257, %v3352
      %3443 = vst.msk [vmem:[#allocation5 + $0x30] sm:$0xff] %vm1257, %v3354
      %3444 = vst.msk [vmem:[#allocation5 + $0x38] sm:$0xff] %vm1257, %v3356
      %3445 = vst.msk [vmem:[#allocation5 + $0x40] sm:$0xff] %vm1257, %v3358
      %3446 = vst.msk [vmem:[#allocation5 + $0x48] sm:$0xff] %vm1257, %v3360
      %3447 = vst.msk [vmem:[#allocation5 + $0x50] sm:$0xff] %vm1257, %v3362
      %3448 = vst.msk [vmem:[#allocation5 + $0x58] sm:$0xff] %vm1257, %v3364
      %3449 = vst.msk [vmem:[#allocation5 + $0x60] sm:$0xff] %vm1257, %v3366
      %3450 = vst.msk [vmem:[#allocation5 + $0x68] sm:$0xff] %vm1257, %v3368
      %3451 = vst.msk [vmem:[#allocation5 + $0x70] sm:$0xff] %vm1257, %v3370
      %3452 = vst.msk [vmem:[#allocation5 + $0x78] sm:$0xff] %vm1257, %v3372
      %3453 = vst.msk [vmem:[#allocation5 + $0x80] sm:$0xff] %vm1257, %v3374
      %3454 = vst.msk [vmem:[#allocation5 + $0x88] sm:$0xff] %vm1257, %v3376
      %3455 = vst.msk [vmem:[#allocation5 + $0x90] sm:$0xff] %vm1257, %v3378
      %3456 = vst.msk [vmem:[#allocation5 + $0x98] sm:$0xff] %vm1257, %v3380
      %3457 = vst.msk [vmem:[#allocation5 + $0xa0] sm:$0xff] %vm1257, %v3382
      %3458 = vst.msk [vmem:[#allocation5 + $0xa8] sm:$0xff] %vm1257, %v3384
      %3459 = vst.msk [vmem:[#allocation5 + $0xb0] sm:$0xff] %vm1257, %v3386
      %3460 = vst.msk [vmem:[#allocation5 + $0xb8] sm:$0xff] %vm1257, %v3388
      %3461 = vst.msk [vmem:[#allocation5 + $0xc0] sm:$0xff] %vm1257, %v3390
      %3462 = vst.msk [vmem:[#allocation5 + $0xc8] sm:$0xff] %vm1257, %v3392
      %3463 = vst.msk [vmem:[#allocation5 + $0xd0] sm:$0xff] %vm1257, %v3394
      %3464 = vst.msk [vmem:[#allocation5 + $0xd8] sm:$0xff] %vm1257, %v3396
      %3465 = vst.msk [vmem:[#allocation5 + $0xe0] sm:$0xff] %vm1257, %v3398
      %3466 = vst.msk [vmem:[#allocation5 + $0xe8] sm:$0xff] %vm1257, %v3400
      %3467 = vst.msk [vmem:[#allocation5 + $0xf0] sm:$0xff] %vm1257, %v3402
      %3468 = vst.msk [vmem:[#allocation5 + $0xf8] sm:$0xff] %vm1257, %v3404
      %v3469 = vld [vmem:[%s2796 + $0x3] sm:$0xff]
      %v3470 = vld [vmem:[%s2796 + $0xb] sm:$0xff]
      %v3471 = vld [vmem:[%s2796 + $0x1b] sm:$0xff]
      %v3472 = vld [vmem:[%s2796 + $0x23] sm:$0xff]
      %v3473 = vld [vmem:[%s2796 + $0x33] sm:$0xff]
      %v3474 = vld [vmem:[%s2796 + $0x3b] sm:$0xff]
      %v3475 = vld [vmem:[%s2796 + $0x4b] sm:$0xff]
      %v3476 = vld [vmem:[%s2796 + $0x53] sm:$0xff]
      %v3477 = vld [vmem:[%s2796 + $0x63] sm:$0xff]
      %v3478 = vld [vmem:[%s2796 + $0x6b] sm:$0xff]
      %v3479 = vld [vmem:[%s2796 + $0x7b] sm:$0xff]
      %v3480 = vld [vmem:[%s2796 + $0x83] sm:$0xff]
      %v3481 = vld [vmem:[%s2796 + $0x93] sm:$0xff]
      %v3482 = vld [vmem:[%s2796 + $0x9b] sm:$0xff]
      %v3483 = vld [vmem:[%s2796 + $0xab] sm:$0xff]
      %v3484 = vld [vmem:[%s2796 + $0xb3] sm:$0xff]
      %v3485 = vld [vmem:[%s2796 + $0xc3] sm:$0xff]
      %v3486 = vld [vmem:[%s2796 + $0xcb] sm:$0xff]
      %v3487 = vld [vmem:[%s2796 + $0xdb] sm:$0xff]
      %v3488 = vld [vmem:[%s2796 + $0xe3] sm:$0xff]
      %v3489 = vld [vmem:[%s2796 + $0xf3] sm:$0xff]
      %v3490 = vld [vmem:[%s2796 + $0xfb] sm:$0xff]
      %v3491 = vld [vmem:[%s2796 + $0x10b] sm:$0xff]
      %v3492 = vld [vmem:[%s2796 + $0x113] sm:$0xff]
      %v3493 = vld [vmem:[%s2796 + $0x123] sm:$0xff]
      %v3494 = vld [vmem:[%s2796 + $0x12b] sm:$0xff]
      %v3495 = vld [vmem:[%s2796 + $0x13b] sm:$0xff]
      %v3496 = vld [vmem:[%s2796 + $0x143] sm:$0xff]
      %v3497 = vld [vmem:[%s2796 + $0x153] sm:$0xff]
      %v3498 = vld [vmem:[%s2796 + $0x15b] sm:$0xff]
      %v3499 = vld [vmem:[%s2796 + $0x16b] sm:$0xff]
      %v3500 = vld [vmem:[%s2796 + $0x173] sm:$0xff]
      %3533 = vrot.lane.b32.xlu0 %v3469, 32
      %v3534 = vpop.permute.xlu0 %3533
      %3535 = vrot.lane.b32.xlu0 %v3470, 32
      %v3536 = vpop.permute.xlu0 %3535
      %3537 = vrot.lane.b32.xlu0 %v3471, 32
      %v3538 = vpop.permute.xlu0 %3537
      %3539 = vrot.lane.b32.xlu0 %v3472, 32
      %v3540 = vpop.permute.xlu0 %3539
      %3541 = vrot.lane.b32.xlu0 %v3473, 32
      %v3542 = vpop.permute.xlu0 %3541
      %3543 = vrot.lane.b32.xlu0 %v3474, 32
      %v3544 = vpop.permute.xlu0 %3543
      %3545 = vrot.lane.b32.xlu0 %v3475, 32
      %v3546 = vpop.permute.xlu0 %3545
      %3547 = vrot.lane.b32.xlu0 %v3476, 32
      %v3548 = vpop.permute.xlu0 %3547
      %3549 = vrot.lane.b32.xlu0 %v3477, 32
      %v3550 = vpop.permute.xlu0 %3549
      %3551 = vrot.lane.b32.xlu0 %v3478, 32
      %v3552 = vpop.permute.xlu0 %3551
      %3553 = vrot.lane.b32.xlu0 %v3479, 32
      %v3554 = vpop.permute.xlu0 %3553
      %3555 = vrot.lane.b32.xlu0 %v3480, 32
      %v3556 = vpop.permute.xlu0 %3555
      %3557 = vrot.lane.b32.xlu0 %v3481, 32
      %v3558 = vpop.permute.xlu0 %3557
      %3559 = vrot.lane.b32.xlu0 %v3482, 32
      %v3560 = vpop.permute.xlu0 %3559
      %3561 = vrot.lane.b32.xlu0 %v3483, 32
      %v3562 = vpop.permute.xlu0 %3561
      %3563 = vrot.lane.b32.xlu0 %v3484, 32
      %v3564 = vpop.permute.xlu0 %3563
      %3565 = vrot.lane.b32.xlu0 %v3485, 32
      %v3566 = vpop.permute.xlu0 %3565
      %3567 = vrot.lane.b32.xlu0 %v3486, 32
      %v3568 = vpop.permute.xlu0 %3567
      %3569 = vrot.lane.b32.xlu0 %v3487, 32
      %v3570 = vpop.permute.xlu0 %3569
      %3571 = vrot.lane.b32.xlu0 %v3488, 32
      %v3572 = vpop.permute.xlu0 %3571
      %3573 = vrot.lane.b32.xlu0 %v3489, 32
      %v3574 = vpop.permute.xlu0 %3573
      %3575 = vrot.lane.b32.xlu0 %v3490, 32
      %v3576 = vpop.permute.xlu0 %3575
      %3577 = vrot.lane.b32.xlu0 %v3491, 32
      %v3578 = vpop.permute.xlu0 %3577
      %3579 = vrot.lane.b32.xlu0 %v3492, 32
      %v3580 = vpop.permute.xlu0 %3579
      %3581 = vrot.lane.b32.xlu0 %v3493, 32
      %v3582 = vpop.permute.xlu0 %3581
      %3583 = vrot.lane.b32.xlu0 %v3494, 32
      %v3584 = vpop.permute.xlu0 %3583
      %3585 = vrot.lane.b32.xlu0 %v3495, 32
      %v3586 = vpop.permute.xlu0 %3585
      %3587 = vrot.lane.b32.xlu0 %v3496, 32
      %v3588 = vpop.permute.xlu0 %3587
      %3589 = vrot.lane.b32.xlu0 %v3497, 32
      %v3590 = vpop.permute.xlu0 %3589
      %3591 = vrot.lane.b32.xlu0 %v3498, 32
      %v3592 = vpop.permute.xlu0 %3591
      %3593 = vrot.lane.b32.xlu0 %v3499, 32
      %v3594 = vpop.permute.xlu0 %3593
      %3595 = vrot.lane.b32.xlu0 %v3500, 32
      %v3596 = vpop.permute.xlu0 %3595
      %3629 = vst.msk [vmem:[#allocation5] sm:$0xff] %vm1450, %v3534
      %3630 = vst.msk [vmem:[#allocation5 + $0x8] sm:$0xff] %vm1450, %v3536
      %3631 = vst.msk [vmem:[#allocation5 + $0x10] sm:$0xff] %vm1450, %v3538
      %3632 = vst.msk [vmem:[#allocation5 + $0x18] sm:$0xff] %vm1450, %v3540
      %3633 = vst.msk [vmem:[#allocation5 + $0x20] sm:$0xff] %vm1450, %v3542
      %3634 = vst.msk [vmem:[#allocation5 + $0x28] sm:$0xff] %vm1450, %v3544
      %3635 = vst.msk [vmem:[#allocation5 + $0x30] sm:$0xff] %vm1450, %v3546
      %3636 = vst.msk [vmem:[#allocation5 + $0x38] sm:$0xff] %vm1450, %v3548
      %3637 = vst.msk [vmem:[#allocation5 + $0x40] sm:$0xff] %vm1450, %v3550
      %3638 = vst.msk [vmem:[#allocation5 + $0x48] sm:$0xff] %vm1450, %v3552
      %3639 = vst.msk [vmem:[#allocation5 + $0x50] sm:$0xff] %vm1450, %v3554
      %3640 = vst.msk [vmem:[#allocation5 + $0x58] sm:$0xff] %vm1450, %v3556
      %3641 = vst.msk [vmem:[#allocation5 + $0x60] sm:$0xff] %vm1450, %v3558
      %3642 = vst.msk [vmem:[#allocation5 + $0x68] sm:$0xff] %vm1450, %v3560
      %3643 = vst.msk [vmem:[#allocation5 + $0x70] sm:$0xff] %vm1450, %v3562
      %3644 = vst.msk [vmem:[#allocation5 + $0x78] sm:$0xff] %vm1450, %v3564
      %3645 = vst.msk [vmem:[#allocation5 + $0x80] sm:$0xff] %vm1450, %v3566
      %3646 = vst.msk [vmem:[#allocation5 + $0x88] sm:$0xff] %vm1450, %v3568
      %3647 = vst.msk [vmem:[#allocation5 + $0x90] sm:$0xff] %vm1450, %v3570
      %3648 = vst.msk [vmem:[#allocation5 + $0x98] sm:$0xff] %vm1450, %v3572
      %3649 = vst.msk [vmem:[#allocation5 + $0xa0] sm:$0xff] %vm1450, %v3574
      %3650 = vst.msk [vmem:[#allocation5 + $0xa8] sm:$0xff] %vm1450, %v3576
      %3651 = vst.msk [vmem:[#allocation5 + $0xb0] sm:$0xff] %vm1450, %v3578
      %3652 = vst.msk [vmem:[#allocation5 + $0xb8] sm:$0xff] %vm1450, %v3580
      %3653 = vst.msk [vmem:[#allocation5 + $0xc0] sm:$0xff] %vm1450, %v3582
      %3654 = vst.msk [vmem:[#allocation5 + $0xc8] sm:$0xff] %vm1450, %v3584
      %3655 = vst.msk [vmem:[#allocation5 + $0xd0] sm:$0xff] %vm1450, %v3586
      %3656 = vst.msk [vmem:[#allocation5 + $0xd8] sm:$0xff] %vm1450, %v3588
      %3657 = vst.msk [vmem:[#allocation5 + $0xe0] sm:$0xff] %vm1450, %v3590
      %3658 = vst.msk [vmem:[#allocation5 + $0xe8] sm:$0xff] %vm1450, %v3592
      %3659 = vst.msk [vmem:[#allocation5 + $0xf0] sm:$0xff] %vm1450, %v3594
      %3660 = vst.msk [vmem:[#allocation5 + $0xf8] sm:$0xff] %vm1450, %v3596
      %v3661 = vld [vmem:[%s2796 + $0x6] sm:$0xff]
      %v3662 = vld [vmem:[%s2796 + $0xe] sm:$0xff]
      %v3663 = vld [vmem:[%s2796 + $0x1e] sm:$0xff]
      %v3664 = vld [vmem:[%s2796 + $0x26] sm:$0xff]
      %v3665 = vld [vmem:[%s2796 + $0x36] sm:$0xff]
      %v3666 = vld [vmem:[%s2796 + $0x3e] sm:$0xff]
      %v3667 = vld [vmem:[%s2796 + $0x4e] sm:$0xff]
      %v3668 = vld [vmem:[%s2796 + $0x56] sm:$0xff]
      %v3669 = vld [vmem:[%s2796 + $0x66] sm:$0xff]
      %v3670 = vld [vmem:[%s2796 + $0x6e] sm:$0xff]
      %v3671 = vld [vmem:[%s2796 + $0x7e] sm:$0xff]
      %v3672 = vld [vmem:[%s2796 + $0x86] sm:$0xff]
      %v3673 = vld [vmem:[%s2796 + $0x96] sm:$0xff]
      %v3674 = vld [vmem:[%s2796 + $0x9e] sm:$0xff]
      %v3675 = vld [vmem:[%s2796 + $0xae] sm:$0xff]
      %v3676 = vld [vmem:[%s2796 + $0xb6] sm:$0xff]
      %v3677 = vld [vmem:[%s2796 + $0xc6] sm:$0xff]
      %v3678 = vld [vmem:[%s2796 + $0xce] sm:$0xff]
      %v3679 = vld [vmem:[%s2796 + $0xde] sm:$0xff]
      %v3680 = vld [vmem:[%s2796 + $0xe6] sm:$0xff]
      %v3681 = vld [vmem:[%s2796 + $0xf6] sm:$0xff]
      %v3682 = vld [vmem:[%s2796 + $0xfe] sm:$0xff]
      %v3683 = vld [vmem:[%s2796 + $0x10e] sm:$0xff]
      %v3684 = vld [vmem:[%s2796 + $0x116] sm:$0xff]
      %v3685 = vld [vmem:[%s2796 + $0x126] sm:$0xff]
      %v3686 = vld [vmem:[%s2796 + $0x12e] sm:$0xff]
      %v3687 = vld [vmem:[%s2796 + $0x13e] sm:$0xff]
      %v3688 = vld [vmem:[%s2796 + $0x146] sm:$0xff]
      %v3689 = vld [vmem:[%s2796 + $0x156] sm:$0xff]
      %v3690 = vld [vmem:[%s2796 + $0x15e] sm:$0xff]
      %v3691 = vld [vmem:[%s2796 + $0x16e] sm:$0xff]
      %v3692 = vld [vmem:[%s2796 + $0x176] sm:$0xff]
      %3725 = vrot.lane.b32.xlu0 %v3661, 40
      %v3726 = vpop.permute.xlu0 %3725
      %3727 = vrot.lane.b32.xlu0 %v3662, 40
      %v3728 = vpop.permute.xlu0 %3727
      %3729 = vrot.lane.b32.xlu0 %v3663, 40
      %v3730 = vpop.permute.xlu0 %3729
      %3731 = vrot.lane.b32.xlu0 %v3664, 40
      %v3732 = vpop.permute.xlu0 %3731
      %3733 = vrot.lane.b32.xlu0 %v3665, 40
      %v3734 = vpop.permute.xlu0 %3733
      %3735 = vrot.lane.b32.xlu0 %v3666, 40
      %v3736 = vpop.permute.xlu0 %3735
      %3737 = vrot.lane.b32.xlu0 %v3667, 40
      %v3738 = vpop.permute.xlu0 %3737
      %3739 = vrot.lane.b32.xlu0 %v3668, 40
      %v3740 = vpop.permute.xlu0 %3739
      %3741 = vrot.lane.b32.xlu0 %v3669, 40
      %v3742 = vpop.permute.xlu0 %3741
      %3743 = vrot.lane.b32.xlu0 %v3670, 40
      %v3744 = vpop.permute.xlu0 %3743
      %3745 = vrot.lane.b32.xlu0 %v3671, 40
      %v3746 = vpop.permute.xlu0 %3745
      %3747 = vrot.lane.b32.xlu0 %v3672, 40
      %v3748 = vpop.permute.xlu0 %3747
      %3749 = vrot.lane.b32.xlu0 %v3673, 40
      %v3750 = vpop.permute.xlu0 %3749
      %3751 = vrot.lane.b32.xlu0 %v3674, 40
      %v3752 = vpop.permute.xlu0 %3751
      %3753 = vrot.lane.b32.xlu0 %v3675, 40
      %v3754 = vpop.permute.xlu0 %3753
      %3755 = vrot.lane.b32.xlu0 %v3676, 40
      %v3756 = vpop.permute.xlu0 %3755
      %3757 = vrot.lane.b32.xlu0 %v3677, 40
      %v3758 = vpop.permute.xlu0 %3757
      %3759 = vrot.lane.b32.xlu0 %v3678, 40
      %v3760 = vpop.permute.xlu0 %3759
      %3761 = vrot.lane.b32.xlu0 %v3679, 40
      %v3762 = vpop.permute.xlu0 %3761
      %3763 = vrot.lane.b32.xlu0 %v3680, 40
      %v3764 = vpop.permute.xlu0 %3763
      %3765 = vrot.lane.b32.xlu0 %v3681, 40
      %v3766 = vpop.permute.xlu0 %3765
      %3767 = vrot.lane.b32.xlu0 %v3682, 40
      %v3768 = vpop.permute.xlu0 %3767
      %3769 = vrot.lane.b32.xlu0 %v3683, 40
      %v3770 = vpop.permute.xlu0 %3769
      %3771 = vrot.lane.b32.xlu0 %v3684, 40
      %v3772 = vpop.permute.xlu0 %3771
      %3773 = vrot.lane.b32.xlu0 %v3685, 40
      %v3774 = vpop.permute.xlu0 %3773
      %3775 = vrot.lane.b32.xlu0 %v3686, 40
      %v3776 = vpop.permute.xlu0 %3775
      %3777 = vrot.lane.b32.xlu0 %v3687, 40
      %v3778 = vpop.permute.xlu0 %3777
      %3779 = vrot.lane.b32.xlu0 %v3688, 40
      %v3780 = vpop.permute.xlu0 %3779
      %3781 = vrot.lane.b32.xlu0 %v3689, 40
      %v3782 = vpop.permute.xlu0 %3781
      %3783 = vrot.lane.b32.xlu0 %v3690, 40
      %v3784 = vpop.permute.xlu0 %3783
      %3785 = vrot.lane.b32.xlu0 %v3691, 40
      %v3786 = vpop.permute.xlu0 %3785
      %3787 = vrot.lane.b32.xlu0 %v3692, 40
      %v3788 = vpop.permute.xlu0 %3787
      %3821 = vst.msk [vmem:[#allocation5] sm:$0xff] %vm1643, %v3726
      %3822 = vst.msk [vmem:[#allocation5 + $0x8] sm:$0xff] %vm1643, %v3728
      %3823 = vst.msk [vmem:[#allocation5 + $0x10] sm:$0xff] %vm1643, %v3730
      %3824 = vst.msk [vmem:[#allocation5 + $0x18] sm:$0xff] %vm1643, %v3732
      %3825 = vst.msk [vmem:[#allocation5 + $0x20] sm:$0xff] %vm1643, %v3734
      %3826 = vst.msk [vmem:[#allocation5 + $0x28] sm:$0xff] %vm1643, %v3736
      %3827 = vst.msk [vmem:[#allocation5 + $0x30] sm:$0xff] %vm1643, %v3738
      %3828 = vst.msk [vmem:[#allocation5 + $0x38] sm:$0xff] %vm1643, %v3740
      %3829 = vst.msk [vmem:[#allocation5 + $0x40] sm:$0xff] %vm1643, %v3742
      %3830 = vst.msk [vmem:[#allocation5 + $0x48] sm:$0xff] %vm1643, %v3744
      %3831 = vst.msk [vmem:[#allocation5 + $0x50] sm:$0xff] %vm1643, %v3746
      %3832 = vst.msk [vmem:[#allocation5 + $0x58] sm:$0xff] %vm1643, %v3748
      %3833 = vst.msk [vmem:[#allocation5 + $0x60] sm:$0xff] %vm1643, %v3750
      %3834 = vst.msk [vmem:[#allocation5 + $0x68] sm:$0xff] %vm1643, %v3752
      %3835 = vst.msk [vmem:[#allocation5 + $0x70] sm:$0xff] %vm1643, %v3754
      %3836 = vst.msk [vmem:[#allocation5 + $0x78] sm:$0xff] %vm1643, %v3756
      %3837 = vst.msk [vmem:[#allocation5 + $0x80] sm:$0xff] %vm1643, %v3758
      %3838 = vst.msk [vmem:[#allocation5 + $0x88] sm:$0xff] %vm1643, %v3760
      %3839 = vst.msk [vmem:[#allocation5 + $0x90] sm:$0xff] %vm1643, %v3762
      %3840 = vst.msk [vmem:[#allocation5 + $0x98] sm:$0xff] %vm1643, %v3764
      %3841 = vst.msk [vmem:[#allocation5 + $0xa0] sm:$0xff] %vm1643, %v3766
      %3842 = vst.msk [vmem:[#allocation5 + $0xa8] sm:$0xff] %vm1643, %v3768
      %3843 = vst.msk [vmem:[#allocation5 + $0xb0] sm:$0xff] %vm1643, %v3770
      %3844 = vst.msk [vmem:[#allocation5 + $0xb8] sm:$0xff] %vm1643, %v3772
      %3845 = vst.msk [vmem:[#allocation5 + $0xc0] sm:$0xff] %vm1643, %v3774
      %3846 = vst.msk [vmem:[#allocation5 + $0xc8] sm:$0xff] %vm1643, %v3776
      %3847 = vst.msk [vmem:[#allocation5 + $0xd0] sm:$0xff] %vm1643, %v3778
      %3848 = vst.msk [vmem:[#allocation5 + $0xd8] sm:$0xff] %vm1643, %v3780
      %3849 = vst.msk [vmem:[#allocation5 + $0xe0] sm:$0xff] %vm1643, %v3782
      %3850 = vst.msk [vmem:[#allocation5 + $0xe8] sm:$0xff] %vm1643, %v3784
      %3851 = vst.msk [vmem:[#allocation5 + $0xf0] sm:$0xff] %vm1643, %v3786
      %3852 = vst.msk [vmem:[#allocation5 + $0xf8] sm:$0xff] %vm1643, %v3788
      %s3853 = scalar_lea.vmem [#allocation3], 144
      %v3854 = vld [vmem:[%s3853] sm:$0xff]
      %v3855 = vld [vmem:[%s3853 + $0x8] sm:$0xff]
      %v3856 = vld [vmem:[%s3853 + $0x18] sm:$0xff]
      %v3857 = vld [vmem:[%s3853 + $0x20] sm:$0xff]
      %v3858 = vld [vmem:[%s3853 + $0x30] sm:$0xff]
      %v3859 = vld [vmem:[%s3853 + $0x38] sm:$0xff]
      %v3860 = vld [vmem:[%s3853 + $0x48] sm:$0xff]
      %v3861 = vld [vmem:[%s3853 + $0x50] sm:$0xff]
      %v3862 = vld [vmem:[%s3853 + $0x60] sm:$0xff]
      %v3863 = vld [vmem:[%s3853 + $0x68] sm:$0xff]
      %v3864 = vld [vmem:[%s3853 + $0x78] sm:$0xff]
      %v3865 = vld [vmem:[%s3853 + $0x80] sm:$0xff]
      %v3866 = vld [vmem:[%s3853 + $0x90] sm:$0xff]
      %v3867 = vld [vmem:[%s3853 + $0x98] sm:$0xff]
      %v3868 = vld [vmem:[%s3853 + $0xa8] sm:$0xff]
      %v3869 = vld [vmem:[%s3853 + $0xb0] sm:$0xff]
      %v3870 = vld [vmem:[%s3853 + $0xc0] sm:$0xff]
      %v3871 = vld [vmem:[%s3853 + $0xc8] sm:$0xff]
      %v3872 = vld [vmem:[%s3853 + $0xd8] sm:$0xff]
      %v3873 = vld [vmem:[%s3853 + $0xe0] sm:$0xff]
      %v3874 = vld [vmem:[%s3853 + $0xf0] sm:$0xff]
      %v3875 = vld [vmem:[%s3853 + $0xf8] sm:$0xff]
      %v3876 = vld [vmem:[%s3853 + $0x108] sm:$0xff]
      %v3877 = vld [vmem:[%s3853 + $0x110] sm:$0xff]
      %v3878 = vld [vmem:[%s3853 + $0x120] sm:$0xff]
      %v3879 = vld [vmem:[%s3853 + $0x128] sm:$0xff]
      %v3880 = vld [vmem:[%s3853 + $0x138] sm:$0xff]
      %v3881 = vld [vmem:[%s3853 + $0x140] sm:$0xff]
      %v3882 = vld [vmem:[%s3853 + $0x150] sm:$0xff]
      %v3883 = vld [vmem:[%s3853 + $0x158] sm:$0xff]
      %v3884 = vld [vmem:[%s3853 + $0x168] sm:$0xff]
      %v3885 = vld [vmem:[%s3853 + $0x170] sm:$0xff]
      %3918 = vrot.lane.b32.xlu0 %v3854, 48
      %v3919 = vpop.permute.xlu0 %3918
      %3920 = vrot.lane.b32.xlu0 %v3855, 48
      %v3921 = vpop.permute.xlu0 %3920
      %3922 = vrot.lane.b32.xlu0 %v3856, 48
      %v3923 = vpop.permute.xlu0 %3922
      %3924 = vrot.lane.b32.xlu0 %v3857, 48
      %v3925 = vpop.permute.xlu0 %3924
      %3926 = vrot.lane.b32.xlu0 %v3858, 48
      %v3927 = vpop.permute.xlu0 %3926
      %3928 = vrot.lane.b32.xlu0 %v3859, 48
      %v3929 = vpop.permute.xlu0 %3928
      %3930 = vrot.lane.b32.xlu0 %v3860, 48
      %v3931 = vpop.permute.xlu0 %3930
      %3932 = vrot.lane.b32.xlu0 %v3861, 48
      %v3933 = vpop.permute.xlu0 %3932
      %3934 = vrot.lane.b32.xlu0 %v3862, 48
      %v3935 = vpop.permute.xlu0 %3934
      %3936 = vrot.lane.b32.xlu0 %v3863, 48
      %v3937 = vpop.permute.xlu0 %3936
      %3938 = vrot.lane.b32.xlu0 %v3864, 48
      %v3939 = vpop.permute.xlu0 %3938
      %3940 = vrot.lane.b32.xlu0 %v3865, 48
      %v3941 = vpop.permute.xlu0 %3940
      %3942 = vrot.lane.b32.xlu0 %v3866, 48
      %v3943 = vpop.permute.xlu0 %3942
      %3944 = vrot.lane.b32.xlu0 %v3867, 48
      %v3945 = vpop.permute.xlu0 %3944
      %3946 = vrot.lane.b32.xlu0 %v3868, 48
      %v3947 = vpop.permute.xlu0 %3946
      %3948 = vrot.lane.b32.xlu0 %v3869, 48
      %v3949 = vpop.permute.xlu0 %3948
      %3950 = vrot.lane.b32.xlu0 %v3870, 48
      %v3951 = vpop.permute.xlu0 %3950
      %3952 = vrot.lane.b32.xlu0 %v3871, 48
      %v3953 = vpop.permute.xlu0 %3952
      %3954 = vrot.lane.b32.xlu0 %v3872, 48
      %v3955 = vpop.permute.xlu0 %3954
      %3956 = vrot.lane.b32.xlu0 %v3873, 48
      %v3957 = vpop.permute.xlu0 %3956
      %3958 = vrot.lane.b32.xlu0 %v3874, 48
      %v3959 = vpop.permute.xlu0 %3958
      %3960 = vrot.lane.b32.xlu0 %v3875, 48
      %v3961 = vpop.permute.xlu0 %3960
      %3962 = vrot.lane.b32.xlu0 %v3876, 48
      %v3963 = vpop.permute.xlu0 %3962
      %3964 = vrot.lane.b32.xlu0 %v3877, 48
      %v3965 = vpop.permute.xlu0 %3964
      %3966 = vrot.lane.b32.xlu0 %v3878, 48
      %v3967 = vpop.permute.xlu0 %3966
      %3968 = vrot.lane.b32.xlu0 %v3879, 48
      %v3969 = vpop.permute.xlu0 %3968
      %3970 = vrot.lane.b32.xlu0 %v3880, 48
      %v3971 = vpop.permute.xlu0 %3970
      %3972 = vrot.lane.b32.xlu0 %v3881, 48
      %v3973 = vpop.permute.xlu0 %3972
      %3974 = vrot.lane.b32.xlu0 %v3882, 48
      %v3975 = vpop.permute.xlu0 %3974
      %3976 = vrot.lane.b32.xlu0 %v3883, 48
      %v3977 = vpop.permute.xlu0 %3976
      %3978 = vrot.lane.b32.xlu0 %v3884, 48
      %v3979 = vpop.permute.xlu0 %3978
      %3980 = vrot.lane.b32.xlu0 %v3885, 48
      %v3981 = vpop.permute.xlu0 %3980
      %4014 = vst.msk [vmem:[#allocation5] sm:$0xff] %vm1837, %v3919
      %4015 = vst.msk [vmem:[#allocation5 + $0x8] sm:$0xff] %vm1837, %v3921
      %4016 = vst.msk [vmem:[#allocation5 + $0x10] sm:$0xff] %vm1837, %v3923
      %4017 = vst.msk [vmem:[#allocation5 + $0x18] sm:$0xff] %vm1837, %v3925
      %4018 = vst.msk [vmem:[#allocation5 + $0x20] sm:$0xff] %vm1837, %v3927
      %4019 = vst.msk [vmem:[#allocation5 + $0x28] sm:$0xff] %vm1837, %v3929
      %4020 = vst.msk [vmem:[#allocation5 + $0x30] sm:$0xff] %vm1837, %v3931
      %4021 = vst.msk [vmem:[#allocation5 + $0x38] sm:$0xff] %vm1837, %v3933
      %4022 = vst.msk [vmem:[#allocation5 + $0x40] sm:$0xff] %vm1837, %v3935
      %4023 = vst.msk [vmem:[#allocation5 + $0x48] sm:$0xff] %vm1837, %v3937
      %4024 = vst.msk [vmem:[#allocation5 + $0x50] sm:$0xff] %vm1837, %v3939
      %4025 = vst.msk [vmem:[#allocation5 + $0x58] sm:$0xff] %vm1837, %v3941
      %4026 = vst.msk [vmem:[#allocation5 + $0x60] sm:$0xff] %vm1837, %v3943
      %4027 = vst.msk [vmem:[#allocation5 + $0x68] sm:$0xff] %vm1837, %v3945
      %4028 = vst.msk [vmem:[#allocation5 + $0x70] sm:$0xff] %vm1837, %v3947
      %4029 = vst.msk [vmem:[#allocation5 + $0x78] sm:$0xff] %vm1837, %v3949
      %4030 = vst.msk [vmem:[#allocation5 + $0x80] sm:$0xff] %vm1837, %v3951
      %4031 = vst.msk [vmem:[#allocation5 + $0x88] sm:$0xff] %vm1837, %v3953
      %4032 = vst.msk [vmem:[#allocation5 + $0x90] sm:$0xff] %vm1837, %v3955
      %4033 = vst.msk [vmem:[#allocation5 + $0x98] sm:$0xff] %vm1837, %v3957
      %4034 = vst.msk [vmem:[#allocation5 + $0xa0] sm:$0xff] %vm1837, %v3959
      %4035 = vst.msk [vmem:[#allocation5 + $0xa8] sm:$0xff] %vm1837, %v3961
      %4036 = vst.msk [vmem:[#allocation5 + $0xb0] sm:$0xff] %vm1837, %v3963
      %4037 = vst.msk [vmem:[#allocation5 + $0xb8] sm:$0xff] %vm1837, %v3965
      %4038 = vst.msk [vmem:[#allocation5 + $0xc0] sm:$0xff] %vm1837, %v3967
      %4039 = vst.msk [vmem:[#allocation5 + $0xc8] sm:$0xff] %vm1837, %v3969
      %4040 = vst.msk [vmem:[#allocation5 + $0xd0] sm:$0xff] %vm1837, %v3971
      %4041 = vst.msk [vmem:[#allocation5 + $0xd8] sm:$0xff] %vm1837, %v3973
      %4042 = vst.msk [vmem:[#allocation5 + $0xe0] sm:$0xff] %vm1837, %v3975
      %4043 = vst.msk [vmem:[#allocation5 + $0xe8] sm:$0xff] %vm1837, %v3977
      %4044 = vst.msk [vmem:[#allocation5 + $0xf0] sm:$0xff] %vm1837, %v3979
      %4045 = vst.msk [vmem:[#allocation5 + $0xf8] sm:$0xff] %vm1837, %v3981
      %v4046 = vld [vmem:[%s3853 + $0x3] sm:$0xff]
      %v4047 = vld [vmem:[%s3853 + $0xb] sm:$0xff]
      %v4048 = vld [vmem:[%s3853 + $0x1b] sm:$0xff]
      %v4049 = vld [vmem:[%s3853 + $0x23] sm:$0xff]
      %v4050 = vld [vmem:[%s3853 + $0x33] sm:$0xff]
      %v4051 = vld [vmem:[%s3853 + $0x3b] sm:$0xff]
      %v4052 = vld [vmem:[%s3853 + $0x4b] sm:$0xff]
      %v4053 = vld [vmem:[%s3853 + $0x53] sm:$0xff]
      %v4054 = vld [vmem:[%s3853 + $0x63] sm:$0xff]
      %v4055 = vld [vmem:[%s3853 + $0x6b] sm:$0xff]
      %v4056 = vld [vmem:[%s3853 + $0x7b] sm:$0xff]
      %v4057 = vld [vmem:[%s3853 + $0x83] sm:$0xff]
      %v4058 = vld [vmem:[%s3853 + $0x93] sm:$0xff]
      %v4059 = vld [vmem:[%s3853 + $0x9b] sm:$0xff]
      %v4060 = vld [vmem:[%s3853 + $0xab] sm:$0xff]
      %v4061 = vld [vmem:[%s3853 + $0xb3] sm:$0xff]
      %v4062 = vld [vmem:[%s3853 + $0xc3] sm:$0xff]
      %v4063 = vld [vmem:[%s3853 + $0xcb] sm:$0xff]
      %v4064 = vld [vmem:[%s3853 + $0xdb] sm:$0xff]
      %v4065 = vld [vmem:[%s3853 + $0xe3] sm:$0xff]
      %v4066 = vld [vmem:[%s3853 + $0xf3] sm:$0xff]
      %v4067 = vld [vmem:[%s3853 + $0xfb] sm:$0xff]
      %v4068 = vld [vmem:[%s3853 + $0x10b] sm:$0xff]
      %v4069 = vld [vmem:[%s3853 + $0x113] sm:$0xff]
      %v4070 = vld [vmem:[%s3853 + $0x123] sm:$0xff]
      %v4071 = vld [vmem:[%s3853 + $0x12b] sm:$0xff]
      %v4072 = vld [vmem:[%s3853 + $0x13b] sm:$0xff]
      %v4073 = vld [vmem:[%s3853 + $0x143] sm:$0xff]
      %v4074 = vld [vmem:[%s3853 + $0x153] sm:$0xff]
      %v4075 = vld [vmem:[%s3853 + $0x15b] sm:$0xff]
      %v4076 = vld [vmem:[%s3853 + $0x16b] sm:$0xff]
      %v4077 = vld [vmem:[%s3853 + $0x173] sm:$0xff]
      %4110 = vrot.lane.b32.xlu0 %v4046, 56
      %v4111 = vpop.permute.xlu0 %4110
      %4112 = vrot.lane.b32.xlu0 %v4047, 56
      %v4113 = vpop.permute.xlu0 %4112
      %4114 = vrot.lane.b32.xlu0 %v4048, 56
      %v4115 = vpop.permute.xlu0 %4114
      %4116 = vrot.lane.b32.xlu0 %v4049, 56
      %v4117 = vpop.permute.xlu0 %4116
      %4118 = vrot.lane.b32.xlu0 %v4050, 56
      %v4119 = vpop.permute.xlu0 %4118
      %4120 = vrot.lane.b32.xlu0 %v4051, 56
      %v4121 = vpop.permute.xlu0 %4120
      %4122 = vrot.lane.b32.xlu0 %v4052, 56
      %v4123 = vpop.permute.xlu0 %4122
      %4124 = vrot.lane.b32.xlu0 %v4053, 56
      %v4125 = vpop.permute.xlu0 %4124
      %4126 = vrot.lane.b32.xlu0 %v4054, 56
      %v4127 = vpop.permute.xlu0 %4126
      %4128 = vrot.lane.b32.xlu0 %v4055, 56
      %v4129 = vpop.permute.xlu0 %4128
      %4130 = vrot.lane.b32.xlu0 %v4056, 56
      %v4131 = vpop.permute.xlu0 %4130
      %4132 = vrot.lane.b32.xlu0 %v4057, 56
      %v4133 = vpop.permute.xlu0 %4132
      %4134 = vrot.lane.b32.xlu0 %v4058, 56
      %v4135 = vpop.permute.xlu0 %4134
      %4136 = vrot.lane.b32.xlu0 %v4059, 56
      %v4137 = vpop.permute.xlu0 %4136
      %4138 = vrot.lane.b32.xlu0 %v4060, 56
      %v4139 = vpop.permute.xlu0 %4138
      %4140 = vrot.lane.b32.xlu0 %v4061, 56
      %v4141 = vpop.permute.xlu0 %4140
      %4142 = vrot.lane.b32.xlu0 %v4062, 56
      %v4143 = vpop.permute.xlu0 %4142
      %4144 = vrot.lane.b32.xlu0 %v4063, 56
      %v4145 = vpop.permute.xlu0 %4144
      %4146 = vrot.lane.b32.xlu0 %v4064, 56
      %v4147 = vpop.permute.xlu0 %4146
      %4148 = vrot.lane.b32.xlu0 %v4065, 56
      %v4149 = vpop.permute.xlu0 %4148
      %4150 = vrot.lane.b32.xlu0 %v4066, 56
      %v4151 = vpop.permute.xlu0 %4150
      %4152 = vrot.lane.b32.xlu0 %v4067, 56
      %v4153 = vpop.permute.xlu0 %4152
      %4154 = vrot.lane.b32.xlu0 %v4068, 56
      %v4155 = vpop.permute.xlu0 %4154
      %4156 = vrot.lane.b32.xlu0 %v4069, 56
      %v4157 = vpop.permute.xlu0 %4156
      %4158 = vrot.lane.b32.xlu0 %v4070, 56
      %v4159 = vpop.permute.xlu0 %4158
      %4160 = vrot.lane.b32.xlu0 %v4071, 56
      %v4161 = vpop.permute.xlu0 %4160
      %4162 = vrot.lane.b32.xlu0 %v4072, 56
      %v4163 = vpop.permute.xlu0 %4162
      %4164 = vrot.lane.b32.xlu0 %v4073, 56
      %v4165 = vpop.permute.xlu0 %4164
      %4166 = vrot.lane.b32.xlu0 %v4074, 56
      %v4167 = vpop.permute.xlu0 %4166
      %4168 = vrot.lane.b32.xlu0 %v4075, 56
      %v4169 = vpop.permute.xlu0 %4168
      %4170 = vrot.lane.b32.xlu0 %v4076, 56
      %v4171 = vpop.permute.xlu0 %4170
      %4172 = vrot.lane.b32.xlu0 %v4077, 56
      %v4173 = vpop.permute.xlu0 %4172
      %4206 = vst.msk [vmem:[#allocation5] sm:$0xff] %vm2030, %v4111
      %4207 = vst.msk [vmem:[#allocation5 + $0x8] sm:$0xff] %vm2030, %v4113
      %4208 = vst.msk [vmem:[#allocation5 + $0x10] sm:$0xff] %vm2030, %v4115
      %4209 = vst.msk [vmem:[#allocation5 + $0x18] sm:$0xff] %vm2030, %v4117
      %4210 = vst.msk [vmem:[#allocation5 + $0x20] sm:$0xff] %vm2030, %v4119
      %4211 = vst.msk [vmem:[#allocation5 + $0x28] sm:$0xff] %vm2030, %v4121
      %4212 = vst.msk [vmem:[#allocation5 + $0x30] sm:$0xff] %vm2030, %v4123
      %4213 = vst.msk [vmem:[#allocation5 + $0x38] sm:$0xff] %vm2030, %v4125
      %4214 = vst.msk [vmem:[#allocation5 + $0x40] sm:$0xff] %vm2030, %v4127
      %4215 = vst.msk [vmem:[#allocation5 + $0x48] sm:$0xff] %vm2030, %v4129
      %4216 = vst.msk [vmem:[#allocation5 + $0x50] sm:$0xff] %vm2030, %v4131
      %4217 = vst.msk [vmem:[#allocation5 + $0x58] sm:$0xff] %vm2030, %v4133
      %4218 = vst.msk [vmem:[#allocation5 + $0x60] sm:$0xff] %vm2030, %v4135
      %4219 = vst.msk [vmem:[#allocation5 + $0x68] sm:$0xff] %vm2030, %v4137
      %4220 = vst.msk [vmem:[#allocation5 + $0x70] sm:$0xff] %vm2030, %v4139
      %4221 = vst.msk [vmem:[#allocation5 + $0x78] sm:$0xff] %vm2030, %v4141
      %4222 = vst.msk [vmem:[#allocation5 + $0x80] sm:$0xff] %vm2030, %v4143
      %4223 = vst.msk [vmem:[#allocation5 + $0x88] sm:$0xff] %vm2030, %v4145
      %4224 = vst.msk [vmem:[#allocation5 + $0x90] sm:$0xff] %vm2030, %v4147
      %4225 = vst.msk [vmem:[#allocation5 + $0x98] sm:$0xff] %vm2030, %v4149
      %4226 = vst.msk [vmem:[#allocation5 + $0xa0] sm:$0xff] %vm2030, %v4151
      %4227 = vst.msk [vmem:[#allocation5 + $0xa8] sm:$0xff] %vm2030, %v4153
      %4228 = vst.msk [vmem:[#allocation5 + $0xb0] sm:$0xff] %vm2030, %v4155
      %4229 = vst.msk [vmem:[#allocation5 + $0xb8] sm:$0xff] %vm2030, %v4157
      %4230 = vst.msk [vmem:[#allocation5 + $0xc0] sm:$0xff] %vm2030, %v4159
      %4231 = vst.msk [vmem:[#allocation5 + $0xc8] sm:$0xff] %vm2030, %v4161
      %4232 = vst.msk [vmem:[#allocation5 + $0xd0] sm:$0xff] %vm2030, %v4163
      %4233 = vst.msk [vmem:[#allocation5 + $0xd8] sm:$0xff] %vm2030, %v4165
      %4234 = vst.msk [vmem:[#allocation5 + $0xe0] sm:$0xff] %vm2030, %v4167
      %4235 = vst.msk [vmem:[#allocation5 + $0xe8] sm:$0xff] %vm2030, %v4169
      %4236 = vst.msk [vmem:[#allocation5 + $0xf0] sm:$0xff] %vm2030, %v4171
      %4237 = vst.msk [vmem:[#allocation5 + $0xf8] sm:$0xff] %vm2030, %v4173
      %v4238 = vld [vmem:[%s3853 + $0x6] sm:$0xff]
      %v4239 = vld [vmem:[%s3853 + $0xe] sm:$0xff]
      %v4240 = vld [vmem:[%s3853 + $0x1e] sm:$0xff]
      %v4241 = vld [vmem:[%s3853 + $0x26] sm:$0xff]
      %v4242 = vld [vmem:[%s3853 + $0x36] sm:$0xff]
      %v4243 = vld [vmem:[%s3853 + $0x3e] sm:$0xff]
      %v4244 = vld [vmem:[%s3853 + $0x4e] sm:$0xff]
      %v4245 = vld [vmem:[%s3853 + $0x56] sm:$0xff]
      %v4246 = vld [vmem:[%s3853 + $0x66] sm:$0xff]
      %v4247 = vld [vmem:[%s3853 + $0x6e] sm:$0xff]
      %v4248 = vld [vmem:[%s3853 + $0x7e] sm:$0xff]
      %v4249 = vld [vmem:[%s3853 + $0x86] sm:$0xff]
      %v4250 = vld [vmem:[%s3853 + $0x96] sm:$0xff]
      %v4251 = vld [vmem:[%s3853 + $0x9e] sm:$0xff]
      %v4252 = vld [vmem:[%s3853 + $0xae] sm:$0xff]
      %v4253 = vld [vmem:[%s3853 + $0xb6] sm:$0xff]
      %v4254 = vld [vmem:[%s3853 + $0xc6] sm:$0xff]
      %v4255 = vld [vmem:[%s3853 + $0xce] sm:$0xff]
      %v4256 = vld [vmem:[%s3853 + $0xde] sm:$0xff]
      %v4257 = vld [vmem:[%s3853 + $0xe6] sm:$0xff]
      %v4258 = vld [vmem:[%s3853 + $0xf6] sm:$0xff]
      %v4259 = vld [vmem:[%s3853 + $0xfe] sm:$0xff]
      %v4260 = vld [vmem:[%s3853 + $0x10e] sm:$0xff]
      %v4261 = vld [vmem:[%s3853 + $0x116] sm:$0xff]
      %v4262 = vld [vmem:[%s3853 + $0x126] sm:$0xff]
      %v4263 = vld [vmem:[%s3853 + $0x12e] sm:$0xff]
      %v4264 = vld [vmem:[%s3853 + $0x13e] sm:$0xff]
      %v4265 = vld [vmem:[%s3853 + $0x146] sm:$0xff]
      %v4266 = vld [vmem:[%s3853 + $0x156] sm:$0xff]
      %v4267 = vld [vmem:[%s3853 + $0x15e] sm:$0xff]
      %v4268 = vld [vmem:[%s3853 + $0x16e] sm:$0xff]
      %v4269 = vld [vmem:[%s3853 + $0x176] sm:$0xff]
      %4302 = vrot.lane.b32.xlu0 %v4238, 64
      %v4303 = vpop.permute.xlu0 %4302
      %4304 = vrot.lane.b32.xlu0 %v4239, 64
      %v4305 = vpop.permute.xlu0 %4304
      %4306 = vrot.lane.b32.xlu0 %v4240, 64
      %v4307 = vpop.permute.xlu0 %4306
      %4308 = vrot.lane.b32.xlu0 %v4241, 64
      %v4309 = vpop.permute.xlu0 %4308
      %4310 = vrot.lane.b32.xlu0 %v4242, 64
      %v4311 = vpop.permute.xlu0 %4310
      %4312 = vrot.lane.b32.xlu0 %v4243, 64
      %v4313 = vpop.permute.xlu0 %4312
      %4314 = vrot.lane.b32.xlu0 %v4244, 64
      %v4315 = vpop.permute.xlu0 %4314
      %4316 = vrot.lane.b32.xlu0 %v4245, 64
      %v4317 = vpop.permute.xlu0 %4316
      %4318 = vrot.lane.b32.xlu0 %v4246, 64
      %v4319 = vpop.permute.xlu0 %4318
      %4320 = vrot.lane.b32.xlu0 %v4247, 64
      %v4321 = vpop.permute.xlu0 %4320
      %4322 = vrot.lane.b32.xlu0 %v4248, 64
      %v4323 = vpop.permute.xlu0 %4322
      %4324 = vrot.lane.b32.xlu0 %v4249, 64
      %v4325 = vpop.permute.xlu0 %4324
      %4326 = vrot.lane.b32.xlu0 %v4250, 64
      %v4327 = vpop.permute.xlu0 %4326
      %4328 = vrot.lane.b32.xlu0 %v4251, 64
      %v4329 = vpop.permute.xlu0 %4328
      %4330 = vrot.lane.b32.xlu0 %v4252, 64
      %v4331 = vpop.permute.xlu0 %4330
      %4332 = vrot.lane.b32.xlu0 %v4253, 64
      %v4333 = vpop.permute.xlu0 %4332
      %4334 = vrot.lane.b32.xlu0 %v4254, 64
      %v4335 = vpop.permute.xlu0 %4334
      %4336 = vrot.lane.b32.xlu0 %v4255, 64
      %v4337 = vpop.permute.xlu0 %4336
      %4338 = vrot.lane.b32.xlu0 %v4256, 64
      %v4339 = vpop.permute.xlu0 %4338
      %4340 = vrot.lane.b32.xlu0 %v4257, 64
      %v4341 = vpop.permute.xlu0 %4340
      %4342 = vrot.lane.b32.xlu0 %v4258, 64
      %v4343 = vpop.permute.xlu0 %4342
      %4344 = vrot.lane.b32.xlu0 %v4259, 64
      %v4345 = vpop.permute.xlu0 %4344
      %4346 = vrot.lane.b32.xlu0 %v4260, 64
      %v4347 = vpop.permute.xlu0 %4346
      %4348 = vrot.lane.b32.xlu0 %v4261, 64
      %v4349 = vpop.permute.xlu0 %4348
      %4350 = vrot.lane.b32.xlu0 %v4262, 64
      %v4351 = vpop.permute.xlu0 %4350
      %4352 = vrot.lane.b32.xlu0 %v4263, 64
      %v4353 = vpop.permute.xlu0 %4352
      %4354 = vrot.lane.b32.xlu0 %v4264, 64
      %v4355 = vpop.permute.xlu0 %4354
      %4356 = vrot.lane.b32.xlu0 %v4265, 64
      %v4357 = vpop.permute.xlu0 %4356
      %4358 = vrot.lane.b32.xlu0 %v4266, 64
      %v4359 = vpop.permute.xlu0 %4358
      %4360 = vrot.lane.b32.xlu0 %v4267, 64
      %v4361 = vpop.permute.xlu0 %4360
      %4362 = vrot.lane.b32.xlu0 %v4268, 64
      %v4363 = vpop.permute.xlu0 %4362
      %4364 = vrot.lane.b32.xlu0 %v4269, 64
      %v4365 = vpop.permute.xlu0 %4364
      %4398 = vst.msk [vmem:[#allocation5] sm:$0xff] %vm2223, %v4303
      %4399 = vst.msk [vmem:[#allocation5 + $0x8] sm:$0xff] %vm2223, %v4305
      %4400 = vst.msk [vmem:[#allocation5 + $0x10] sm:$0xff] %vm2223, %v4307
      %4401 = vst.msk [vmem:[#allocation5 + $0x18] sm:$0xff] %vm2223, %v4309
      %4402 = vst.msk [vmem:[#allocation5 + $0x20] sm:$0xff] %vm2223, %v4311
      %4403 = vst.msk [vmem:[#allocation5 + $0x28] sm:$0xff] %vm2223, %v4313
      %4404 = vst.msk [vmem:[#allocation5 + $0x30] sm:$0xff] %vm2223, %v4315
      %4405 = vst.msk [vmem:[#allocation5 + $0x38] sm:$0xff] %vm2223, %v4317
      %4406 = vst.msk [vmem:[#allocation5 + $0x40] sm:$0xff] %vm2223, %v4319
      %4407 = vst.msk [vmem:[#allocation5 + $0x48] sm:$0xff] %vm2223, %v4321
      %4408 = vst.msk [vmem:[#allocation5 + $0x50] sm:$0xff] %vm2223, %v4323
      %4409 = vst.msk [vmem:[#allocation5 + $0x58] sm:$0xff] %vm2223, %v4325
      %4410 = vst.msk [vmem:[#allocation5 + $0x60] sm:$0xff] %vm2223, %v4327
      %4411 = vst.msk [vmem:[#allocation5 + $0x68] sm:$0xff] %vm2223, %v4329
      %4412 = vst.msk [vmem:[#allocation5 + $0x70] sm:$0xff] %vm2223, %v4331
      %4413 = vst.msk [vmem:[#allocation5 + $0x78] sm:$0xff] %vm2223, %v4333
      %4414 = vst.msk [vmem:[#allocation5 + $0x80] sm:$0xff] %vm2223, %v4335
      %4415 = vst.msk [vmem:[#allocation5 + $0x88] sm:$0xff] %vm2223, %v4337
      %4416 = vst.msk [vmem:[#allocation5 + $0x90] sm:$0xff] %vm2223, %v4339
      %4417 = vst.msk [vmem:[#allocation5 + $0x98] sm:$0xff] %vm2223, %v4341
      %4418 = vst.msk [vmem:[#allocation5 + $0xa0] sm:$0xff] %vm2223, %v4343
      %4419 = vst.msk [vmem:[#allocation5 + $0xa8] sm:$0xff] %vm2223, %v4345
      %4420 = vst.msk [vmem:[#allocation5 + $0xb0] sm:$0xff] %vm2223, %v4347
      %4421 = vst.msk [vmem:[#allocation5 + $0xb8] sm:$0xff] %vm2223, %v4349
      %4422 = vst.msk [vmem:[#allocation5 + $0xc0] sm:$0xff] %vm2223, %v4351
      %4423 = vst.msk [vmem:[#allocation5 + $0xc8] sm:$0xff] %vm2223, %v4353
      %4424 = vst.msk [vmem:[#allocation5 + $0xd0] sm:$0xff] %vm2223, %v4355
      %4425 = vst.msk [vmem:[#allocation5 + $0xd8] sm:$0xff] %vm2223, %v4357
      %4426 = vst.msk [vmem:[#allocation5 + $0xe0] sm:$0xff] %vm2223, %v4359
      %4427 = vst.msk [vmem:[#allocation5 + $0xe8] sm:$0xff] %vm2223, %v4361
      %4428 = vst.msk [vmem:[#allocation5 + $0xf0] sm:$0xff] %vm2223, %v4363
      %4429 = vst.msk [vmem:[#allocation5 + $0xf8] sm:$0xff] %vm2223, %v4365
      %v4430 = vld [vmem:[#allocation5] sm:$0xff]
      %v4431 = vld [vmem:[#allocation5 + $0x8] sm:$0xff]
      %v4432 = vld [vmem:[#allocation5 + $0x10] sm:$0xff]
      %v4433 = vld [vmem:[#allocation5 + $0x18] sm:$0xff]
      %v4434 = vld [vmem:[#allocation5 + $0x20] sm:$0xff]
      %v4435 = vld [vmem:[#allocation5 + $0x28] sm:$0xff]
      %v4436 = vld [vmem:[#allocation5 + $0x30] sm:$0xff]
      %v4437 = vld [vmem:[#allocation5 + $0x38] sm:$0xff]
      %v4438 = vld [vmem:[#allocation5 + $0x40] sm:$0xff]
      %v4439 = vld [vmem:[#allocation5 + $0x48] sm:$0xff]
      %v4440 = vld [vmem:[#allocation5 + $0x50] sm:$0xff]
      %v4441 = vld [vmem:[#allocation5 + $0x58] sm:$0xff]
      %v4442 = vld [vmem:[#allocation5 + $0x60] sm:$0xff]
      %v4443 = vld [vmem:[#allocation5 + $0x68] sm:$0xff]
      %v4444 = vld [vmem:[#allocation5 + $0x70] sm:$0xff]
      %v4445 = vld [vmem:[#allocation5 + $0x78] sm:$0xff]
      %v4446 = vld [vmem:[#allocation5 + $0x80] sm:$0xff]
      %v4447 = vld [vmem:[#allocation5 + $0x88] sm:$0xff]
      %v4448 = vld [vmem:[#allocation5 + $0x90] sm:$0xff]
      %v4449 = vld [vmem:[#allocation5 + $0x98] sm:$0xff]
      %v4450 = vld [vmem:[#allocation5 + $0xa0] sm:$0xff]
      %v4451 = vld [vmem:[#allocation5 + $0xa8] sm:$0xff]
      %v4452 = vld [vmem:[#allocation5 + $0xb0] sm:$0xff]
      %v4453 = vld [vmem:[#allocation5 + $0xb8] sm:$0xff]
      %v4454 = vld [vmem:[#allocation5 + $0xc0] sm:$0xff]
      %v4455 = vld [vmem:[#allocation5 + $0xc8] sm:$0xff]
      %v4456 = vld [vmem:[#allocation5 + $0xd0] sm:$0xff]
      %v4457 = vld [vmem:[#allocation5 + $0xd8] sm:$0xff]
      %v4458 = vld [vmem:[#allocation5 + $0xe0] sm:$0xff]
      %v4459 = vld [vmem:[#allocation5 + $0xe8] sm:$0xff]
      %v4460 = vld [vmem:[#allocation5 + $0xf0] sm:$0xff]
      %v4461 = vld [vmem:[#allocation5 + $0xf8] sm:$0xff]
      %v4462 = vld [vmem:[%s5] sm:$0xff]
      %v4463 = vld [vmem:[%s5 + $0x8] sm:$0xff]
      %v4464 = vld [vmem:[%s5 + $0x10] sm:$0xff]
      %v4465 = vld [vmem:[%s5 + $0x18] sm:$0xff]
      %v4466 = vld [vmem:[%s5 + $0x20] sm:$0xff]
      %v4467 = vld [vmem:[%s5 + $0x28] sm:$0xff]
      %v4468 = vld [vmem:[%s5 + $0x30] sm:$0xff]
      %v4469 = vld [vmem:[%s5 + $0x38] sm:$0xff]
      %v4470 = vld [vmem:[%s5 + $0x40] sm:$0xff]
      %v4472 = vsel %vm2297, %v4430, 0
      %v4475 = vsel %vm2297, %v4431, 0
      %v4478 = vsel %vm2297, %v4432, 0
      %v4481 = vsel %vm2297, %v4433, 0
      %v4484 = vsel %vm2297, %v4434, 0
      %v4487 = vsel %vm2297, %v4435, 0
      %v4490 = vsel %vm2297, %v4436, 0
      %v4493 = vsel %vm2297, %v4437, 0
      %v4496 = vsel %vm2297, %v4438, 0
      %v4499 = vsel %vm2297, %v4439, 0
      %v4502 = vsel %vm2297, %v4440, 0
      %v4505 = vsel %vm2297, %v4441, 0
      %v4508 = vsel %vm2297, %v4442, 0
      %v4511 = vsel %vm2297, %v4443, 0
      %v4514 = vsel %vm2297, %v4444, 0
      %v4517 = vsel %vm2297, %v4445, 0
      %v4520 = vsel %vm2297, %v4446, 0
      %v4523 = vsel %vm2297, %v4447, 0
      %v4526 = vsel %vm2297, %v4448, 0
      %v4529 = vsel %vm2297, %v4449, 0
      %v4532 = vsel %vm2297, %v4450, 0
      %v4535 = vsel %vm2297, %v4451, 0
      %v4538 = vsel %vm2297, %v4452, 0
      %v4541 = vsel %vm2297, %v4453, 0
      %v4544 = vsel %vm2297, %v4454, 0
      %v4547 = vsel %vm2297, %v4455, 0
      %v4550 = vsel %vm2297, %v4456, 0
      %v4553 = vsel %vm2297, %v4457, 0
      %v4556 = vsel %vm2297, %v4458, 0
      %v4559 = vsel %vm2297, %v4459, 0
      %v4562 = vsel %vm2297, %v4460, 0
      %v4565 = vsel %vm2297, %v4461, 0
      %4567 = vmatprep.subr.mxu0 0.0
      %4568 = vmatpush1.msra.mxu0 %v4462
      %4569 = vmatprep.subr.mxu0 0.0
      %4570 = vmatpush1.msra.mxu0 %v4463
      %4571 = vmatprep.subr.mxu0 0.0
      %4572 = vmatpush1.msra.mxu0 %v4464
      %4573 = vmatprep.subr.mxu0 0.0
      %4574 = vmatpush1.msra.mxu0 %v4465
      %4575 = vmatprep.subr.mxu0 0.0
      %4576 = vmatpush1.msra.mxu0 %v4466
      %4577 = vmatprep.subr.mxu0 0.0
      %4578 = vmatpush1.msra.mxu0 %v4467
      %4579 = vmatprep.subr.mxu0 0.0
      %4580 = vmatpush1.msra.mxu0 %v4468
      %4581 = vmatprep.subr.mxu0 0.0
      %4582 = vmatpush1.msra.mxu0 %v4469
      %4583 = vmatprep.subr.mxu0 0.0
      %4584 = vmatpush1.msra.mxu0 %v4470
      %4585 = vmatprep.subr.mxu0 0.0
      %4586 = vmatpush1.msra.mxu0 0.0
      %4587 = vmatprep.subr.mxu0 0.0
      %4588 = vmatpush1.msra.mxu0 0.0
      %4589 = vmatprep.subr.mxu0 0.0
      %4590 = vmatpush1.msra.mxu0 0.0
      %4591 = vmatprep.subr.mxu0 0.0
      %4592 = vmatpush1.msra.mxu0 0.0
      %4593 = vmatprep.subr.mxu0 0.0
      %4594 = vmatpush1.msra.mxu0 0.0
      %4595 = vmatprep.subr.mxu0 0.0
      %4596 = vmatpush1.msra.mxu0 0.0
      %4597 = vmatprep.subr.mxu0 0.0
      %4598 = vmatpush1.msra.mxu0 0.0
      %4599 = vmatprep.subr.mxu0 0.0
      %4600 = vmatpush1.msra.mxu0 0.0
      %4601 = vmatprep.subr.mxu0 0.0
      %4602 = vmatpush1.msra.mxu0 0.0
      %4603 = vmatprep.subr.mxu0 0.0
      %4604 = vmatpush1.msra.mxu0 0.0
      %4605 = vmatprep.subr.mxu0 0.0
      %4606 = vmatpush1.msra.mxu0 0.0
      %4607 = vmatprep.subr.mxu0 0.0
      %4608 = vmatpush1.msra.mxu0 0.0
      %4609 = vmatprep.subr.mxu0 0.0
      %4610 = vmatpush1.msra.mxu0 0.0
      %4611 = vmatprep.subr.mxu0 0.0
      %4612 = vmatpush1.msra.mxu0 0.0
      %4613 = vmatprep.subr.mxu0 0.0
      %4614 = vmatpush1.msra.mxu0 0.0
      %4615 = vmatprep.subr.mxu0 0.0
      %4616 = vmatpush1.msra.mxu0 0.0
      %4617 = vmatprep.subr.mxu0 0.0
      %4618 = vmatpush1.msra.mxu0 0.0
      %4619 = vmatprep.subr.mxu0 0.0
      %4620 = vmatpush1.msra.mxu0 0.0
      %4621 = vmatprep.subr.mxu0 0.0
      %4622 = vmatpush1.msra.mxu0 0.0
      %4623 = vmatprep.subr.mxu0 0.0
      %4624 = vmatpush1.msra.mxu0 0.0
      %4625 = vmatprep.subr.mxu0 0.0
      %4626 = vmatpush1.msra.mxu0 0.0
      %4627 = vmatprep.subr.mxu0 0.0
      %4628 = vmatpush1.msra.mxu0 0.0
      %4629 = vmatprep.subr.mxu0 0.0
      %4630 = vmatpush1.msra.mxu0 0.0
      %4631 = vmatprep.mubr.f32.mxu0 0.0
      %4632 = vmatmul.mubr.f32.gmra.mrb[0].mxu0 %v4472
      %v4633 = vpop.f32.mrb[0].mxu0
      %v4634 = vadd.f32 0.0, %v4633
      %v4635 = vpop.f32.mrb[0].mxu0
      %4636 = vmatprep.mubr.f32.mxu0 0.0
      %4637 = vmatmul.mubr.f32.gmra.mrb[0].mxu0 %v4475
      %v4638 = vpop.f32.mrb[0].mxu0
      %v4639 = vadd.f32 0.0, %v4638
      %v4640 = vpop.f32.mrb[0].mxu0
      %4641 = vmatprep.mubr.f32.mxu0 0.0
      %4642 = vmatmul.mubr.f32.gmra.mrb[0].mxu0 %v4478
      %v4643 = vpop.f32.mrb[0].mxu0
      %v4644 = vadd.f32 0.0, %v4643
      %v4645 = vpop.f32.mrb[0].mxu0
      %4646 = vmatprep.mubr.f32.mxu0 0.0
      %4647 = vmatmul.mubr.f32.gmra.mrb[0].mxu0 %v4481
      %v4648 = vpop.f32.mrb[0].mxu0
      %v4649 = vadd.f32 0.0, %v4648
      %v4650 = vpop.f32.mrb[0].mxu0
      %4651 = vmatprep.mubr.f32.mxu0 0.0
      %4652 = vmatmul.mubr.f32.gmra.mrb[0].mxu0 %v4484
      %v4653 = vpop.f32.mrb[0].mxu0
      %v4654 = vadd.f32 0.0, %v4653
      %v4655 = vpop.f32.mrb[0].mxu0
      %4656 = vmatprep.mubr.f32.mxu0 0.0
      %4657 = vmatmul.mubr.f32.gmra.mrb[0].mxu0 %v4487
      %v4658 = vpop.f32.mrb[0].mxu0
      %v4659 = vadd.f32 0.0, %v4658
      %v4660 = vpop.f32.mrb[0].mxu0
      %4661 = vmatprep.mubr.f32.mxu0 0.0
      %4662 = vmatmul.mubr.f32.gmra.mrb[0].mxu0 %v4490
      %v4663 = vpop.f32.mrb[0].mxu0
      %v4664 = vadd.f32 0.0, %v4663
      %v4665 = vpop.f32.mrb[0].mxu0
      %4666 = vmatprep.mubr.f32.mxu0 0.0
      %4667 = vmatmul.mubr.f32.gmra.mrb[0].mxu0 %v4493
      %v4668 = vpop.f32.mrb[0].mxu0
      %v4669 = vadd.f32 0.0, %v4668
      %v4670 = vpop.f32.mrb[0].mxu0
      %4671 = vmatprep.mubr.f32.mxu0 0.0
      %4672 = vmatmul.mubr.f32.gmra.mrb[0].mxu0 %v4496
      %v4673 = vpop.f32.mrb[0].mxu0
      %v4674 = vadd.f32 0.0, %v4673
      %v4675 = vpop.f32.mrb[0].mxu0
      %4676 = vmatprep.mubr.f32.mxu0 0.0
      %4677 = vmatmul.mubr.f32.gmra.mrb[0].mxu0 %v4499
      %v4678 = vpop.f32.mrb[0].mxu0
      %v4679 = vadd.f32 0.0, %v4678
      %v4680 = vpop.f32.mrb[0].mxu0
      %4681 = vmatprep.mubr.f32.mxu0 0.0
      %4682 = vmatmul.mubr.f32.gmra.mrb[0].mxu0 %v4502
      %v4683 = vpop.f32.mrb[0].mxu0
      %v4684 = vadd.f32 0.0, %v4683
      %v4685 = vpop.f32.mrb[0].mxu0
      %4686 = vmatprep.mubr.f32.mxu0 0.0
      %4687 = vmatmul.mubr.f32.gmra.mrb[0].mxu0 %v4505
      %v4688 = vpop.f32.mrb[0].mxu0
      %v4689 = vadd.f32 0.0, %v4688
      %v4690 = vpop.f32.mrb[0].mxu0
      %4691 = vmatprep.mubr.f32.mxu0 0.0
      %4692 = vmatmul.mubr.f32.gmra.mrb[0].mxu0 %v4508
      %v4693 = vpop.f32.mrb[0].mxu0
      %v4694 = vadd.f32 0.0, %v4693
      %v4695 = vpop.f32.mrb[0].mxu0
      %4696 = vmatprep.mubr.f32.mxu0 0.0
      %4697 = vmatmul.mubr.f32.gmra.mrb[0].mxu0 %v4511
      %v4698 = vpop.f32.mrb[0].mxu0
      %v4699 = vadd.f32 0.0, %v4698
      %v4700 = vpop.f32.mrb[0].mxu0
      %4701 = vmatprep.mubr.f32.mxu0 0.0
      %4702 = vmatmul.mubr.f32.gmra.mrb[0].mxu0 %v4514
      %v4703 = vpop.f32.mrb[0].mxu0
      %v4704 = vadd.f32 0.0, %v4703
      %v4705 = vpop.f32.mrb[0].mxu0
      %4706 = vmatprep.mubr.f32.mxu0 0.0
      %4707 = vmatmul.mubr.f32.gmra.mrb[0].mxu0 %v4517
      %v4708 = vpop.f32.mrb[0].mxu0
      %v4709 = vadd.f32 0.0, %v4708
      %v4710 = vpop.f32.mrb[0].mxu0
      %4711 = vmatprep.mubr.f32.mxu0 0.0
      %4712 = vmatmul.mubr.f32.gmra.mrb[0].mxu0 %v4520
      %v4713 = vpop.f32.mrb[0].mxu0
      %v4714 = vadd.f32 0.0, %v4713
      %v4715 = vpop.f32.mrb[0].mxu0
      %4716 = vmatprep.mubr.f32.mxu0 0.0
      %4717 = vmatmul.mubr.f32.gmra.mrb[0].mxu0 %v4523
      %v4718 = vpop.f32.mrb[0].mxu0
      %v4719 = vadd.f32 0.0, %v4718
      %v4720 = vpop.f32.mrb[0].mxu0
      %4721 = vmatprep.mubr.f32.mxu0 0.0
      %4722 = vmatmul.mubr.f32.gmra.mrb[0].mxu0 %v4526
      %v4723 = vpop.f32.mrb[0].mxu0
      %v4724 = vadd.f32 0.0, %v4723
      %v4725 = vpop.f32.mrb[0].mxu0
      %4726 = vmatprep.mubr.f32.mxu0 0.0
      %4727 = vmatmul.mubr.f32.gmra.mrb[0].mxu0 %v4529
      %v4728 = vpop.f32.mrb[0].mxu0
      %v4729 = vadd.f32 0.0, %v4728
      %v4730 = vpop.f32.mrb[0].mxu0
      %4731 = vmatprep.mubr.f32.mxu0 0.0
      %4732 = vmatmul.mubr.f32.gmra.mrb[0].mxu0 %v4532
      %v4733 = vpop.f32.mrb[0].mxu0
      %v4734 = vadd.f32 0.0, %v4733
      %v4735 = vpop.f32.mrb[0].mxu0
      %4736 = vmatprep.mubr.f32.mxu0 0.0
      %4737 = vmatmul.mubr.f32.gmra.mrb[0].mxu0 %v4535
      %v4738 = vpop.f32.mrb[0].mxu0
      %v4739 = vadd.f32 0.0, %v4738
      %v4740 = vpop.f32.mrb[0].mxu0
      %4741 = vmatprep.mubr.f32.mxu0 0.0
      %4742 = vmatmul.mubr.f32.gmra.mrb[0].mxu0 %v4538
      %v4743 = vpop.f32.mrb[0].mxu0
      %v4744 = vadd.f32 0.0, %v4743
      %v4745 = vpop.f32.mrb[0].mxu0
      %4746 = vmatprep.mubr.f32.mxu0 0.0
      %4747 = vmatmul.mubr.f32.gmra.mrb[0].mxu0 %v4541
      %v4748 = vpop.f32.mrb[0].mxu0
      %v4749 = vadd.f32 0.0, %v4748
      %v4750 = vpop.f32.mrb[0].mxu0
      %4751 = vmatprep.mubr.f32.mxu0 0.0
      %4752 = vmatmul.mubr.f32.gmra.mrb[0].mxu0 %v4544
      %v4753 = vpop.f32.mrb[0].mxu0
      %v4754 = vadd.f32 0.0, %v4753
      %v4755 = vpop.f32.mrb[0].mxu0
      %4756 = vmatprep.mubr.f32.mxu0 0.0
      %4757 = vmatmul.mubr.f32.gmra.mrb[0].mxu0 %v4547
      %v4758 = vpop.f32.mrb[0].mxu0
      %v4759 = vadd.f32 0.0, %v4758
      %v4760 = vpop.f32.mrb[0].mxu0
      %4761 = vmatprep.mubr.f32.mxu0 0.0
      %4762 = vmatmul.mubr.f32.gmra.mrb[0].mxu0 %v4550
      %v4763 = vpop.f32.mrb[0].mxu0
      %v4764 = vadd.f32 0.0, %v4763
      %v4765 = vpop.f32.mrb[0].mxu0
      %4766 = vmatprep.mubr.f32.mxu0 0.0
      %4767 = vmatmul.mubr.f32.gmra.mrb[0].mxu0 %v4553
      %v4768 = vpop.f32.mrb[0].mxu0
      %v4769 = vadd.f32 0.0, %v4768
      %v4770 = vpop.f32.mrb[0].mxu0
      %4771 = vmatprep.mubr.f32.mxu0 0.0
      %4772 = vmatmul.mubr.f32.gmra.mrb[0].mxu0 %v4556
      %v4773 = vpop.f32.mrb[0].mxu0
      %v4774 = vadd.f32 0.0, %v4773
      %v4775 = vpop.f32.mrb[0].mxu0
      %4776 = vmatprep.mubr.f32.mxu0 0.0
      %4777 = vmatmul.mubr.f32.gmra.mrb[0].mxu0 %v4559
      %v4778 = vpop.f32.mrb[0].mxu0
      %v4779 = vadd.f32 0.0, %v4778
      %v4780 = vpop.f32.mrb[0].mxu0
      %4781 = vmatprep.mubr.f32.mxu0 0.0
      %4782 = vmatmul.mubr.f32.gmra.mrb[0].mxu0 %v4562
      %v4783 = vpop.f32.mrb[0].mxu0
      %v4784 = vadd.f32 0.0, %v4783
      %v4785 = vpop.f32.mrb[0].mxu0
      %4786 = vmatprep.mubr.f32.mxu0 0.0
      %4787 = vmatmul.mubr.f32.gmra.mrb[0].mxu0 %v4565
      %v4788 = vpop.f32.mrb[0].mxu0
      %v4789 = vadd.f32 0.0, %v4788
      %v4790 = vpop.f32.mrb[0].mxu0
      %4791 = vdwg.mxu0
      %v4792 = vld [vmem:[%s6] sm:$0x1]
      %v4794 = vlaneseq
      %v4795 = vshrl.u32 %v4794, 7
      %v4796 = vsub.s32 0, %v4795
      %v4797 = vrot.slane %v4792, %v4796
      %v4799 = vmul.f32 %v4634, %v4797
      %v4800 = vmul.f32 %v4639, %v4797
      %v4801 = vmul.f32 %v4644, %v4797
      %v4802 = vmul.f32 %v4649, %v4797
      %v4803 = vmul.f32 %v4654, %v4797
      %v4804 = vmul.f32 %v4659, %v4797
      %v4805 = vmul.f32 %v4664, %v4797
      %v4806 = vmul.f32 %v4669, %v4797
      %v4807 = vmul.f32 %v4674, %v4797
      %v4808 = vmul.f32 %v4679, %v4797
      %v4809 = vmul.f32 %v4684, %v4797
      %v4810 = vmul.f32 %v4689, %v4797
      %v4811 = vmul.f32 %v4694, %v4797
      %v4812 = vmul.f32 %v4699, %v4797
      %v4813 = vmul.f32 %v4704, %v4797
      %v4814 = vmul.f32 %v4709, %v4797
      %v4815 = vmul.f32 %v4714, %v4797
      %v4816 = vmul.f32 %v4719, %v4797
      %v4817 = vmul.f32 %v4724, %v4797
      %v4818 = vmul.f32 %v4729, %v4797
      %v4819 = vmul.f32 %v4734, %v4797
      %v4820 = vmul.f32 %v4739, %v4797
      %v4821 = vmul.f32 %v4744, %v4797
      %v4822 = vmul.f32 %v4749, %v4797
      %v4823 = vmul.f32 %v4754, %v4797
      %v4824 = vmul.f32 %v4759, %v4797
      %v4825 = vmul.f32 %v4764, %v4797
      %v4826 = vmul.f32 %v4769, %v4797
      %v4827 = vmul.f32 %v4774, %v4797
      %v4828 = vmul.f32 %v4779, %v4797
      %v4829 = vmul.f32 %v4784, %v4797
      %v4830 = vmul.f32 %v4789, %v4797
      %v4831 = vld [vmem:[%s7] sm:$0x1]
      %v4833 = vlaneseq
      %v4834 = vshrl.u32 %v4833, 7
      %v4835 = vsub.s32 0, %v4834
      %v4836 = vrot.slane %v4831, %v4835
      %v4838 = vadd.f32 %v4799, %v4836
      %v4839 = vadd.f32 %v4800, %v4836
      %v4840 = vadd.f32 %v4801, %v4836
      %v4841 = vadd.f32 %v4802, %v4836
      %v4842 = vadd.f32 %v4803, %v4836
      %v4843 = vadd.f32 %v4804, %v4836
      %v4844 = vadd.f32 %v4805, %v4836
      %v4845 = vadd.f32 %v4806, %v4836
      %v4846 = vadd.f32 %v4807, %v4836
      %v4847 = vadd.f32 %v4808, %v4836
      %v4848 = vadd.f32 %v4809, %v4836
      %v4849 = vadd.f32 %v4810, %v4836
      %v4850 = vadd.f32 %v4811, %v4836
      %v4851 = vadd.f32 %v4812, %v4836
      %v4852 = vadd.f32 %v4813, %v4836
      %v4853 = vadd.f32 %v4814, %v4836
      %v4854 = vadd.f32 %v4815, %v4836
      %v4855 = vadd.f32 %v4816, %v4836
      %v4856 = vadd.f32 %v4817, %v4836
      %v4857 = vadd.f32 %v4818, %v4836
      %v4858 = vadd.f32 %v4819, %v4836
      %v4859 = vadd.f32 %v4820, %v4836
      %v4860 = vadd.f32 %v4821, %v4836
      %v4861 = vadd.f32 %v4822, %v4836
      %v4862 = vadd.f32 %v4823, %v4836
      %v4863 = vadd.f32 %v4824, %v4836
      %v4864 = vadd.f32 %v4825, %v4836
      %v4865 = vadd.f32 %v4826, %v4836
      %v4866 = vadd.f32 %v4827, %v4836
      %v4867 = vadd.f32 %v4828, %v4836
      %v4868 = vadd.f32 %v4829, %v4836
      %v4869 = vadd.f32 %v4830, %v4836
      %v4870 = vmax.f32 %v4838, 0.0
      %v4871 = vmax.f32 %v4839, 0.0
      %v4872 = vmax.f32 %v4840, 0.0
      %v4873 = vmax.f32 %v4841, 0.0
      %v4874 = vmax.f32 %v4842, 0.0
      %v4875 = vmax.f32 %v4843, 0.0
      %v4876 = vmax.f32 %v4844, 0.0
      %v4877 = vmax.f32 %v4845, 0.0
      %v4878 = vmax.f32 %v4846, 0.0
      %v4879 = vmax.f32 %v4847, 0.0
      %v4880 = vmax.f32 %v4848, 0.0
      %v4881 = vmax.f32 %v4849, 0.0
      %v4882 = vmax.f32 %v4850, 0.0
      %v4883 = vmax.f32 %v4851, 0.0
      %v4884 = vmax.f32 %v4852, 0.0
      %v4885 = vmax.f32 %v4853, 0.0
      %v4886 = vmax.f32 %v4854, 0.0
      %v4887 = vmax.f32 %v4855, 0.0
      %v4888 = vmax.f32 %v4856, 0.0
      %v4889 = vmax.f32 %v4857, 0.0
      %v4890 = vmax.f32 %v4858, 0.0
      %v4891 = vmax.f32 %v4859, 0.0
      %v4892 = vmax.f32 %v4860, 0.0
      %v4893 = vmax.f32 %v4861, 0.0
      %v4894 = vmax.f32 %v4862, 0.0
      %v4895 = vmax.f32 %v4863, 0.0
      %v4896 = vmax.f32 %v4864, 0.0
      %v4897 = vmax.f32 %v4865, 0.0
      %v4898 = vmax.f32 %v4866, 0.0
      %v4899 = vmax.f32 %v4867, 0.0
      %v4900 = vmax.f32 %v4868, 0.0
      %v4901 = vmax.f32 %v4869, 0.0
      %4902 = vxpose.xlu0.b32.start [1/16] %v4870, 128
      %4903 = vxpose.xlu0.b32.cont [2/16] %v4871, 128
      %4904 = vxpose.xlu0.b32.cont [3/16] %v4872, 128
      %4905 = vxpose.xlu0.b32.cont [4/16] %v4873, 128
      %4906 = vxpose.xlu0.b32.cont [5/16] %v4874, 128
      %4907 = vxpose.xlu0.b32.cont [6/16] %v4875, 128
      %4908 = vxpose.xlu0.b32.cont [7/16] %v4876, 128
      %4909 = vxpose.xlu0.b32.cont [8/16] %v4877, 128
      %4910 = vxpose.xlu0.b32.cont [9/16] %v4878, 128
      %4911 = vxpose.xlu0.b32.cont [10/16] %v4879, 128
      %4912 = vxpose.xlu0.b32.cont [11/16] %v4880, 128
      %4913 = vxpose.xlu0.b32.cont [12/16] %v4881, 128
      %4914 = vxpose.xlu0.b32.cont [13/16] %v4882, 128
      %4915 = vxpose.xlu0.b32.cont [14/16] %v4883, 128
      %4916 = vxpose.xlu0.b32.cont [15/16] %v4884, 128
      %4917 = vxpose.xlu0.b32.end [16/16] %v4885, 128
      %v4918 = vpop.trf.xlu0
      %v4919 = vpop.trf.xlu0
      %v4920 = vpop.trf.xlu0
      %v4921 = vpop.trf.xlu0
      %v4922 = vpop.trf.xlu0
      %v4923 = vpop.trf.xlu0
      %v4924 = vpop.trf.xlu0
      %v4925 = vpop.trf.xlu0
      %v4926 = vpop.trf.xlu0
      %v4927 = vpop.trf.xlu0
      %v4928 = vpop.trf.xlu0
      %v4929 = vpop.trf.xlu0
      %v4930 = vpop.trf.xlu0
      %v4931 = vpop.trf.xlu0
      %v4932 = vpop.trf.xlu0
      %v4933 = vpop.trf.xlu0
      %4934 = vxpose.xlu0.b32.start [1/16] %v4886, 128
      %4935 = vxpose.xlu0.b32.cont [2/16] %v4887, 128
      %4936 = vxpose.xlu0.b32.cont [3/16] %v4888, 128
      %4937 = vxpose.xlu0.b32.cont [4/16] %v4889, 128
      %4938 = vxpose.xlu0.b32.cont [5/16] %v4890, 128
      %4939 = vxpose.xlu0.b32.cont [6/16] %v4891, 128
      %4940 = vxpose.xlu0.b32.cont [7/16] %v4892, 128
      %4941 = vxpose.xlu0.b32.cont [8/16] %v4893, 128
      %4942 = vxpose.xlu0.b32.cont [9/16] %v4894, 128
      %4943 = vxpose.xlu0.b32.cont [10/16] %v4895, 128
      %4944 = vxpose.xlu0.b32.cont [11/16] %v4896, 128
      %4945 = vxpose.xlu0.b32.cont [12/16] %v4897, 128
      %4946 = vxpose.xlu0.b32.cont [13/16] %v4898, 128
      %4947 = vxpose.xlu0.b32.cont [14/16] %v4899, 128
      %4948 = vxpose.xlu0.b32.cont [15/16] %v4900, 128
      %4949 = vxpose.xlu0.b32.end [16/16] %v4901, 128
      %v4950 = vpop.trf.xlu0
      %v4951 = vpop.trf.xlu0
      %v4952 = vpop.trf.xlu0
      %v4953 = vpop.trf.xlu0
      %v4954 = vpop.trf.xlu0
      %v4955 = vpop.trf.xlu0
      %v4956 = vpop.trf.xlu0
      %v4957 = vpop.trf.xlu0
      %v4958 = vpop.trf.xlu0
      %v4959 = vpop.trf.xlu0
      %v4960 = vpop.trf.xlu0
      %v4961 = vpop.trf.xlu0
      %v4962 = vpop.trf.xlu0
      %v4963 = vpop.trf.xlu0
      %v4964 = vpop.trf.xlu0
      %v4965 = vpop.trf.xlu0
      %4966 = vst [vmem:[%s325] sm:$0xff] %v4918
      %4967 = vst [vmem:[%s325 + $0x8] sm:$0xff] %v4950
      %p4968 = scmp.lt.s32.totalorder %s19, 1
      %s4969 = scalar_select %p4968, %s19, 1
      %s4970 = smul.addr %s4969, 2
      %s4971 = smul.addr %s4970, 8
      %s4972 = scalar_lea.vmem %s8, %s4971
      // Predicated region
      $region53: #{up_forward.1} parent=51 // pred_check
        %p4973 = pneg %p215
      $region54: #{up_forward.1} parent=51 // pred_check_branch
        %4975 = sbr.rel (%p4973) target = $region56
      $region55: #{up_forward.1} parent=51 // pred_region
        _
      $region56: #{up_forward.1} parent=51 // pred_fallthru
        _
    $region52: #{up_forward.1} parent=5 // pred_fallthru
      _
    %p4976 = scmp.le.s32.totalorder 2, %s14
    // Predicated region
    $region57: #{up_forward.1} parent=5 // pred_check
      %p4977 = pneg %p4976
    $region58: #{up_forward.1} parent=5 // pred_check_branch
      %4979 = sbr.rel (%p4977) target = $region60
    $region59: #{up_forward.1} parent=5 // pred_region
      %s4980 = ssub.s32 %s14, 2
      // Predicated region
      $region61: #{up_forward.1} parent=59 // pred_check
        %p4981 = pneg %p221
      $region62: #{up_forward.1} parent=59 // pred_check_branch
        %4983 = sbr.rel (%p4981) target = $region64
      $region63: #{up_forward.1} parent=59 // pred_region
        %p4984 = scmp.lt.s32.totalorder %s20, 1
        %s4985 = scalar_select %p4984, %s20, 1
        %s4986 = smul.addr %s4985, 2
        %s4987 = smul.addr %s4986, 8
        %s4988 = scalar_lea.vmem %s8, %s4987
      $region64: #{up_forward.1} parent=59 // pred_fallthru
        _
    $region60: #{up_forward.1} parent=5 // pred_fallthru
      _
  $region6: #{up_forward.1} parent=0 // loop_footer
    %s18 = sadd.s32 1, %s14
  $region7: #{up_forward.1} parent=0 // loop_footer_branch
    %13 = sbr.rel target = $region3
  $region8: #{up_forward.1} parent=0 // loop_exit
    _

</llo_original>
